<compile_context>
chip_gen: v5e
topology: v5e:2x2
jax: 0.10.0
libtpu: 0.0.40
codegen_flags: <defaults>
</compile_context>

<pallas_src>
import functools

import jax
import jax.numpy as jnp
from jax import lax
from jax.experimental import pallas as pl
from jax.experimental.pallas import tpu as pltpu


def _round_up(x, m):
    return (x + m - 1) // m * m


def _cdiv(a, b):
    return -(-a // b)


def _plan_tiling(N, seq_len, d_in, hidden, d_model, act_bytes, weight_bytes):
    """Generation-aware N-tile planning (VMEM budget + >=2 tiles for megacore)."""
    try:
        cap = int(getattr(pltpu.get_tpu_info(), "vmem_capacity_bytes",
                          64 * 1024 * 1024))
    except Exception:
        cap = 64 * 1024 * 1024                      # assume smallest (v7x) if query fails
    budget = int(cap * 0.60)                        # effective footprint target (~38 MiB v7x)
    vmem_limit = int(min(cap * 0.70, cap - (8 << 20)))  # headroom for Mosaic scratch

    lane = lambda d: _round_up(d, 128)              # VMEM lane padding
    T, D, H, Dm = seq_len, d_in, hidden, d_model
    per_row = (2 * T * lane(D) * act_bytes          # x tile, double-buffered (bf16)
               + 2 * lane(Dm) * 4                   # out tile, double-buffered
               + 2 * T * lane(4 * H) * 4            # gxf + gxb scratch
               + T * lane(Dm) * 4                   # yf scratch
               + 6 * lane(4 * H + Dm) * 4)          # live comb/gates/h/c/m temps (slack)
    avail = budget - 2 * weight_bytes               # weights double-buffered by default
    tile_max = max(16, min(2048, (avail // max(per_row, 1)) // 16 * 16))
    num_tiles = max(_cdiv(N, tile_max), 2 if N >= 16 else 1)
    tile_n = _round_up(_cdiv(N, num_tiles), 16)     # 16: bf16 sublane packing
    return tile_n, num_tiles, num_tiles * tile_n, vmem_limit


def _bilstm_fc_maxpool_kernel(x_ref,            # (T, TN, D)   bf16
                              wih_ref,          # (D, 8H)      [fwd | bwd] input proj, f32
                              bih_ref,          # (1, 8H)      folded gate biases
                              wcf_ref,          # (H, 4H+Dm)   [w_hh_f | w_fc_fwd]
                              wcb_ref,          # (H, 4H+Dm)   [w_hh_b | w_fc_bwd]
                              bfc_ref,          # (1, Dm)
                              out_ref,          # (TN, Dm)     f32
                              gxf_ref,          # scratch (T, TN, 4H) f32
                              gxb_ref,          # scratch (T, TN, 4H) f32
                              yf_ref,           # scratch (T, TN, Dm) f32
                              *, seq_len, hidden, d_model, unroll):
    T, H, Dm = seq_len, hidden, d_model
    TN = x_ref.shape[1]
    D = x_ref.shape[2]

    # ---- hoisted input projection: one big MXU GEMM, gate biases folded ----
    x2 = x_ref[...].reshape(T * TN, D).astype(jnp.float32)
    gx = jnp.dot(x2, wih_ref[...], preferred_element_type=jnp.float32) + bih_ref[...]
    gxf_ref[...] = gx[:, :4 * H].reshape(T, TN, 4 * H)
    gxb_ref[...] = gx[:, 4 * H:].reshape(T, TN, 4 * H)

    wcf = wcf_ref[...]                                   # (H, 4H+Dm), VMEM-resident
    wcb = wcb_ref[...]
    bfc = jnp.broadcast_to(bfc_ref[...], (TN, Dm))       # hoisted: one broadcast total

    def gates_to_hc(gates, c):
        # PyTorch gate ordering: i, f, g, o
        i = jax.nn.sigmoid(gates[:, 0:H])
        f = jax.nn.sigmoid(gates[:, H:2 * H])
        g = jnp.tanh(gates[:, 2 * H:3 * H])
        o = jax.nn.sigmoid(gates[:, 3 * H:4 * H])
        c_new = f * c + i * g
        return o * jnp.tanh(c_new), c_new

    zeros_h = jnp.zeros((TN, H), jnp.float32)

    # ---- forward direction: ONE fused (TN,H)x(H,4H+Dm) GEMM per step -------
    # step-0 gates need no recurrence GEMM (h_{-1} == 0)
    h, c = gates_to_hc(gxf_ref[0], zeros_h)

    def fwd_body(t, carry):
        h, c = carry
        comb = jnp.dot(h, wcf, preferred_element_type=jnp.float32)   # (TN, 4H+Dm)
        yf_ref[t - 1] = comb[:, 4 * H:] + bfc        # fc fwd-half for time t-1
        gates = gxf_ref[t] + comb[:, :4 * H]         # gates for time t
        return gates_to_hc(gates, c)

    h, c = lax.fori_loop(1, T, fwd_body, (h, c), unroll=unroll)
    # epilogue: fc fwd-half of the last time step
    yf_ref[T - 1] = jnp.dot(h, wcf[:, 4 * H:], preferred_element_type=jnp.float32) + bfc

    # ---- backward direction, fused with fc + ReLU + max over time ----------
    h, c = gates_to_hc(gxb_ref[T - 1], zeros_h)
    m0 = jnp.zeros((TN, Dm), jnp.float32)            # ReLU(y) >= 0, so 0-init == max-pool

    def bwd_body(s, carry):
        h, c, m = carry                              # h = h_b at time T - s
        comb = jnp.dot(h, wcb, preferred_element_type=jnp.float32)   # (TN, 4H+Dm)
        y = yf_ref[T - s] + comb[:, 4 * H:]          # full fc output at time T - s
        m = jnp.maximum(m, jnp.maximum(y, 0.0))      # ReLU + running max over T
        gates = gxb_ref[T - 1 - s] + comb[:, :4 * H]
        h, c = gates_to_hc(gates, c)
        return (h, c, m)

    h, c, m = lax.fori_loop(1, T, bwd_body, (h, c, m0), unroll=unroll)
    # epilogue: time 0 (h = h_b(0))
    y0 = yf_ref[0] + jnp.dot(h, wcb[:, 4 * H:], preferred_element_type=jnp.float32)
    out_ref[...] = jnp.maximum(m, jnp.maximum(y0, 0.0))


def common_sense_path_encoder(tokens, params, *, tile_n=None):
    """tokens: int32 (B, img_num, obj_num, seq_len) -> (B, img_num, obj_num, d_model)."""
    B, img_num, obj_num, seq_len = tokens.shape
    N = B * img_num * obj_num
    d_model = params["embedding"].shape[1]
    H = d_model
    D = d_model

    # Time-major embedding gather in bf16 (halves the dominant HBM->VMEM DMA).
    # padding_idx=0 row of the table is zero.  Gathering with the transposed
    # index matrix directly yields (T, N, D): no HBM activation transpose pass.
    flat_t = tokens.reshape(N, seq_len).T                                   # (T, N) int32
    emb_bf16 = params["embedding"].astype(jnp.bfloat16)
    x = jnp.take(emb_bf16, flat_t, axis=0)                                  # (T, N, D) bf16
    # TODO(synk): dropout(p=0.1) applied as identity (eval-mode semantics).

    # Weight prep: pre-transposed, gate biases folded, recurrence + fc fused.
    wih_cat = jnp.concatenate([params["w_ih_f"].T, params["w_ih_b"].T],
                              axis=1).astype(jnp.float32)                   # (D, 8H)
    bih_cat = jnp.concatenate([params["b_ih_f"] + params["b_hh_f"],
                               params["b_ih_b"] + params["b_hh_b"]]
                              ).reshape(1, -1).astype(jnp.float32)          # (1, 8H)
    wfc_t = params["w_fc"].T.astype(jnp.float32)                            # (2H, Dm)
    w_comb_f = jnp.concatenate([params["w_hh_f"].T.astype(jnp.float32),
                                wfc_t[:H]], axis=1)                         # (H, 4H+Dm)
    w_comb_b = jnp.concatenate([params["w_hh_b"].T.astype(jnp.float32),
                                wfc_t[H:]], axis=1)                         # (H, 4H+Dm)
    bfc = params["b_fc"].reshape(1, -1).astype(jnp.float32)                 # (1, Dm)

    weight_bytes = 4 * (wih_cat.size + bih_cat.size + w_comb_f.size
                        + w_comb_b.size + bfc.size)
    auto_tile, num_tiles, n_pad, vmem_limit = _plan_tiling(
        N, seq_len, D, H, d_model, act_bytes=2, weight_bytes=weight_bytes)
    if tile_n is None:
        tile_n = auto_tile
    else:
        tile_n = _round_up(max(16, tile_n), 16)
        num_tiles = _cdiv(N, tile_n)
        n_pad = num_tiles * tile_n

    if n_pad != N:
        x = jnp.pad(x, ((0, 0), (0, n_pad - N), (0, 0)))

    kernel = functools.partial(_bilstm_fc_maxpool_kernel,
                               seq_len=seq_len, hidden=H, d_model=d_model,
                               unroll=True if seq_len <= 8 else 4)
    const2 = lambda i: (0, 0)                     # weights stay VMEM-resident

    out = pl.pallas_call(
        kernel,
        out_shape=jax.ShapeDtypeStruct((n_pad, d_model), jnp.float32),
        grid=(num_tiles,),
        in_specs=[
            pl.BlockSpec((seq_len, tile_n, D), lambda i: (0, i, 0)),
            pl.BlockSpec(wih_cat.shape, const2),
            pl.BlockSpec(bih_cat.shape, const2),
            pl.BlockSpec(w_comb_f.shape, const2),
            pl.BlockSpec(w_comb_b.shape, const2),
            pl.BlockSpec(bfc.shape, const2),
        ],
        out_specs=pl.BlockSpec((tile_n, d_model), lambda i: (i, 0)),
        scratch_shapes=[
            pltpu.VMEM((seq_len, tile_n, 4 * H), jnp.float32),   # fwd input gates
            pltpu.VMEM((seq_len, tile_n, 4 * H), jnp.float32),   # bwd input gates
            pltpu.VMEM((seq_len, tile_n, d_model), jnp.float32), # fwd-half fc partial
        ],
        compiler_params=pltpu.CompilerParams(
            dimension_semantics=("parallel",),
            vmem_limit_bytes=vmem_limit,
        ),
    )(x, wih_cat, bih_cat, w_comb_f, w_comb_b, bfc)

    # transpose(2,1) + max_pool1d(seq_len) + squeeze == max over time, done in-kernel.
    return out[:N].reshape(B, img_num, obj_num, d_model)


def _reference_forward(tokens, params, quantize_x_to=None):
    """Pure-JAX reference of the PyTorch module (dropout as identity)."""
    B, I, O, T = tokens.shape
    N = B * I * O
    Dm = params["embedding"].shape[1]
    H = Dm
    emb = params["embedding"]
    if quantize_x_to is not None:
        emb = emb.astype(quantize_x_to).astype(jnp.float32)
    flat = tokens.reshape(N, T)
    x = jnp.take(emb, flat, axis=0)                         # (N, T, D)
    xt = jnp.transpose(x, (1, 0, 2)).astype(jnp.float32)    # (T, N, D)

    def run(x_seq, wih, whh, bih, bhh):
        def step(carry, x_t):
            h, c = carry
            g = x_t @ wih.T + h @ whh.T + bih + bhh
            i = jax.nn.sigmoid(g[:, 0:H])
            f = jax.nn.sigmoid(g[:, H:2 * H])
            gg = jnp.tanh(g[:, 2 * H:3 * H])
            o = jax.nn.sigmoid(g[:, 3 * H:4 * H])
            c = f * c + i * gg
            h = o * jnp.tanh(c)
            return (h, c), h
        init = (jnp.zeros((N, H), jnp.float32), jnp.zeros((N, H), jnp.float32))
        _, hs = lax.scan(step, init, x_seq)
        return hs                                            # (T, N, H)

    hf = run(xt, params["w_ih_f"], params["w_hh_f"], params["b_ih_f"], params["b_hh_f"])
    hb = run(xt[::-1], params["w_ih_b"], params["w_hh_b"],
             params["b_ih_b"], params["b_hh_b"])[::-1]
    feat = jnp.concatenate([hf, hb], axis=-1)                # (T, N, 2H)
    y = jax.nn.relu(feat @ params["w_fc"].T + params["b_fc"])
    return jnp.max(y, axis=0).reshape(B, I, O, Dm)


def _init_params(key, vocab_size, d_model):
    H = d_model
    ks = jax.random.split(key, 11)
    s_lstm = 1.0 / float(H) ** 0.5
    s_fc = 1.0 / float(2 * H) ** 0.5

    def u(k, shape, scale):
        return jax.random.uniform(k, shape, jnp.float32, -scale, scale)

    emb = jax.random.normal(ks[0], (vocab_size, d_model), jnp.float32)
    emb = emb.at[0].set(0.0)  # padding_idx=0

    return dict(
        embedding=emb,
        w_ih_f=u(ks[1], (4 * H, d_model), s_lstm),
        w_hh_f=u(ks[2], (4 * H, H), s_lstm),
        b_ih_f=u(ks[3], (4 * H,), s_lstm),
        b_hh_f=u(ks[4], (4 * H,), s_lstm),
        w_ih_b=u(ks[5], (4 * H, d_model), s_lstm),
        w_hh_b=u(ks[6], (4 * H, H), s_lstm),
        b_ih_b=u(ks[7], (4 * H,), s_lstm),
        b_hh_b=u(ks[8], (4 * H,), s_lstm),
        w_fc=u(ks[9], (d_model, 2 * H), s_fc),
        b_fc=u(ks[10], (d_model,), s_fc),
    )


if __name__ == "__main__":
    key = jax.random.PRNGKey(0)
    vocab_size = 50
    d_model = 32
    B, img_num, obj_num, seq_len = 2, 2, 2, 8

    k_params, k_tok = jax.random.split(key)
    params = _init_params(k_params, vocab_size, d_model)
    tokens = jax.random.randint(k_tok, (B, img_num, obj_num, seq_len), 0, vocab_size,
                                dtype=jnp.int32)

    out = jax.block_until_ready(common_sense_path_encoder(tokens, params))
    assert out.shape == (B, img_num, obj_num, d_model), out.shape
    assert bool(jnp.all(jnp.isfinite(out)))

    # Kernel math check: reference fed the same bf16-quantized embeddings (tight).
    ref_bf16x = jax.block_until_ready(
        _reference_forward(tokens, params, quantize_x_to=jnp.bfloat16))
    err_kernel = float(jnp.max(jnp.abs(out - ref_bf16x)))
    assert err_kernel < 5e-3, f"kernel-math diff vs bf16-input reference = {err_kernel}"

    # End-to-end check vs the full-f32 reference; tolerance relaxed to account
    # for bf16 activation streaming (perf-review change).
    ref_f32 = jax.block_until_ready(_reference_forward(tokens, params))
    err_full = float(jnp.max(jnp.abs(out - ref_f32)))
    assert err_full < 2e-2, f"max abs diff vs f32 JAX reference = {err_full}"

    print("KERNEL_OK")
</pallas_src>

<mosaic_0001>
module attributes {stable_mosaic.version = 11 : i64} {
  func.func @_bilstm_fc_maxpool_kernel(%arg0: i32, %arg1: memref<8x16x32xbf16, #tpu.memory_space<vmem>>, %arg2: memref<32x256xf32, #tpu.memory_space<vmem>>, %arg3: memref<1x256xf32, #tpu.memory_space<vmem>>, %arg4: memref<32x160xf32, #tpu.memory_space<vmem>>, %arg5: memref<32x160xf32, #tpu.memory_space<vmem>>, %arg6: memref<1x32xf32, #tpu.memory_space<vmem>>, %arg7: memref<16x32xf32, #tpu.memory_space<vmem>>, %arg8: memref<8x16x128xf32, #tpu.memory_space<vmem>>, %arg9: memref<8x16x128xf32, #tpu.memory_space<vmem>>, %arg10: memref<8x16x32xf32, #tpu.memory_space<vmem>>) attributes {dimension_semantics = [#tpu.dimension_semantics<parallel>], iteration_bounds = array<i64: 1>, scalar_prefetch = 0 : i64, scratch_operands = 3 : i64, tpu.core_type = #tpu.core_type<tc>, window_params = [{transform_indices = @transform_0, window_bounds = array<i64: 8, 16, 32>}, {pipeline_mode = #tpu.pipeline_mode<synchronous>, transform_indices = @transform_1, window_bounds = array<i64: 32, 256>}, {pipeline_mode = #tpu.pipeline_mode<synchronous>, transform_indices = @transform_2, window_bounds = array<i64: 1, 256>}, {pipeline_mode = #tpu.pipeline_mode<synchronous>, transform_indices = @transform_3, window_bounds = array<i64: 32, 160>}, {pipeline_mode = #tpu.pipeline_mode<synchronous>, transform_indices = @transform_4, window_bounds = array<i64: 32, 160>}, {pipeline_mode = #tpu.pipeline_mode<synchronous>, transform_indices = @transform_5, window_bounds = array<i64: 1, 32>}, {transform_indices = @transform_6, window_bounds = array<i64: 16, 32>}]} {
    %c0 = arith.constant 0 : index
    %c0_0 = arith.constant 0 : index
    %c0_1 = arith.constant 0 : index
    %0 = vector.load %arg1[%c0, %c0_0, %c0_1] : memref<8x16x32xbf16, #tpu.memory_space<vmem>>, vector<8x16x32xbf16>
    %1 = vector.shape_cast %0 : vector<8x16x32xbf16> to vector<128x32xbf16>
    %2 = arith.extf %1 : vector<128x32xbf16> to vector<128x32xf32>
    %c0_2 = arith.constant 0 : index
    %c0_3 = arith.constant 0 : index
    %3 = vector.load %arg2[%c0_2, %c0_3] : memref<32x256xf32, #tpu.memory_space<vmem>>, vector<32x256xf32>
    %cst = arith.constant dense<0.000000e+00> : vector<128x256xf32>
    %4 = tpu.matmul %2, %3, %cst {dimension_numbers = #tpu.dot_dimension_numbers<[1], [0], [0], [1], [0, 0, 1, 1], [], []>} : vector<128x32xf32>, vector<32x256xf32>, vector<128x256xf32> -> vector<128x256xf32>
    %c0_4 = arith.constant 0 : index
    %c0_5 = arith.constant 0 : index
    %5 = vector.load %arg3[%c0_4, %c0_5] : memref<1x256xf32, #tpu.memory_space<vmem>>, vector<1x256xf32>
    %6 = vector.broadcast %5 : vector<1x256xf32> to vector<128x256xf32>
    %7 = arith.addf %4, %6 : vector<128x256xf32>
    %8 = vector.extract_strided_slice %7 {offsets = [0, 0], sizes = [128, 128], strides = [1, 1]} : vector<128x256xf32> to vector<128x128xf32>
    %9 = vector.shape_cast %8 : vector<128x128xf32> to vector<8x16x128xf32>
    %c0_6 = arith.constant 0 : index
    %c0_7 = arith.constant 0 : index
    %c0_8 = arith.constant 0 : index
    %10 = vector.load %arg8[%c0_6, %c0_7, %c0_8] : memref<8x16x128xf32, #tpu.memory_space<vmem>>, vector<8x16x128xf32>
    tpu.vector_store %arg8[%c0_6, %c0_7, %c0_8], %9 {strides = array<i32>} : memref<8x16x128xf32, #tpu.memory_space<vmem>>, vector<8x16x128xf32>,
    %11 = vector.extract_strided_slice %7 {offsets = [0, 128], sizes = [128, 128], strides = [1, 1]} : vector<128x256xf32> to vector<128x128xf32>
    %12 = vector.shape_cast %11 : vector<128x128xf32> to vector<8x16x128xf32>
    %c0_9 = arith.constant 0 : index
    %c0_10 = arith.constant 0 : index
    %c0_11 = arith.constant 0 : index
    %13 = vector.load %arg9[%c0_9, %c0_10, %c0_11] : memref<8x16x128xf32, #tpu.memory_space<vmem>>, vector<8x16x128xf32>
    tpu.vector_store %arg9[%c0_9, %c0_10, %c0_11], %12 {strides = array<i32>} : memref<8x16x128xf32, #tpu.memory_space<vmem>>, vector<8x16x128xf32>,
    %c0_12 = arith.constant 0 : index
    %c0_13 = arith.constant 0 : index
    %14 = vector.load %arg4[%c0_12, %c0_13] : memref<32x160xf32, #tpu.memory_space<vmem>>, vector<32x160xf32>
    %c0_14 = arith.constant 0 : index
    %c0_15 = arith.constant 0 : index
    %15 = vector.load %arg5[%c0_14, %c0_15] : memref<32x160xf32, #tpu.memory_space<vmem>>, vector<32x160xf32>
    %c0_16 = arith.constant 0 : index
    %c0_17 = arith.constant 0 : index
    %16 = vector.load %arg6[%c0_16, %c0_17] : memref<1x32xf32, #tpu.memory_space<vmem>>, vector<1x32xf32>
    %17 = vector.shape_cast %16 : vector<1x32xf32> to vector<1x32xf32>
    %18 = vector.broadcast %17 : vector<1x32xf32> to vector<16x32xf32>
    %cst_18 = arith.constant 0.000000e+00 : f32
    %19 = vector.broadcast %cst_18 : f32 to vector<16x32xf32>
    %c0_19 = arith.constant 0 : index
    %c0_20 = arith.constant 0 : index
    %c0_21 = arith.constant 0 : index
    %20 = vector.load %arg8[%c0_19, %c0_20, %c0_21] : memref<8x16x128xf32, #tpu.memory_space<vmem>>, vector<1x16x128xf32>
    %21 = vector.shape_cast %20 : vector<1x16x128xf32> to vector<16x128xf32>
    %22 = vector.extract_strided_slice %21 {offsets = [0, 0], sizes = [16, 32], strides = [1, 1]} : vector<16x128xf32> to vector<16x32xf32>
    %23 = arith.negf %22 : vector<16x32xf32>
    %24 = math.exp %23 : vector<16x32xf32>
    %cst_22 = arith.constant 1.000000e+00 : f32
    %25 = vector.broadcast %cst_22 : f32 to vector<16x32xf32>
    %26 = arith.addf %25, %24 : vector<16x32xf32>
    %27 = arith.divf %25, %26 : vector<16x32xf32>
    %28 = vector.extract_strided_slice %21 {offsets = [0, 32], sizes = [16, 32], strides = [1, 1]} : vector<16x128xf32> to vector<16x32xf32>
    %29 = arith.negf %28 : vector<16x32xf32>
    %30 = math.exp %29 : vector<16x32xf32>
    %cst_23 = arith.constant 1.000000e+00 : f32
    %31 = vector.broadcast %cst_23 : f32 to vector<16x32xf32>
    %32 = arith.addf %31, %30 : vector<16x32xf32>
    %33 = arith.divf %31, %32 : vector<16x32xf32>
    %34 = vector.extract_strided_slice %21 {offsets = [0, 64], sizes = [16, 32], strides = [1, 1]} : vector<16x128xf32> to vector<16x32xf32>
    %35 = math.tanh %34 : vector<16x32xf32>
    %36 = vector.extract_strided_slice %21 {offsets = [0, 96], sizes = [16, 32], strides = [1, 1]} : vector<16x128xf32> to vector<16x32xf32>
    %37 = arith.negf %36 : vector<16x32xf32>
    %38 = math.exp %37 : vector<16x32xf32>
    %cst_24 = arith.constant 1.000000e+00 : f32
    %39 = vector.broadcast %cst_24 : f32 to vector<16x32xf32>
    %40 = arith.addf %39, %38 : vector<16x32xf32>
    %41 = arith.divf %39, %40 : vector<16x32xf32>
    %42 = arith.mulf %33, %19 : vector<16x32xf32>
    %43 = arith.mulf %27, %35 : vector<16x32xf32>
    %44 = arith.addf %42, %43 : vector<16x32xf32>
    %45 = math.tanh %44 : vector<16x32xf32>
    %46 = arith.mulf %41, %45 : vector<16x32xf32>
    %c1_i32 = arith.constant 1 : i32
    %cst_25 = arith.constant dense<0.000000e+00> : vector<16x160xf32>
    %47 = tpu.matmul %46, %14, %cst_25 {dimension_numbers = #tpu.dot_dimension_numbers<[1], [0], [0], [1], [0, 0, 1, 1], [], []>} : vector<16x32xf32>, vector<32x160xf32>, vector<16x160xf32> -> vector<16x160xf32>
    %48 = vector.extract_strided_slice %47 {offsets = [0, 128], sizes = [16, 32], strides = [1, 1]} : vector<16x160xf32> to vector<16x32xf32>
    %49 = arith.addf %48, %18 : vector<16x32xf32>
    %c1_i32_26 = arith.constant 1 : i32
    %50 = arith.subi %c1_i32, %c1_i32_26 : i32
    %51 = arith.index_cast %50 : i32 to index
    %c0_27 = arith.constant 0 : index
    %c0_28 = arith.constant 0 : index
    %52 = vector.load %arg10[%51, %c0_27, %c0_28] : memref<8x16x32xf32, #tpu.memory_space<vmem>>, vector<1x16x32xf32>
    %53 = vector.shape_cast %52 : vector<1x16x32xf32> to vector<16x32xf32>
    %54 = vector.shape_cast %49 : vector<16x32xf32> to vector<1x16x32xf32>
    tpu.vector_store %arg10[%51, %c0_27, %c0_28], %54 {strides = array<i32>} : memref<8x16x32xf32, #tpu.memory_space<vmem>>, vector<1x16x32xf32>,
    %55 = arith.index_cast %c1_i32 : i32 to index
    %c0_29 = arith.constant 0 : index
    %c0_30 = arith.constant 0 : index
    %56 = vector.load %arg8[%55, %c0_29, %c0_30] : memref<8x16x128xf32, #tpu.memory_space<vmem>>, vector<1x16x128xf32>
    %57 = vector.shape_cast %56 : vector<1x16x128xf32> to vector<16x128xf32>
    %58 = vector.extract_strided_slice %47 {offsets = [0, 0], sizes = [16, 128], strides = [1, 1]} : vector<16x160xf32> to vector<16x128xf32>
    %59 = arith.addf %57, %58 : vector<16x128xf32>
    %60 = vector.extract_strided_slice %59 {offsets = [0, 0], sizes = [16, 32], strides = [1, 1]} : vector<16x128xf32> to vector<16x32xf32>
    %61 = arith.negf %60 : vector<16x32xf32>
    %62 = math.exp %61 : vector<16x32xf32>
    %cst_31 = arith.constant 1.000000e+00 : f32
    %63 = vector.broadcast %cst_31 : f32 to vector<16x32xf32>
    %64 = arith.addf %63, %62 : vector<16x32xf32>
    %65 = arith.divf %63, %64 : vector<16x32xf32>
    %66 = vector.extract_strided_slice %59 {offsets = [0, 32], sizes = [16, 32], strides = [1, 1]} : vector<16x128xf32> to vector<16x32xf32>
    %67 = arith.negf %66 : vector<16x32xf32>
    %68 = math.exp %67 : vector<16x32xf32>
    %cst_32 = arith.constant 1.000000e+00 : f32
    %69 = vector.broadcast %cst_32 : f32 to vector<16x32xf32>
    %70 = arith.addf %69, %68 : vector<16x32xf32>
    %71 = arith.divf %69, %70 : vector<16x32xf32>
    %72 = vector.extract_strided_slice %59 {offsets = [0, 64], sizes = [16, 32], strides = [1, 1]} : vector<16x128xf32> to vector<16x32xf32>
    %73 = math.tanh %72 : vector<16x32xf32>
    %74 = vector.extract_strided_slice %59 {offsets = [0, 96], sizes = [16, 32], strides = [1, 1]} : vector<16x128xf32> to vector<16x32xf32>
    %75 = arith.negf %74 : vector<16x32xf32>
    %76 = math.exp %75 : vector<16x32xf32>
    %cst_33 = arith.constant 1.000000e+00 : f32
    %77 = vector.broadcast %cst_33 : f32 to vector<16x32xf32>
    %78 = arith.addf %77, %76 : vector<16x32xf32>
    %79 = arith.divf %77, %78 : vector<16x32xf32>
    %80 = arith.mulf %71, %44 : vector<16x32xf32>
    %81 = arith.mulf %65, %73 : vector<16x32xf32>
    %82 = arith.addf %80, %81 : vector<16x32xf32>
    %83 = math.tanh %82 : vector<16x32xf32>
    %84 = arith.mulf %79, %83 : vector<16x32xf32>
    %c2_i32 = arith.constant 2 : i32
    %cst_34 = arith.constant dense<0.000000e+00> : vector<16x160xf32>
    %85 = tpu.matmul %84, %14, %cst_34 {dimension_numbers = #tpu.dot_dimension_numbers<[1], [0], [0], [1], [0, 0, 1, 1], [], []>} : vector<16x32xf32>, vector<32x160xf32>, vector<16x160xf32> -> vector<16x160xf32>
    %86 = vector.extract_strided_slice %85 {offsets = [0, 128], sizes = [16, 32], strides = [1, 1]} : vector<16x160xf32> to vector<16x32xf32>
    %87 = arith.addf %86, %18 : vector<16x32xf32>
    %c1_i32_35 = arith.constant 1 : i32
    %88 = arith.subi %c2_i32, %c1_i32_35 : i32
    %89 = arith.index_cast %88 : i32 to index
    %c0_36 = arith.constant 0 : index
    %c0_37 = arith.constant 0 : index
    %90 = vector.load %arg10[%89, %c0_36, %c0_37] : memref<8x16x32xf32, #tpu.memory_space<vmem>>, vector<1x16x32xf32>
    %91 = vector.shape_cast %90 : vector<1x16x32xf32> to vector<16x32xf32>
    %92 = vector.shape_cast %87 : vector<16x32xf32> to vector<1x16x32xf32>
    tpu.vector_store %arg10[%89, %c0_36, %c0_37], %92 {strides = array<i32>} : memref<8x16x32xf32, #tpu.memory_space<vmem>>, vector<1x16x32xf32>,
    %93 = arith.index_cast %c2_i32 : i32 to index
    %c0_38 = arith.constant 0 : index
    %c0_39 = arith.constant 0 : index
    %94 = vector.load %arg8[%93, %c0_38, %c0_39] : memref<8x16x128xf32, #tpu.memory_space<vmem>>, vector<1x16x128xf32>
    %95 = vector.shape_cast %94 : vector<1x16x128xf32> to vector<16x128xf32>
    %96 = vector.extract_strided_slice %85 {offsets = [0, 0], sizes = [16, 128], strides = [1, 1]} : vector<16x160xf32> to vector<16x128xf32>
    %97 = arith.addf %95, %96 : vector<16x128xf32>
    %98 = vector.extract_strided_slice %97 {offsets = [0, 0], sizes = [16, 32], strides = [1, 1]} : vector<16x128xf32> to vector<16x32xf32>
    %99 = arith.negf %98 : vector<16x32xf32>
    %100 = math.exp %99 : vector<16x32xf32>
    %cst_40 = arith.constant 1.000000e+00 : f32
    %101 = vector.broadcast %cst_40 : f32 to vector<16x32xf32>
    %102 = arith.addf %101, %100 : vector<16x32xf32>
    %103 = arith.divf %101, %102 : vector<16x32xf32>
    %104 = vector.extract_strided_slice %97 {offsets = [0, 32], sizes = [16, 32], strides = [1, 1]} : vector<16x128xf32> to vector<16x32xf32>
    %105 = arith.negf %104 : vector<16x32xf32>
    %106 = math.exp %105 : vector<16x32xf32>
    %cst_41 = arith.constant 1.000000e+00 : f32
    %107 = vector.broadcast %cst_41 : f32 to vector<16x32xf32>
    %108 = arith.addf %107, %106 : vector<16x32xf32>
    %109 = arith.divf %107, %108 : vector<16x32xf32>
    %110 = vector.extract_strided_slice %97 {offsets = [0, 64], sizes = [16, 32], strides = [1, 1]} : vector<16x128xf32> to vector<16x32xf32>
    %111 = math.tanh %110 : vector<16x32xf32>
    %112 = vector.extract_strided_slice %97 {offsets = [0, 96], sizes = [16, 32], strides = [1, 1]} : vector<16x128xf32> to vector<16x32xf32>
    %113 = arith.negf %112 : vector<16x32xf32>
    %114 = math.exp %113 : vector<16x32xf32>
    %cst_42 = arith.constant 1.000000e+00 : f32
    %115 = vector.broadcast %cst_42 : f32 to vector<16x32xf32>
    %116 = arith.addf %115, %114 : vector<16x32xf32>
    %117 = arith.divf %115, %116 : vector<16x32xf32>
    %118 = arith.mulf %109, %82 : vector<16x32xf32>
    %119 = arith.mulf %103, %111 : vector<16x32xf32>
    %120 = arith.addf %118, %119 : vector<16x32xf32>
    %121 = math.tanh %120 : vector<16x32xf32>
    %122 = arith.mulf %117, %121 : vector<16x32xf32>
    %c3_i32 = arith.constant 3 : i32
    %cst_43 = arith.constant dense<0.000000e+00> : vector<16x160xf32>
    %123 = tpu.matmul %122, %14, %cst_43 {dimension_numbers = #tpu.dot_dimension_numbers<[1], [0], [0], [1], [0, 0, 1, 1], [], []>} : vector<16x32xf32>, vector<32x160xf32>, vector<16x160xf32> -> vector<16x160xf32>
    %124 = vector.extract_strided_slice %123 {offsets = [0, 128], sizes = [16, 32], strides = [1, 1]} : vector<16x160xf32> to vector<16x32xf32>
    %125 = arith.addf %124, %18 : vector<16x32xf32>
    %c1_i32_44 = arith.constant 1 : i32
    %126 = arith.subi %c3_i32, %c1_i32_44 : i32
    %127 = arith.index_cast %126 : i32 to index
    %c0_45 = arith.constant 0 : index
    %c0_46 = arith.constant 0 : index
    %128 = vector.load %arg10[%127, %c0_45, %c0_46] : memref<8x16x32xf32, #tpu.memory_space<vmem>>, vector<1x16x32xf32>
    %129 = vector.shape_cast %128 : vector<1x16x32xf32> to vector<16x32xf32>
    %130 = vector.shape_cast %125 : vector<16x32xf32> to vector<1x16x32xf32>
    tpu.vector_store %arg10[%127, %c0_45, %c0_46], %130 {strides = array<i32>} : memref<8x16x32xf32, #tpu.memory_space<vmem>>, vector<1x16x32xf32>,
    %131 = arith.index_cast %c3_i32 : i32 to index
    %c0_47 = arith.constant 0 : index
    %c0_48 = arith.constant 0 : index
    %132 = vector.load %arg8[%131, %c0_47, %c0_48] : memref<8x16x128xf32, #tpu.memory_space<vmem>>, vector<1x16x128xf32>
    %133 = vector.shape_cast %132 : vector<1x16x128xf32> to vector<16x128xf32>
    %134 = vector.extract_strided_slice %123 {offsets = [0, 0], sizes = [16, 128], strides = [1, 1]} : vector<16x160xf32> to vector<16x128xf32>
    %135 = arith.addf %133, %134 : vector<16x128xf32>
    %136 = vector.extract_strided_slice %135 {offsets = [0, 0], sizes = [16, 32], strides = [1, 1]} : vector<16x128xf32> to vector<16x32xf32>
    %137 = arith.negf %136 : vector<16x32xf32>
    %138 = math.exp %137 : vector<16x32xf32>
    %cst_49 = arith.constant 1.000000e+00 : f32
    %139 = vector.broadcast %cst_49 : f32 to vector<16x32xf32>
    %140 = arith.addf %139, %138 : vector<16x32xf32>
    %141 = arith.divf %139, %140 : vector<16x32xf32>
    %142 = vector.extract_strided_slice %135 {offsets = [0, 32], sizes = [16, 32], strides = [1, 1]} : vector<16x128xf32> to vector<16x32xf32>
    %143 = arith.negf %142 : vector<16x32xf32>
    %144 = math.exp %143 : vector<16x32xf32>
    %cst_50 = arith.constant 1.000000e+00 : f32
    %145 = vector.broadcast %cst_50 : f32 to vector<16x32xf32>
    %146 = arith.addf %145, %144 : vector<16x32xf32>
    %147 = arith.divf %145, %146 : vector<16x32xf32>
    %148 = vector.extract_strided_slice %135 {offsets = [0, 64], sizes = [16, 32], strides = [1, 1]} : vector<16x128xf32> to vector<16x32xf32>
    %149 = math.tanh %148 : vector<16x32xf32>
    %150 = vector.extract_strided_slice %135 {offsets = [0, 96], sizes = [16, 32], strides = [1, 1]} : vector<16x128xf32> to vector<16x32xf32>
    %151 = arith.negf %150 : vector<16x32xf32>
    %152 = math.exp %151 : vector<16x32xf32>
    %cst_51 = arith.constant 1.000000e+00 : f32
    %153 = vector.broadcast %cst_51 : f32 to vector<16x32xf32>
    %154 = arith.addf %153, %152 : vector<16x32xf32>
    %155 = arith.divf %153, %154 : vector<16x32xf32>
    %156 = arith.mulf %147, %120 : vector<16x32xf32>
    %157 = arith.mulf %141, %149 : vector<16x32xf32>
    %158 = arith.addf %156, %157 : vector<16x32xf32>
    %159 = math.tanh %158 : vector<16x32xf32>
    %160 = arith.mulf %155, %159 : vector<16x32xf32>
    %c4_i32 = arith.constant 4 : i32
    %cst_52 = arith.constant dense<0.000000e+00> : vector<16x160xf32>
    %161 = tpu.matmul %160, %14, %cst_52 {dimension_numbers = #tpu.dot_dimension_numbers<[1], [0], [0], [1], [0, 0, 1, 1], [], []>} : vector<16x32xf32>, vector<32x160xf32>, vector<16x160xf32> -> vector<16x160xf32>
    %162 = vector.extract_strided_slice %161 {offsets = [0, 128], sizes = [16, 32], strides = [1, 1]} : vector<16x160xf32> to vector<16x32xf32>
    %163 = arith.addf %162, %18 : vector<16x32xf32>
    %c1_i32_53 = arith.constant 1 : i32
    %164 = arith.subi %c4_i32, %c1_i32_53 : i32
    %165 = arith.index_cast %164 : i32 to index
    %c0_54 = arith.constant 0 : index
    %c0_55 = arith.constant 0 : index
    %166 = vector.load %arg10[%165, %c0_54, %c0_55] : memref<8x16x32xf32, #tpu.memory_space<vmem>>, vector<1x16x32xf32>
    %167 = vector.shape_cast %166 : vector<1x16x32xf32> to vector<16x32xf32>
    %168 = vector.shape_cast %163 : vector<16x32xf32> to vector<1x16x32xf32>
    tpu.vector_store %arg10[%165, %c0_54, %c0_55], %168 {strides = array<i32>} : memref<8x16x32xf32, #tpu.memory_space<vmem>>, vector<1x16x32xf32>,
    %169 = arith.index_cast %c4_i32 : i32 to index
    %c0_56 = arith.constant 0 : index
    %c0_57 = arith.constant 0 : index
    %170 = vector.load %arg8[%169, %c0_56, %c0_57] : memref<8x16x128xf32, #tpu.memory_space<vmem>>, vector<1x16x128xf32>
    %171 = vector.shape_cast %170 : vector<1x16x128xf32> to vector<16x128xf32>
    %172 = vector.extract_strided_slice %161 {offsets = [0, 0], sizes = [16, 128], strides = [1, 1]} : vector<16x160xf32> to vector<16x128xf32>
    %173 = arith.addf %171, %172 : vector<16x128xf32>
    %174 = vector.extract_strided_slice %173 {offsets = [0, 0], sizes = [16, 32], strides = [1, 1]} : vector<16x128xf32> to vector<16x32xf32>
    %175 = arith.negf %174 : vector<16x32xf32>
    %176 = math.exp %175 : vector<16x32xf32>
    %cst_58 = arith.constant 1.000000e+00 : f32
    %177 = vector.broadcast %cst_58 : f32 to vector<16x32xf32>
    %178 = arith.addf %177, %176 : vector<16x32xf32>
    %179 = arith.divf %177, %178 : vector<16x32xf32>
    %180 = vector.extract_strided_slice %173 {offsets = [0, 32], sizes = [16, 32], strides = [1, 1]} : vector<16x128xf32> to vector<16x32xf32>
    %181 = arith.negf %180 : vector<16x32xf32>
    %182 = math.exp %181 : vector<16x32xf32>
    %cst_59 = arith.constant 1.000000e+00 : f32
    %183 = vector.broadcast %cst_59 : f32 to vector<16x32xf32>
    %184 = arith.addf %183, %182 : vector<16x32xf32>
    %185 = arith.divf %183, %184 : vector<16x32xf32>
    %186 = vector.extract_strided_slice %173 {offsets = [0, 64], sizes = [16, 32], strides = [1, 1]} : vector<16x128xf32> to vector<16x32xf32>
    %187 = math.tanh %186 : vector<16x32xf32>
    %188 = vector.extract_strided_slice %173 {offsets = [0, 96], sizes = [16, 32], strides = [1, 1]} : vector<16x128xf32> to vector<16x32xf32>
    %189 = arith.negf %188 : vector<16x32xf32>
    %190 = math.exp %189 : vector<16x32xf32>
    %cst_60 = arith.constant 1.000000e+00 : f32
    %191 = vector.broadcast %cst_60 : f32 to vector<16x32xf32>
    %192 = arith.addf %191, %190 : vector<16x32xf32>
    %193 = arith.divf %191, %192 : vector<16x32xf32>
    %194 = arith.mulf %185, %158 : vector<16x32xf32>
    %195 = arith.mulf %179, %187 : vector<16x32xf32>
    %196 = arith.addf %194, %195 : vector<16x32xf32>
    %197 = math.tanh %196 : vector<16x32xf32>
    %198 = arith.mulf %193, %197 : vector<16x32xf32>
    %c5_i32 = arith.constant 5 : i32
    %cst_61 = arith.constant dense<0.000000e+00> : vector<16x160xf32>
    %199 = tpu.matmul %198, %14, %cst_61 {dimension_numbers = #tpu.dot_dimension_numbers<[1], [0], [0], [1], [0, 0, 1, 1], [], []>} : vector<16x32xf32>, vector<32x160xf32>, vector<16x160xf32> -> vector<16x160xf32>
    %200 = vector.extract_strided_slice %199 {offsets = [0, 128], sizes = [16, 32], strides = [1, 1]} : vector<16x160xf32> to vector<16x32xf32>
    %201 = arith.addf %200, %18 : vector<16x32xf32>
    %c1_i32_62 = arith.constant 1 : i32
    %202 = arith.subi %c5_i32, %c1_i32_62 : i32
    %203 = arith.index_cast %202 : i32 to index
    %c0_63 = arith.constant 0 : index
    %c0_64 = arith.constant 0 : index
    %204 = vector.load %arg10[%203, %c0_63, %c0_64] : memref<8x16x32xf32, #tpu.memory_space<vmem>>, vector<1x16x32xf32>
    %205 = vector.shape_cast %204 : vector<1x16x32xf32> to vector<16x32xf32>
    %206 = vector.shape_cast %201 : vector<16x32xf32> to vector<1x16x32xf32>
    tpu.vector_store %arg10[%203, %c0_63, %c0_64], %206 {strides = array<i32>} : memref<8x16x32xf32, #tpu.memory_space<vmem>>, vector<1x16x32xf32>,
    %207 = arith.index_cast %c5_i32 : i32 to index
    %c0_65 = arith.constant 0 : index
    %c0_66 = arith.constant 0 : index
    %208 = vector.load %arg8[%207, %c0_65, %c0_66] : memref<8x16x128xf32, #tpu.memory_space<vmem>>, vector<1x16x128xf32>
    %209 = vector.shape_cast %208 : vector<1x16x128xf32> to vector<16x128xf32>
    %210 = vector.extract_strided_slice %199 {offsets = [0, 0], sizes = [16, 128], strides = [1, 1]} : vector<16x160xf32> to vector<16x128xf32>
    %211 = arith.addf %209, %210 : vector<16x128xf32>
    %212 = vector.extract_strided_slice %211 {offsets = [0, 0], sizes = [16, 32], strides = [1, 1]} : vector<16x128xf32> to vector<16x32xf32>
    %213 = arith.negf %212 : vector<16x32xf32>
    %214 = math.exp %213 : vector<16x32xf32>
    %cst_67 = arith.constant 1.000000e+00 : f32
    %215 = vector.broadcast %cst_67 : f32 to vector<16x32xf32>
    %216 = arith.addf %215, %214 : vector<16x32xf32>
    %217 = arith.divf %215, %216 : vector<16x32xf32>
    %218 = vector.extract_strided_slice %211 {offsets = [0, 32], sizes = [16, 32], strides = [1, 1]} : vector<16x128xf32> to vector<16x32xf32>
    %219 = arith.negf %218 : vector<16x32xf32>
    %220 = math.exp %219 : vector<16x32xf32>
    %cst_68 = arith.constant 1.000000e+00 : f32
    %221 = vector.broadcast %cst_68 : f32 to vector<16x32xf32>
    %222 = arith.addf %221, %220 : vector<16x32xf32>
    %223 = arith.divf %221, %222 : vector<16x32xf32>
    %224 = vector.extract_strided_slice %211 {offsets = [0, 64], sizes = [16, 32], strides = [1, 1]} : vector<16x128xf32> to vector<16x32xf32>
    %225 = math.tanh %224 : vector<16x32xf32>
    %226 = vector.extract_strided_slice %211 {offsets = [0, 96], sizes = [16, 32], strides = [1, 1]} : vector<16x128xf32> to vector<16x32xf32>
    %227 = arith.negf %226 : vector<16x32xf32>
    %228 = math.exp %227 : vector<16x32xf32>
    %cst_69 = arith.constant 1.000000e+00 : f32
    %229 = vector.broadcast %cst_69 : f32 to vector<16x32xf32>
    %230 = arith.addf %229, %228 : vector<16x32xf32>
    %231 = arith.divf %229, %230 : vector<16x32xf32>
    %232 = arith.mulf %223, %196 : vector<16x32xf32>
    %233 = arith.mulf %217, %225 : vector<16x32xf32>
    %234 = arith.addf %232, %233 : vector<16x32xf32>
    %235 = math.tanh %234 : vector<16x32xf32>
    %236 = arith.mulf %231, %235 : vector<16x32xf32>
    %c6_i32 = arith.constant 6 : i32
    %cst_70 = arith.constant dense<0.000000e+00> : vector<16x160xf32>
    %237 = tpu.matmul %236, %14, %cst_70 {dimension_numbers = #tpu.dot_dimension_numbers<[1], [0], [0], [1], [0, 0, 1, 1], [], []>} : vector<16x32xf32>, vector<32x160xf32>, vector<16x160xf32> -> vector<16x160xf32>
    %238 = vector.extract_strided_slice %237 {offsets = [0, 128], sizes = [16, 32], strides = [1, 1]} : vector<16x160xf32> to vector<16x32xf32>
    %239 = arith.addf %238, %18 : vector<16x32xf32>
    %c1_i32_71 = arith.constant 1 : i32
    %240 = arith.subi %c6_i32, %c1_i32_71 : i32
    %241 = arith.index_cast %240 : i32 to index
    %c0_72 = arith.constant 0 : index
    %c0_73 = arith.constant 0 : index
    %242 = vector.load %arg10[%241, %c0_72, %c0_73] : memref<8x16x32xf32, #tpu.memory_space<vmem>>, vector<1x16x32xf32>
    %243 = vector.shape_cast %242 : vector<1x16x32xf32> to vector<16x32xf32>
    %244 = vector.shape_cast %239 : vector<16x32xf32> to vector<1x16x32xf32>
    tpu.vector_store %arg10[%241, %c0_72, %c0_73], %244 {strides = array<i32>} : memref<8x16x32xf32, #tpu.memory_space<vmem>>, vector<1x16x32xf32>,
    %245 = arith.index_cast %c6_i32 : i32 to index
    %c0_74 = arith.constant 0 : index
    %c0_75 = arith.constant 0 : index
    %246 = vector.load %arg8[%245, %c0_74, %c0_75] : memref<8x16x128xf32, #tpu.memory_space<vmem>>, vector<1x16x128xf32>
    %247 = vector.shape_cast %246 : vector<1x16x128xf32> to vector<16x128xf32>
    %248 = vector.extract_strided_slice %237 {offsets = [0, 0], sizes = [16, 128], strides = [1, 1]} : vector<16x160xf32> to vector<16x128xf32>
    %249 = arith.addf %247, %248 : vector<16x128xf32>
    %250 = vector.extract_strided_slice %249 {offsets = [0, 0], sizes = [16, 32], strides = [1, 1]} : vector<16x128xf32> to vector<16x32xf32>
    %251 = arith.negf %250 : vector<16x32xf32>
    %252 = math.exp %251 : vector<16x32xf32>
    %cst_76 = arith.constant 1.000000e+00 : f32
    %253 = vector.broadcast %cst_76 : f32 to vector<16x32xf32>
    %254 = arith.addf %253, %252 : vector<16x32xf32>
    %255 = arith.divf %253, %254 : vector<16x32xf32>
    %256 = vector.extract_strided_slice %249 {offsets = [0, 32], sizes = [16, 32], strides = [1, 1]} : vector<16x128xf32> to vector<16x32xf32>
    %257 = arith.negf %256 : vector<16x32xf32>
    %258 = math.exp %257 : vector<16x32xf32>
    %cst_77 = arith.constant 1.000000e+00 : f32
    %259 = vector.broadcast %cst_77 : f32 to vector<16x32xf32>
    %260 = arith.addf %259, %258 : vector<16x32xf32>
    %261 = arith.divf %259, %260 : vector<16x32xf32>
    %262 = vector.extract_strided_slice %249 {offsets = [0, 64], sizes = [16, 32], strides = [1, 1]} : vector<16x128xf32> to vector<16x32xf32>
    %263 = math.tanh %262 : vector<16x32xf32>
    %264 = vector.extract_strided_slice %249 {offsets = [0, 96], sizes = [16, 32], strides = [1, 1]} : vector<16x128xf32> to vector<16x32xf32>
    %265 = arith.negf %264 : vector<16x32xf32>
    %266 = math.exp %265 : vector<16x32xf32>
    %cst_78 = arith.constant 1.000000e+00 : f32
    %267 = vector.broadcast %cst_78 : f32 to vector<16x32xf32>
    %268 = arith.addf %267, %266 : vector<16x32xf32>
    %269 = arith.divf %267, %268 : vector<16x32xf32>
    %270 = arith.mulf %261, %234 : vector<16x32xf32>
    %271 = arith.mulf %255, %263 : vector<16x32xf32>
    %272 = arith.addf %270, %271 : vector<16x32xf32>
    %273 = math.tanh %272 : vector<16x32xf32>
    %274 = arith.mulf %269, %273 : vector<16x32xf32>
    %c7_i32 = arith.constant 7 : i32
    %cst_79 = arith.constant dense<0.000000e+00> : vector<16x160xf32>
    %275 = tpu.matmul %274, %14, %cst_79 {dimension_numbers = #tpu.dot_dimension_numbers<[1], [0], [0], [1], [0, 0, 1, 1], [], []>} : vector<16x32xf32>, vector<32x160xf32>, vector<16x160xf32> -> vector<16x160xf32>
    %276 = vector.extract_strided_slice %275 {offsets = [0, 128], sizes = [16, 32], strides = [1, 1]} : vector<16x160xf32> to vector<16x32xf32>
    %277 = arith.addf %276, %18 : vector<16x32xf32>
    %c1_i32_80 = arith.constant 1 : i32
    %278 = arith.subi %c7_i32, %c1_i32_80 : i32
    %279 = arith.index_cast %278 : i32 to index
    %c0_81 = arith.constant 0 : index
    %c0_82 = arith.constant 0 : index
    %280 = vector.load %arg10[%279, %c0_81, %c0_82] : memref<8x16x32xf32, #tpu.memory_space<vmem>>, vector<1x16x32xf32>
    %281 = vector.shape_cast %280 : vector<1x16x32xf32> to vector<16x32xf32>
    %282 = vector.shape_cast %277 : vector<16x32xf32> to vector<1x16x32xf32>
    tpu.vector_store %arg10[%279, %c0_81, %c0_82], %282 {strides = array<i32>} : memref<8x16x32xf32, #tpu.memory_space<vmem>>, vector<1x16x32xf32>,
    %283 = arith.index_cast %c7_i32 : i32 to index
    %c0_83 = arith.constant 0 : index
    %c0_84 = arith.constant 0 : index
    %284 = vector.load %arg8[%283, %c0_83, %c0_84] : memref<8x16x128xf32, #tpu.memory_space<vmem>>, vector<1x16x128xf32>
    %285 = vector.shape_cast %284 : vector<1x16x128xf32> to vector<16x128xf32>
    %286 = vector.extract_strided_slice %275 {offsets = [0, 0], sizes = [16, 128], strides = [1, 1]} : vector<16x160xf32> to vector<16x128xf32>
    %287 = arith.addf %285, %286 : vector<16x128xf32>
    %288 = vector.extract_strided_slice %287 {offsets = [0, 0], sizes = [16, 32], strides = [1, 1]} : vector<16x128xf32> to vector<16x32xf32>
    %289 = arith.negf %288 : vector<16x32xf32>
    %290 = math.exp %289 : vector<16x32xf32>
    %cst_85 = arith.constant 1.000000e+00 : f32
    %291 = vector.broadcast %cst_85 : f32 to vector<16x32xf32>
    %292 = arith.addf %291, %290 : vector<16x32xf32>
    %293 = arith.divf %291, %292 : vector<16x32xf32>
    %294 = vector.extract_strided_slice %287 {offsets = [0, 32], sizes = [16, 32], strides = [1, 1]} : vector<16x128xf32> to vector<16x32xf32>
    %295 = arith.negf %294 : vector<16x32xf32>
    %296 = math.exp %295 : vector<16x32xf32>
    %cst_86 = arith.constant 1.000000e+00 : f32
    %297 = vector.broadcast %cst_86 : f32 to vector<16x32xf32>
    %298 = arith.addf %297, %296 : vector<16x32xf32>
    %299 = arith.divf %297, %298 : vector<16x32xf32>
    %300 = vector.extract_strided_slice %287 {offsets = [0, 64], sizes = [16, 32], strides = [1, 1]} : vector<16x128xf32> to vector<16x32xf32>
    %301 = math.tanh %300 : vector<16x32xf32>
    %302 = vector.extract_strided_slice %287 {offsets = [0, 96], sizes = [16, 32], strides = [1, 1]} : vector<16x128xf32> to vector<16x32xf32>
    %303 = arith.negf %302 : vector<16x32xf32>
    %304 = math.exp %303 : vector<16x32xf32>
    %cst_87 = arith.constant 1.000000e+00 : f32
    %305 = vector.broadcast %cst_87 : f32 to vector<16x32xf32>
    %306 = arith.addf %305, %304 : vector<16x32xf32>
    %307 = arith.divf %305, %306 : vector<16x32xf32>
    %308 = arith.mulf %299, %272 : vector<16x32xf32>
    %309 = arith.mulf %293, %301 : vector<16x32xf32>
    %310 = arith.addf %308, %309 : vector<16x32xf32>
    %311 = math.tanh %310 : vector<16x32xf32>
    %312 = arith.mulf %307, %311 : vector<16x32xf32>
    %c7_i32_88 = arith.constant 7 : i32
    %313 = vector.extract_strided_slice %14 {offsets = [0, 128], sizes = [32, 32], strides = [1, 1]} : vector<32x160xf32> to vector<32x32xf32>
    %cst_89 = arith.constant dense<0.000000e+00> : vector<16x32xf32>
    %314 = tpu.matmul %312, %313, %cst_89 {dimension_numbers = #tpu.dot_dimension_numbers<[1], [0], [0], [1], [0, 0, 1, 1], [], []>} : vector<16x32xf32>, vector<32x32xf32>, vector<16x32xf32> -> vector<16x32xf32>
    %315 = arith.addf %314, %18 : vector<16x32xf32>
    %c7 = arith.constant 7 : index
    %c0_90 = arith.constant 0 : index
    %c0_91 = arith.constant 0 : index
    %316 = vector.load %arg10[%c7, %c0_90, %c0_91] : memref<8x16x32xf32, #tpu.memory_space<vmem>>, vector<1x16x32xf32>
    %317 = vector.shape_cast %316 : vector<1x16x32xf32> to vector<16x32xf32>
    %318 = vector.shape_cast %315 : vector<16x32xf32> to vector<1x16x32xf32>
    tpu.vector_store %arg10[%c7, %c0_90, %c0_91], %318 {strides = array<i32>} : memref<8x16x32xf32, #tpu.memory_space<vmem>>, vector<1x16x32xf32>,
    %c7_92 = arith.constant 7 : index
    %c0_93 = arith.constant 0 : index
    %c0_94 = arith.constant 0 : index
    %319 = vector.load %arg9[%c7_92, %c0_93, %c0_94] : memref<8x16x128xf32, #tpu.memory_space<vmem>>, vector<1x16x128xf32>
    %320 = vector.shape_cast %319 : vector<1x16x128xf32> to vector<16x128xf32>
    %321 = vector.extract_strided_slice %320 {offsets = [0, 0], sizes = [16, 32], strides = [1, 1]} : vector<16x128xf32> to vector<16x32xf32>
    %322 = arith.negf %321 : vector<16x32xf32>
    %323 = math.exp %322 : vector<16x32xf32>
    %cst_95 = arith.constant 1.000000e+00 : f32
    %324 = vector.broadcast %cst_95 : f32 to vector<16x32xf32>
    %325 = arith.addf %324, %323 : vector<16x32xf32>
    %326 = arith.divf %324, %325 : vector<16x32xf32>
    %327 = vector.extract_strided_slice %320 {offsets = [0, 32], sizes = [16, 32], strides = [1, 1]} : vector<16x128xf32> to vector<16x32xf32>
    %328 = arith.negf %327 : vector<16x32xf32>
    %329 = math.exp %328 : vector<16x32xf32>
    %cst_96 = arith.constant 1.000000e+00 : f32
    %330 = vector.broadcast %cst_96 : f32 to vector<16x32xf32>
    %331 = arith.addf %330, %329 : vector<16x32xf32>
    %332 = arith.divf %330, %331 : vector<16x32xf32>
    %333 = vector.extract_strided_slice %320 {offsets = [0, 64], sizes = [16, 32], strides = [1, 1]} : vector<16x128xf32> to vector<16x32xf32>
    %334 = math.tanh %333 : vector<16x32xf32>
    %335 = vector.extract_strided_slice %320 {offsets = [0, 96], sizes = [16, 32], strides = [1, 1]} : vector<16x128xf32> to vector<16x32xf32>
    %336 = arith.negf %335 : vector<16x32xf32>
    %337 = math.exp %336 : vector<16x32xf32>
    %cst_97 = arith.constant 1.000000e+00 : f32
    %338 = vector.broadcast %cst_97 : f32 to vector<16x32xf32>
    %339 = arith.addf %338, %337 : vector<16x32xf32>
    %340 = arith.divf %338, %339 : vector<16x32xf32>
    %341 = arith.mulf %332, %19 : vector<16x32xf32>
    %342 = arith.mulf %326, %334 : vector<16x32xf32>
    %343 = arith.addf %341, %342 : vector<16x32xf32>
    %344 = math.tanh %343 : vector<16x32xf32>
    %345 = arith.mulf %340, %344 : vector<16x32xf32>
    %cst_98 = arith.constant 0.000000e+00 : f32
    %346 = vector.broadcast %cst_98 : f32 to vector<16x32xf32>
    %c1_i32_99 = arith.constant 1 : i32
    %cst_100 = arith.constant dense<0.000000e+00> : vector<16x160xf32>
    %347 = tpu.matmul %345, %15, %cst_100 {dimension_numbers = #tpu.dot_dimension_numbers<[1], [0], [0], [1], [0, 0, 1, 1], [], []>} : vector<16x32xf32>, vector<32x160xf32>, vector<16x160xf32> -> vector<16x160xf32>
    %c8_i32 = arith.constant 8 : i32
    %348 = arith.subi %c8_i32, %c1_i32_99 : i32
    %349 = arith.index_cast %348 : i32 to index
    %c0_101 = arith.constant 0 : index
    %c0_102 = arith.constant 0 : index
    %350 = vector.load %arg10[%349, %c0_101, %c0_102] : memref<8x16x32xf32, #tpu.memory_space<vmem>>, vector<1x16x32xf32>
    %351 = vector.shape_cast %350 : vector<1x16x32xf32> to vector<16x32xf32>
    %352 = vector.extract_strided_slice %347 {offsets = [0, 128], sizes = [16, 32], strides = [1, 1]} : vector<16x160xf32> to vector<16x32xf32>
    %353 = arith.addf %351, %352 : vector<16x32xf32>
    %cst_103 = arith.constant 0.000000e+00 : f32
    %354 = vector.broadcast %cst_103 : f32 to vector<16x32xf32>
    %355 = arith.maximumf %353, %354 : vector<16x32xf32>
    %356 = arith.maximumf %346, %355 : vector<16x32xf32>
    %c7_i32_104 = arith.constant 7 : i32
    %357 = arith.subi %c7_i32_104, %c1_i32_99 : i32
    %358 = arith.index_cast %357 : i32 to index
    %c0_105 = arith.constant 0 : index
    %c0_106 = arith.constant 0 : index
    %359 = vector.load %arg9[%358, %c0_105, %c0_106] : memref<8x16x128xf32, #tpu.memory_space<vmem>>, vector<1x16x128xf32>
    %360 = vector.shape_cast %359 : vector<1x16x128xf32> to vector<16x128xf32>
    %361 = vector.extract_strided_slice %347 {offsets = [0, 0], sizes = [16, 128], strides = [1, 1]} : vector<16x160xf32> to vector<16x128xf32>
    %362 = arith.addf %360, %361 : vector<16x128xf32>
    %363 = vector.extract_strided_slice %362 {offsets = [0, 0], sizes = [16, 32], strides = [1, 1]} : vector<16x128xf32> to vector<16x32xf32>
    %364 = arith.negf %363 : vector<16x32xf32>
    %365 = math.exp %364 : vector<16x32xf32>
    %cst_107 = arith.constant 1.000000e+00 : f32
    %366 = vector.broadcast %cst_107 : f32 to vector<16x32xf32>
    %367 = arith.addf %366, %365 : vector<16x32xf32>
    %368 = arith.divf %366, %367 : vector<16x32xf32>
    %369 = vector.extract_strided_slice %362 {offsets = [0, 32], sizes = [16, 32], strides = [1, 1]} : vector<16x128xf32> to vector<16x32xf32>
    %370 = arith.negf %369 : vector<16x32xf32>
    %371 = math.exp %370 : vector<16x32xf32>
    %cst_108 = arith.constant 1.000000e+00 : f32
    %372 = vector.broadcast %cst_108 : f32 to vector<16x32xf32>
    %373 = arith.addf %372, %371 : vector<16x32xf32>
    %374 = arith.divf %372, %373 : vector<16x32xf32>
    %375 = vector.extract_strided_slice %362 {offsets = [0, 64], sizes = [16, 32], strides = [1, 1]} : vector<16x128xf32> to vector<16x32xf32>
    %376 = math.tanh %375 : vector<16x32xf32>
    %377 = vector.extract_strided_slice %362 {offsets = [0, 96], sizes = [16, 32], strides = [1, 1]} : vector<16x128xf32> to vector<16x32xf32>
    %378 = arith.negf %377 : vector<16x32xf32>
    %379 = math.exp %378 : vector<16x32xf32>
    %cst_109 = arith.constant 1.000000e+00 : f32
    %380 = vector.broadcast %cst_109 : f32 to vector<16x32xf32>
    %381 = arith.addf %380, %379 : vector<16x32xf32>
    %382 = arith.divf %380, %381 : vector<16x32xf32>
    %383 = arith.mulf %374, %343 : vector<16x32xf32>
    %384 = arith.mulf %368, %376 : vector<16x32xf32>
    %385 = arith.addf %383, %384 : vector<16x32xf32>
    %386 = math.tanh %385 : vector<16x32xf32>
    %387 = arith.mulf %382, %386 : vector<16x32xf32>
    %c2_i32_110 = arith.constant 2 : i32
    %cst_111 = arith.constant dense<0.000000e+00> : vector<16x160xf32>
    %388 = tpu.matmul %387, %15, %cst_111 {dimension_numbers = #tpu.dot_dimension_numbers<[1], [0], [0], [1], [0, 0, 1, 1], [], []>} : vector<16x32xf32>, vector<32x160xf32>, vector<16x160xf32> -> vector<16x160xf32>
    %c8_i32_112 = arith.constant 8 : i32
    %389 = arith.subi %c8_i32_112, %c2_i32_110 : i32
    %390 = arith.index_cast %389 : i32 to index
    %c0_113 = arith.constant 0 : index
    %c0_114 = arith.constant 0 : index
    %391 = vector.load %arg10[%390, %c0_113, %c0_114] : memref<8x16x32xf32, #tpu.memory_space<vmem>>, vector<1x16x32xf32>
    %392 = vector.shape_cast %391 : vector<1x16x32xf32> to vector<16x32xf32>
    %393 = vector.extract_strided_slice %388 {offsets = [0, 128], sizes = [16, 32], strides = [1, 1]} : vector<16x160xf32> to vector<16x32xf32>
    %394 = arith.addf %392, %393 : vector<16x32xf32>
    %cst_115 = arith.constant 0.000000e+00 : f32
    %395 = vector.broadcast %cst_115 : f32 to vector<16x32xf32>
    %396 = arith.maximumf %394, %395 : vector<16x32xf32>
    %397 = arith.maximumf %356, %396 : vector<16x32xf32>
    %c7_i32_116 = arith.constant 7 : i32
    %398 = arith.subi %c7_i32_116, %c2_i32_110 : i32
    %399 = arith.index_cast %398 : i32 to index
    %c0_117 = arith.constant 0 : index
    %c0_118 = arith.constant 0 : index
    %400 = vector.load %arg9[%399, %c0_117, %c0_118] : memref<8x16x128xf32, #tpu.memory_space<vmem>>, vector<1x16x128xf32>
    %401 = vector.shape_cast %400 : vector<1x16x128xf32> to vector<16x128xf32>
    %402 = vector.extract_strided_slice %388 {offsets = [0, 0], sizes = [16, 128], strides = [1, 1]} : vector<16x160xf32> to vector<16x128xf32>
    %403 = arith.addf %401, %402 : vector<16x128xf32>
    %404 = vector.extract_strided_slice %403 {offsets = [0, 0], sizes = [16, 32], strides = [1, 1]} : vector<16x128xf32> to vector<16x32xf32>
    %405 = arith.negf %404 : vector<16x32xf32>
    %406 = math.exp %405 : vector<16x32xf32>
    %cst_119 = arith.constant 1.000000e+00 : f32
    %407 = vector.broadcast %cst_119 : f32 to vector<16x32xf32>
    %408 = arith.addf %407, %406 : vector<16x32xf32>
    %409 = arith.divf %407, %408 : vector<16x32xf32>
    %410 = vector.extract_strided_slice %403 {offsets = [0, 32], sizes = [16, 32], strides = [1, 1]} : vector<16x128xf32> to vector<16x32xf32>
    %411 = arith.negf %410 : vector<16x32xf32>
    %412 = math.exp %411 : vector<16x32xf32>
    %cst_120 = arith.constant 1.000000e+00 : f32
    %413 = vector.broadcast %cst_120 : f32 to vector<16x32xf32>
    %414 = arith.addf %413, %412 : vector<16x32xf32>
    %415 = arith.divf %413, %414 : vector<16x32xf32>
    %416 = vector.extract_strided_slice %403 {offsets = [0, 64], sizes = [16, 32], strides = [1, 1]} : vector<16x128xf32> to vector<16x32xf32>
    %417 = math.tanh %416 : vector<16x32xf32>
    %418 = vector.extract_strided_slice %403 {offsets = [0, 96], sizes = [16, 32], strides = [1, 1]} : vector<16x128xf32> to vector<16x32xf32>
    %419 = arith.negf %418 : vector<16x32xf32>
    %420 = math.exp %419 : vector<16x32xf32>
    %cst_121 = arith.constant 1.000000e+00 : f32
    %421 = vector.broadcast %cst_121 : f32 to vector<16x32xf32>
    %422 = arith.addf %421, %420 : vector<16x32xf32>
    %423 = arith.divf %421, %422 : vector<16x32xf32>
    %424 = arith.mulf %415, %385 : vector<16x32xf32>
    %425 = arith.mulf %409, %417 : vector<16x32xf32>
    %426 = arith.addf %424, %425 : vector<16x32xf32>
    %427 = math.tanh %426 : vector<16x32xf32>
    %428 = arith.mulf %423, %427 : vector<16x32xf32>
    %c3_i32_122 = arith.constant 3 : i32
    %cst_123 = arith.constant dense<0.000000e+00> : vector<16x160xf32>
    %429 = tpu.matmul %428, %15, %cst_123 {dimension_numbers = #tpu.dot_dimension_numbers<[1], [0], [0], [1], [0, 0, 1, 1], [], []>} : vector<16x32xf32>, vector<32x160xf32>, vector<16x160xf32> -> vector<16x160xf32>
    %c8_i32_124 = arith.constant 8 : i32
    %430 = arith.subi %c8_i32_124, %c3_i32_122 : i32
    %431 = arith.index_cast %430 : i32 to index
    %c0_125 = arith.constant 0 : index
    %c0_126 = arith.constant 0 : index
    %432 = vector.load %arg10[%431, %c0_125, %c0_126] : memref<8x16x32xf32, #tpu.memory_space<vmem>>, vector<1x16x32xf32>
    %433 = vector.shape_cast %432 : vector<1x16x32xf32> to vector<16x32xf32>
    %434 = vector.extract_strided_slice %429 {offsets = [0, 128], sizes = [16, 32], strides = [1, 1]} : vector<16x160xf32> to vector<16x32xf32>
    %435 = arith.addf %433, %434 : vector<16x32xf32>
    %cst_127 = arith.constant 0.000000e+00 : f32
    %436 = vector.broadcast %cst_127 : f32 to vector<16x32xf32>
    %437 = arith.maximumf %435, %436 : vector<16x32xf32>
    %438 = arith.maximumf %397, %437 : vector<16x32xf32>
    %c7_i32_128 = arith.constant 7 : i32
    %439 = arith.subi %c7_i32_128, %c3_i32_122 : i32
    %440 = arith.index_cast %439 : i32 to index
    %c0_129 = arith.constant 0 : index
    %c0_130 = arith.constant 0 : index
    %441 = vector.load %arg9[%440, %c0_129, %c0_130] : memref<8x16x128xf32, #tpu.memory_space<vmem>>, vector<1x16x128xf32>
    %442 = vector.shape_cast %441 : vector<1x16x128xf32> to vector<16x128xf32>
    %443 = vector.extract_strided_slice %429 {offsets = [0, 0], sizes = [16, 128], strides = [1, 1]} : vector<16x160xf32> to vector<16x128xf32>
    %444 = arith.addf %442, %443 : vector<16x128xf32>
    %445 = vector.extract_strided_slice %444 {offsets = [0, 0], sizes = [16, 32], strides = [1, 1]} : vector<16x128xf32> to vector<16x32xf32>
    %446 = arith.negf %445 : vector<16x32xf32>
    %447 = math.exp %446 : vector<16x32xf32>
    %cst_131 = arith.constant 1.000000e+00 : f32
    %448 = vector.broadcast %cst_131 : f32 to vector<16x32xf32>
    %449 = arith.addf %448, %447 : vector<16x32xf32>
    %450 = arith.divf %448, %449 : vector<16x32xf32>
    %451 = vector.extract_strided_slice %444 {offsets = [0, 32], sizes = [16, 32], strides = [1, 1]} : vector<16x128xf32> to vector<16x32xf32>
    %452 = arith.negf %451 : vector<16x32xf32>
    %453 = math.exp %452 : vector<16x32xf32>
    %cst_132 = arith.constant 1.000000e+00 : f32
    %454 = vector.broadcast %cst_132 : f32 to vector<16x32xf32>
    %455 = arith.addf %454, %453 : vector<16x32xf32>
    %456 = arith.divf %454, %455 : vector<16x32xf32>
    %457 = vector.extract_strided_slice %444 {offsets = [0, 64], sizes = [16, 32], strides = [1, 1]} : vector<16x128xf32> to vector<16x32xf32>
    %458 = math.tanh %457 : vector<16x32xf32>
    %459 = vector.extract_strided_slice %444 {offsets = [0, 96], sizes = [16, 32], strides = [1, 1]} : vector<16x128xf32> to vector<16x32xf32>
    %460 = arith.negf %459 : vector<16x32xf32>
    %461 = math.exp %460 : vector<16x32xf32>
    %cst_133 = arith.constant 1.000000e+00 : f32
    %462 = vector.broadcast %cst_133 : f32 to vector<16x32xf32>
    %463 = arith.addf %462, %461 : vector<16x32xf32>
    %464 = arith.divf %462, %463 : vector<16x32xf32>
    %465 = arith.mulf %456, %426 : vector<16x32xf32>
    %466 = arith.mulf %450, %458 : vector<16x32xf32>
    %467 = arith.addf %465, %466 : vector<16x32xf32>
    %468 = math.tanh %467 : vector<16x32xf32>
    %469 = arith.mulf %464, %468 : vector<16x32xf32>
    %c4_i32_134 = arith.constant 4 : i32
    %cst_135 = arith.constant dense<0.000000e+00> : vector<16x160xf32>
    %470 = tpu.matmul %469, %15, %cst_135 {dimension_numbers = #tpu.dot_dimension_numbers<[1], [0], [0], [1], [0, 0, 1, 1], [], []>} : vector<16x32xf32>, vector<32x160xf32>, vector<16x160xf32> -> vector<16x160xf32>
    %c8_i32_136 = arith.constant 8 : i32
    %471 = arith.subi %c8_i32_136, %c4_i32_134 : i32
    %472 = arith.index_cast %471 : i32 to index
    %c0_137 = arith.constant 0 : index
    %c0_138 = arith.constant 0 : index
    %473 = vector.load %arg10[%472, %c0_137, %c0_138] : memref<8x16x32xf32, #tpu.memory_space<vmem>>, vector<1x16x32xf32>
    %474 = vector.shape_cast %473 : vector<1x16x32xf32> to vector<16x32xf32>
    %475 = vector.extract_strided_slice %470 {offsets = [0, 128], sizes = [16, 32], strides = [1, 1]} : vector<16x160xf32> to vector<16x32xf32>
    %476 = arith.addf %474, %475 : vector<16x32xf32>
    %cst_139 = arith.constant 0.000000e+00 : f32
    %477 = vector.broadcast %cst_139 : f32 to vector<16x32xf32>
    %478 = arith.maximumf %476, %477 : vector<16x32xf32>
    %479 = arith.maximumf %438, %478 : vector<16x32xf32>
    %c7_i32_140 = arith.constant 7 : i32
    %480 = arith.subi %c7_i32_140, %c4_i32_134 : i32
    %481 = arith.index_cast %480 : i32 to index
    %c0_141 = arith.constant 0 : index
    %c0_142 = arith.constant 0 : index
    %482 = vector.load %arg9[%481, %c0_141, %c0_142] : memref<8x16x128xf32, #tpu.memory_space<vmem>>, vector<1x16x128xf32>
    %483 = vector.shape_cast %482 : vector<1x16x128xf32> to vector<16x128xf32>
    %484 = vector.extract_strided_slice %470 {offsets = [0, 0], sizes = [16, 128], strides = [1, 1]} : vector<16x160xf32> to vector<16x128xf32>
    %485 = arith.addf %483, %484 : vector<16x128xf32>
    %486 = vector.extract_strided_slice %485 {offsets = [0, 0], sizes = [16, 32], strides = [1, 1]} : vector<16x128xf32> to vector<16x32xf32>
    %487 = arith.negf %486 : vector<16x32xf32>
    %488 = math.exp %487 : vector<16x32xf32>
    %cst_143 = arith.constant 1.000000e+00 : f32
    %489 = vector.broadcast %cst_143 : f32 to vector<16x32xf32>
    %490 = arith.addf %489, %488 : vector<16x32xf32>
    %491 = arith.divf %489, %490 : vector<16x32xf32>
    %492 = vector.extract_strided_slice %485 {offsets = [0, 32], sizes = [16, 32], strides = [1, 1]} : vector<16x128xf32> to vector<16x32xf32>
    %493 = arith.negf %492 : vector<16x32xf32>
    %494 = math.exp %493 : vector<16x32xf32>
    %cst_144 = arith.constant 1.000000e+00 : f32
    %495 = vector.broadcast %cst_144 : f32 to vector<16x32xf32>
    %496 = arith.addf %495, %494 : vector<16x32xf32>
    %497 = arith.divf %495, %496 : vector<16x32xf32>
    %498 = vector.extract_strided_slice %485 {offsets = [0, 64], sizes = [16, 32], strides = [1, 1]} : vector<16x128xf32> to vector<16x32xf32>
    %499 = math.tanh %498 : vector<16x32xf32>
    %500 = vector.extract_strided_slice %485 {offsets = [0, 96], sizes = [16, 32], strides = [1, 1]} : vector<16x128xf32> to vector<16x32xf32>
    %501 = arith.negf %500 : vector<16x32xf32>
    %502 = math.exp %501 : vector<16x32xf32>
    %cst_145 = arith.constant 1.000000e+00 : f32
    %503 = vector.broadcast %cst_145 : f32 to vector<16x32xf32>
    %504 = arith.addf %503, %502 : vector<16x32xf32>
    %505 = arith.divf %503, %504 : vector<16x32xf32>
    %506 = arith.mulf %497, %467 : vector<16x32xf32>
    %507 = arith.mulf %491, %499 : vector<16x32xf32>
    %508 = arith.addf %506, %507 : vector<16x32xf32>
    %509 = math.tanh %508 : vector<16x32xf32>
    %510 = arith.mulf %505, %509 : vector<16x32xf32>
    %c5_i32_146 = arith.constant 5 : i32
    %cst_147 = arith.constant dense<0.000000e+00> : vector<16x160xf32>
    %511 = tpu.matmul %510, %15, %cst_147 {dimension_numbers = #tpu.dot_dimension_numbers<[1], [0], [0], [1], [0, 0, 1, 1], [], []>} : vector<16x32xf32>, vector<32x160xf32>, vector<16x160xf32> -> vector<16x160xf32>
    %c8_i32_148 = arith.constant 8 : i32
    %512 = arith.subi %c8_i32_148, %c5_i32_146 : i32
    %513 = arith.index_cast %512 : i32 to index
    %c0_149 = arith.constant 0 : index
    %c0_150 = arith.constant 0 : index
    %514 = vector.load %arg10[%513, %c0_149, %c0_150] : memref<8x16x32xf32, #tpu.memory_space<vmem>>, vector<1x16x32xf32>
    %515 = vector.shape_cast %514 : vector<1x16x32xf32> to vector<16x32xf32>
    %516 = vector.extract_strided_slice %511 {offsets = [0, 128], sizes = [16, 32], strides = [1, 1]} : vector<16x160xf32> to vector<16x32xf32>
    %517 = arith.addf %515, %516 : vector<16x32xf32>
    %cst_151 = arith.constant 0.000000e+00 : f32
    %518 = vector.broadcast %cst_151 : f32 to vector<16x32xf32>
    %519 = arith.maximumf %517, %518 : vector<16x32xf32>
    %520 = arith.maximumf %479, %519 : vector<16x32xf32>
    %c7_i32_152 = arith.constant 7 : i32
    %521 = arith.subi %c7_i32_152, %c5_i32_146 : i32
    %522 = arith.index_cast %521 : i32 to index
    %c0_153 = arith.constant 0 : index
    %c0_154 = arith.constant 0 : index
    %523 = vector.load %arg9[%522, %c0_153, %c0_154] : memref<8x16x128xf32, #tpu.memory_space<vmem>>, vector<1x16x128xf32>
    %524 = vector.shape_cast %523 : vector<1x16x128xf32> to vector<16x128xf32>
    %525 = vector.extract_strided_slice %511 {offsets = [0, 0], sizes = [16, 128], strides = [1, 1]} : vector<16x160xf32> to vector<16x128xf32>
    %526 = arith.addf %524, %525 : vector<16x128xf32>
    %527 = vector.extract_strided_slice %526 {offsets = [0, 0], sizes = [16, 32], strides = [1, 1]} : vector<16x128xf32> to vector<16x32xf32>
    %528 = arith.negf %527 : vector<16x32xf32>
    %529 = math.exp %528 : vector<16x32xf32>
    %cst_155 = arith.constant 1.000000e+00 : f32
    %530 = vector.broadcast %cst_155 : f32 to vector<16x32xf32>
    %531 = arith.addf %530, %529 : vector<16x32xf32>
    %532 = arith.divf %530, %531 : vector<16x32xf32>
    %533 = vector.extract_strided_slice %526 {offsets = [0, 32], sizes = [16, 32], strides = [1, 1]} : vector<16x128xf32> to vector<16x32xf32>
    %534 = arith.negf %533 : vector<16x32xf32>
    %535 = math.exp %534 : vector<16x32xf32>
    %cst_156 = arith.constant 1.000000e+00 : f32
    %536 = vector.broadcast %cst_156 : f32 to vector<16x32xf32>
    %537 = arith.addf %536, %535 : vector<16x32xf32>
    %538 = arith.divf %536, %537 : vector<16x32xf32>
    %539 = vector.extract_strided_slice %526 {offsets = [0, 64], sizes = [16, 32], strides = [1, 1]} : vector<16x128xf32> to vector<16x32xf32>
    %540 = math.tanh %539 : vector<16x32xf32>
    %541 = vector.extract_strided_slice %526 {offsets = [0, 96], sizes = [16, 32], strides = [1, 1]} : vector<16x128xf32> to vector<16x32xf32>
    %542 = arith.negf %541 : vector<16x32xf32>
    %543 = math.exp %542 : vector<16x32xf32>
    %cst_157 = arith.constant 1.000000e+00 : f32
    %544 = vector.broadcast %cst_157 : f32 to vector<16x32xf32>
    %545 = arith.addf %544, %543 : vector<16x32xf32>
    %546 = arith.divf %544, %545 : vector<16x32xf32>
    %547 = arith.mulf %538, %508 : vector<16x32xf32>
    %548 = arith.mulf %532, %540 : vector<16x32xf32>
    %549 = arith.addf %547, %548 : vector<16x32xf32>
    %550 = math.tanh %549 : vector<16x32xf32>
    %551 = arith.mulf %546, %550 : vector<16x32xf32>
    %c6_i32_158 = arith.constant 6 : i32
    %cst_159 = arith.constant dense<0.000000e+00> : vector<16x160xf32>
    %552 = tpu.matmul %551, %15, %cst_159 {dimension_numbers = #tpu.dot_dimension_numbers<[1], [0], [0], [1], [0, 0, 1, 1], [], []>} : vector<16x32xf32>, vector<32x160xf32>, vector<16x160xf32> -> vector<16x160xf32>
    %c8_i32_160 = arith.constant 8 : i32
    %553 = arith.subi %c8_i32_160, %c6_i32_158 : i32
    %554 = arith.index_cast %553 : i32 to index
    %c0_161 = arith.constant 0 : index
    %c0_162 = arith.constant 0 : index
    %555 = vector.load %arg10[%554, %c0_161, %c0_162] : memref<8x16x32xf32, #tpu.memory_space<vmem>>, vector<1x16x32xf32>
    %556 = vector.shape_cast %555 : vector<1x16x32xf32> to vector<16x32xf32>
    %557 = vector.extract_strided_slice %552 {offsets = [0, 128], sizes = [16, 32], strides = [1, 1]} : vector<16x160xf32> to vector<16x32xf32>
    %558 = arith.addf %556, %557 : vector<16x32xf32>
    %cst_163 = arith.constant 0.000000e+00 : f32
    %559 = vector.broadcast %cst_163 : f32 to vector<16x32xf32>
    %560 = arith.maximumf %558, %559 : vector<16x32xf32>
    %561 = arith.maximumf %520, %560 : vector<16x32xf32>
    %c7_i32_164 = arith.constant 7 : i32
    %562 = arith.subi %c7_i32_164, %c6_i32_158 : i32
    %563 = arith.index_cast %562 : i32 to index
    %c0_165 = arith.constant 0 : index
    %c0_166 = arith.constant 0 : index
    %564 = vector.load %arg9[%563, %c0_165, %c0_166] : memref<8x16x128xf32, #tpu.memory_space<vmem>>, vector<1x16x128xf32>
    %565 = vector.shape_cast %564 : vector<1x16x128xf32> to vector<16x128xf32>
    %566 = vector.extract_strided_slice %552 {offsets = [0, 0], sizes = [16, 128], strides = [1, 1]} : vector<16x160xf32> to vector<16x128xf32>
    %567 = arith.addf %565, %566 : vector<16x128xf32>
    %568 = vector.extract_strided_slice %567 {offsets = [0, 0], sizes = [16, 32], strides = [1, 1]} : vector<16x128xf32> to vector<16x32xf32>
    %569 = arith.negf %568 : vector<16x32xf32>
    %570 = math.exp %569 : vector<16x32xf32>
    %cst_167 = arith.constant 1.000000e+00 : f32
    %571 = vector.broadcast %cst_167 : f32 to vector<16x32xf32>
    %572 = arith.addf %571, %570 : vector<16x32xf32>
    %573 = arith.divf %571, %572 : vector<16x32xf32>
    %574 = vector.extract_strided_slice %567 {offsets = [0, 32], sizes = [16, 32], strides = [1, 1]} : vector<16x128xf32> to vector<16x32xf32>
    %575 = arith.negf %574 : vector<16x32xf32>
    %576 = math.exp %575 : vector<16x32xf32>
    %cst_168 = arith.constant 1.000000e+00 : f32
    %577 = vector.broadcast %cst_168 : f32 to vector<16x32xf32>
    %578 = arith.addf %577, %576 : vector<16x32xf32>
    %579 = arith.divf %577, %578 : vector<16x32xf32>
    %580 = vector.extract_strided_slice %567 {offsets = [0, 64], sizes = [16, 32], strides = [1, 1]} : vector<16x128xf32> to vector<16x32xf32>
    %581 = math.tanh %580 : vector<16x32xf32>
    %582 = vector.extract_strided_slice %567 {offsets = [0, 96], sizes = [16, 32], strides = [1, 1]} : vector<16x128xf32> to vector<16x32xf32>
    %583 = arith.negf %582 : vector<16x32xf32>
    %584 = math.exp %583 : vector<16x32xf32>
    %cst_169 = arith.constant 1.000000e+00 : f32
    %585 = vector.broadcast %cst_169 : f32 to vector<16x32xf32>
    %586 = arith.addf %585, %584 : vector<16x32xf32>
    %587 = arith.divf %585, %586 : vector<16x32xf32>
    %588 = arith.mulf %579, %549 : vector<16x32xf32>
    %589 = arith.mulf %573, %581 : vector<16x32xf32>
    %590 = arith.addf %588, %589 : vector<16x32xf32>
    %591 = math.tanh %590 : vector<16x32xf32>
    %592 = arith.mulf %587, %591 : vector<16x32xf32>
    %c7_i32_170 = arith.constant 7 : i32
    %cst_171 = arith.constant dense<0.000000e+00> : vector<16x160xf32>
    %593 = tpu.matmul %592, %15, %cst_171 {dimension_numbers = #tpu.dot_dimension_numbers<[1], [0], [0], [1], [0, 0, 1, 1], [], []>} : vector<16x32xf32>, vector<32x160xf32>, vector<16x160xf32> -> vector<16x160xf32>
    %c8_i32_172 = arith.constant 8 : i32
    %594 = arith.subi %c8_i32_172, %c7_i32_170 : i32
    %595 = arith.index_cast %594 : i32 to index
    %c0_173 = arith.constant 0 : index
    %c0_174 = arith.constant 0 : index
    %596 = vector.load %arg10[%595, %c0_173, %c0_174] : memref<8x16x32xf32, #tpu.memory_space<vmem>>, vector<1x16x32xf32>
    %597 = vector.shape_cast %596 : vector<1x16x32xf32> to vector<16x32xf32>
    %598 = vector.extract_strided_slice %593 {offsets = [0, 128], sizes = [16, 32], strides = [1, 1]} : vector<16x160xf32> to vector<16x32xf32>
    %599 = arith.addf %597, %598 : vector<16x32xf32>
    %cst_175 = arith.constant 0.000000e+00 : f32
    %600 = vector.broadcast %cst_175 : f32 to vector<16x32xf32>
    %601 = arith.maximumf %599, %600 : vector<16x32xf32>
    %602 = arith.maximumf %561, %601 : vector<16x32xf32>
    %c7_i32_176 = arith.constant 7 : i32
    %603 = arith.subi %c7_i32_176, %c7_i32_170 : i32
    %604 = arith.index_cast %603 : i32 to index
    %c0_177 = arith.constant 0 : index
    %c0_178 = arith.constant 0 : index
    %605 = vector.load %arg9[%604, %c0_177, %c0_178] : memref<8x16x128xf32, #tpu.memory_space<vmem>>, vector<1x16x128xf32>
    %606 = vector.shape_cast %605 : vector<1x16x128xf32> to vector<16x128xf32>
    %607 = vector.extract_strided_slice %593 {offsets = [0, 0], sizes = [16, 128], strides = [1, 1]} : vector<16x160xf32> to vector<16x128xf32>
    %608 = arith.addf %606, %607 : vector<16x128xf32>
    %609 = vector.extract_strided_slice %608 {offsets = [0, 0], sizes = [16, 32], strides = [1, 1]} : vector<16x128xf32> to vector<16x32xf32>
    %610 = arith.negf %609 : vector<16x32xf32>
    %611 = math.exp %610 : vector<16x32xf32>
    %cst_179 = arith.constant 1.000000e+00 : f32
    %612 = vector.broadcast %cst_179 : f32 to vector<16x32xf32>
    %613 = arith.addf %612, %611 : vector<16x32xf32>
    %614 = arith.divf %612, %613 : vector<16x32xf32>
    %615 = vector.extract_strided_slice %608 {offsets = [0, 32], sizes = [16, 32], strides = [1, 1]} : vector<16x128xf32> to vector<16x32xf32>
    %616 = arith.negf %615 : vector<16x32xf32>
    %617 = math.exp %616 : vector<16x32xf32>
    %cst_180 = arith.constant 1.000000e+00 : f32
    %618 = vector.broadcast %cst_180 : f32 to vector<16x32xf32>
    %619 = arith.addf %618, %617 : vector<16x32xf32>
    %620 = arith.divf %618, %619 : vector<16x32xf32>
    %621 = vector.extract_strided_slice %608 {offsets = [0, 64], sizes = [16, 32], strides = [1, 1]} : vector<16x128xf32> to vector<16x32xf32>
    %622 = math.tanh %621 : vector<16x32xf32>
    %623 = vector.extract_strided_slice %608 {offsets = [0, 96], sizes = [16, 32], strides = [1, 1]} : vector<16x128xf32> to vector<16x32xf32>
    %624 = arith.negf %623 : vector<16x32xf32>
    %625 = math.exp %624 : vector<16x32xf32>
    %cst_181 = arith.constant 1.000000e+00 : f32
    %626 = vector.broadcast %cst_181 : f32 to vector<16x32xf32>
    %627 = arith.addf %626, %625 : vector<16x32xf32>
    %628 = arith.divf %626, %627 : vector<16x32xf32>
    %629 = arith.mulf %620, %590 : vector<16x32xf32>
    %630 = arith.mulf %614, %622 : vector<16x32xf32>
    %631 = arith.addf %629, %630 : vector<16x32xf32>
    %632 = math.tanh %631 : vector<16x32xf32>
    %633 = arith.mulf %628, %632 : vector<16x32xf32>
    %c7_i32_182 = arith.constant 7 : i32
    %c0_183 = arith.constant 0 : index
    %c0_184 = arith.constant 0 : index
    %c0_185 = arith.constant 0 : index
    %634 = vector.load %arg10[%c0_183, %c0_184, %c0_185] : memref<8x16x32xf32, #tpu.memory_space<vmem>>, vector<1x16x32xf32>
    %635 = vector.shape_cast %634 : vector<1x16x32xf32> to vector<16x32xf32>
    %636 = vector.extract_strided_slice %15 {offsets = [0, 128], sizes = [32, 32], strides = [1, 1]} : vector<32x160xf32> to vector<32x32xf32>
    %cst_186 = arith.constant dense<0.000000e+00> : vector<16x32xf32>
    %637 = tpu.matmul %633, %636, %cst_186 {dimension_numbers = #tpu.dot_dimension_numbers<[1], [0], [0], [1], [0, 0, 1, 1], [], []>} : vector<16x32xf32>, vector<32x32xf32>, vector<16x32xf32> -> vector<16x32xf32>
    %638 = arith.addf %635, %637 : vector<16x32xf32>
    %cst_187 = arith.constant 0.000000e+00 : f32
    %639 = vector.broadcast %cst_187 : f32 to vector<16x32xf32>
    %640 = arith.maximumf %638, %639 : vector<16x32xf32>
    %641 = arith.maximumf %602, %640 : vector<16x32xf32>
    %c0_188 = arith.constant 0 : index
    %c0_189 = arith.constant 0 : index
    %642 = vector.load %arg7[%c0_188, %c0_189] : memref<16x32xf32, #tpu.memory_space<vmem>>, vector<16x32xf32>
    tpu.vector_store %arg7[%c0_188, %c0_189], %641 {strides = array<i32>} : memref<16x32xf32, #tpu.memory_space<vmem>>, vector<16x32xf32>,
    return
  }
  func.func @transform_0(%arg0: i32) -> (i32, i32, i32) {
    %c0_i32 = arith.constant 0 : i32
    %c0_i32_0 = arith.constant 0 : i32
    %c0_i32_1 = arith.constant 0 : i32
    return %c0_i32, %arg0, %c0_i32_0 : i32, i32, i32
  }
  func.func @transform_1(%arg0: i32) -> (i32, i32) {
    %c0_i32 = arith.constant 0 : i32
    %c0_i32_0 = arith.constant 0 : i32
    %c0_i32_1 = arith.constant 0 : i32
    return %c0_i32, %c0_i32_0 : i32, i32
  }
  func.func @transform_2(%arg0: i32) -> (i32, i32) {
    %c0_i32 = arith.constant 0 : i32
    %c0_i32_0 = arith.constant 0 : i32
    %c0_i32_1 = arith.constant 0 : i32
    return %c0_i32, %c0_i32_0 : i32, i32
  }
  func.func @transform_3(%arg0: i32) -> (i32, i32) {
    %c0_i32 = arith.constant 0 : i32
    %c0_i32_0 = arith.constant 0 : i32
    %c0_i32_1 = arith.constant 0 : i32
    return %c0_i32, %c0_i32_0 : i32, i32
  }
  func.func @transform_4(%arg0: i32) -> (i32, i32) {
    %c0_i32 = arith.constant 0 : i32
    %c0_i32_0 = arith.constant 0 : i32
    %c0_i32_1 = arith.constant 0 : i32
    return %c0_i32, %c0_i32_0 : i32, i32
  }
  func.func @transform_5(%arg0: i32) -> (i32, i32) {
    %c0_i32 = arith.constant 0 : i32
    %c0_i32_0 = arith.constant 0 : i32
    %c0_i32_1 = arith.constant 0 : i32
    return %c0_i32, %c0_i32_0 : i32, i32
  }
  func.func @transform_6(%arg0: i32) -> (i32, i32) {
    %c0_i32 = arith.constant 0 : i32
    %c0_i32_0 = arith.constant 0 : i32
    return %arg0, %c0_i32 : i32, i32
  }
}

</mosaic_0001>

<llo_original>
// kernel: tpu_custom_call.1
$region0: #{tpu_custom_call.1}
  #allocation0 [shape = 'u32[]', space=smem, size = 0x4, offset = 0x4, fixed_abs, tag = 'smem constant byte address 0x4 - core index']
  #allocation1 [shape = 'u32[72,128]{1,0:T(1,128)}', space=vmem, size = 0x9000, scoped, tag = 'internal scratch']
  #allocation2 [shape = 'f32[8,16,128]{2,1,0:T(8,128)}', space=vmem, size = 0x10000, scoped, tag = 'scratch operand']
  #allocation3 [shape = 'f32[8,16,128]{2,1,0:T(8,128)}', space=vmem, size = 0x10000, scoped, tag = 'scratch operand']
  #allocation4 [shape = 'f32[8,16,32]{2,1,0:T(8,128)}', space=vmem, size = 0x10000, scoped, tag = 'scratch operand']
  %s0 = inlined_call_operand.hbm [shape: bf16[8,16,32], index: 0, kind: input, shape index: {}]
  %s1 = inlined_call_operand.hbm [shape: f32[32,256], index: 1, kind: input, shape index: {}]
  %s2 = inlined_call_operand.hbm [shape: f32[1,256], index: 2, kind: input, shape index: {}]
  %s3 = inlined_call_operand.hbm [shape: f32[32,160], index: 3, kind: input, shape index: {}]
  %s4 = inlined_call_operand.hbm [shape: f32[32,160], index: 4, kind: input, shape index: {}]
  %s5 = inlined_call_operand.vmem [shape: f32[1,32], index: 5, kind: input, shape index: {}]
  %s6 = inlined_call_operand.hbm [shape: f32[16,32], index: 6, kind: output, shape index: {}]
  %s7 = sld [smem:[#allocation0]]
  $region54: #{tpu_custom_call.1} parent=0
    _
  %s9 = ssub.s32 1, %s7
  %s10 = scalar_select 0, %s9, %s7
  $region1: #{tpu_custom_call.1} parent=0
    #allocation5 [shape = 'u8[32768]{0}', space=vmem, size = 0x8000, scoped, tag = 'input window, operand 0, single buffered']
    #allocation6 [shape = 's32[1]{0}', space=sflag, size = 0x4, scoped, tag = 'scoped memory for tpu_custom_call.1']
    #allocation7 [shape = 's32[1]{0}', space=sflag, size = 0x4, scoped, tag = 'scoped memory for tpu_custom_call.1']
    #allocation8 [shape = 'u8[32768]{0}', space=vmem, size = 0x8000, scoped, tag = 'input window, operand 1, single buffered']
    #allocation9 [shape = 's32[1]{0}', space=sflag, size = 0x4, scoped, tag = 'scoped memory for tpu_custom_call.1']
    #allocation10 [shape = 'u8[1024]{0}', space=vmem, size = 0x400, scoped, tag = 'input window, operand 2, single buffered']
    #allocation11 [shape = 'u8[32768]{0}', space=vmem, size = 0x8000, scoped, tag = 'input window, operand 3, single buffered']
    #allocation12 [shape = 's32[1]{0}', space=sflag, size = 0x4, scoped, tag = 'scoped memory for tpu_custom_call.1']
    #allocation13 [shape = 'u8[32768]{0}', space=vmem, size = 0x8000, scoped, tag = 'input window, operand 4, single buffered']
    #allocation14 [shape = 'u8[8192]{0}', space=vmem, size = 0x2000, scoped, tag = 'output window, operand 0, single buffered']
    %11 = vsyncpa [#allocation6], 0
    %12 = vsyncpa [#allocation9], 0
    %13 = vsyncpa [#allocation12], 0
    %14 = vsyncpa [#allocation7], 0
    // Predicated region
    $region2: #{tpu_custom_call.1} parent=1 // pred_check
      _
    $region3: #{tpu_custom_call.1} parent=1 // pred_check_branch
      %16 = sbr.rel (0) target = $region5
    $region4: #{tpu_custom_call.1} parent=1 // pred_region
      %18 = vsyncadd [#allocation6], 0
      %s19 = sshll.u32 %s0, 4
      %s20 = int_to_ptr.hbm [resolvable:$true] %s19
      %s21 = sshll.u32 [#allocation5], 4
      %s22 = int_to_ptr.vmem [resolvable:$true] %s21
      %27 = dma.hbm_to_vmem [thread:$0]  %s20, 1024, %s22, [#allocation6], 64, 64, 4
    $region5: #{tpu_custom_call.1} parent=1 // pred_fallthru
      _
    // Predicated region
    $region6: #{tpu_custom_call.1} parent=1 // pred_check
      _
    $region7: #{tpu_custom_call.1} parent=1 // pred_check_branch
      %29 = sbr.rel (0) target = $region9
    $region8: #{tpu_custom_call.1} parent=1 // pred_region
      %31 = vsyncadd [#allocation9], 0
      %s32 = sshll.u32 %s1, 4
      %s33 = int_to_ptr.hbm [resolvable:$true] %s32
      %s34 = sshll.u32 [#allocation8], 4
      %s35 = int_to_ptr.vmem [resolvable:$true] %s34
      %40 = dma.hbm_to_vmem [thread:$0]  %s33, 1024, %s35, [#allocation9], 256, 256, 16
    $region9: #{tpu_custom_call.1} parent=1 // pred_fallthru
      _
    // Predicated region
    $region10: #{tpu_custom_call.1} parent=1 // pred_check
      _
    $region11: #{tpu_custom_call.1} parent=1 // pred_check_branch
      %42 = sbr.rel (0) target = $region13
    $region12: #{tpu_custom_call.1} parent=1 // pred_region
      %44 = vsyncadd [#allocation9], 0
      %s46 = sshll.u32 %s2, 4
      %s47 = int_to_ptr.hbm [resolvable:$true] %s46
      %s48 = sshll.u32 [#allocation10], 4
      %s49 = int_to_ptr.vmem [resolvable:$true] %s48
      %51 = dma.hbm_to_vmem [thread:$0]  %s47, 32, %s49, [#allocation9]
    $region13: #{tpu_custom_call.1} parent=1 // pred_fallthru
      _
    // Predicated region
    $region14: #{tpu_custom_call.1} parent=1 // pred_check
      _
    $region15: #{tpu_custom_call.1} parent=1 // pred_check_branch
      %53 = sbr.rel (0) target = $region17
    $region16: #{tpu_custom_call.1} parent=1 // pred_region
      %55 = vsyncadd [#allocation12], 0
      %s56 = sshll.u32 %s3, 4
      %s57 = int_to_ptr.hbm [resolvable:$true] %s56
      %s58 = sshll.u32 [#allocation11], 4
      %s59 = int_to_ptr.vmem [resolvable:$true] %s58
      %64 = dma.hbm_to_vmem [thread:$0]  %s57, 1024, %s59, [#allocation12], 256, 256, 16
    $region17: #{tpu_custom_call.1} parent=1 // pred_fallthru
      _
    // Predicated region
    $region18: #{tpu_custom_call.1} parent=1 // pred_check
      _
    $region19: #{tpu_custom_call.1} parent=1 // pred_check_branch
      %66 = sbr.rel (0) target = $region21
    $region20: #{tpu_custom_call.1} parent=1 // pred_region
      %68 = vsyncadd [#allocation12], 0
      %s69 = sshll.u32 %s4, 4
      %s70 = int_to_ptr.hbm [resolvable:$true] %s69
      %s71 = sshll.u32 [#allocation13], 4
      %s72 = int_to_ptr.vmem [resolvable:$true] %s71
      %77 = dma.hbm_to_vmem [thread:$0]  %s70, 1024, %s72, [#allocation12], 256, 256, 16
    $region21: #{tpu_custom_call.1} parent=1 // pred_fallthru
      _
    // Predicated region
    $region22: #{tpu_custom_call.1} parent=1 // pred_check
      _
    $region23: #{tpu_custom_call.1} parent=1 // pred_check_branch
      %79 = sbr.rel (0) target = $region25
    $region24: #{tpu_custom_call.1} parent=1 // pred_region
      _
    $region25: #{tpu_custom_call.1} parent=1 // pred_fallthru
      _
    // Predicated region
    $region26: #{tpu_custom_call.1} parent=1 // pred_check
      _
    $region27: #{tpu_custom_call.1} parent=1 // pred_check_branch
      %81 = sbr.rel (0) target = $region29
    $region28: #{tpu_custom_call.1} parent=1 // pred_region
      %83 = dma.done [#allocation6], 1024
    $region29: #{tpu_custom_call.1} parent=1 // pred_fallthru
      _
    // Predicated region
    $region30: #{tpu_custom_call.1} parent=1 // pred_check
      _
    $region31: #{tpu_custom_call.1} parent=1 // pred_check_branch
      %85 = sbr.rel (0) target = $region33
    $region32: #{tpu_custom_call.1} parent=1 // pred_region
      %87 = dma.done [#allocation9], 1024
    $region33: #{tpu_custom_call.1} parent=1 // pred_fallthru
      _
    // Predicated region
    $region34: #{tpu_custom_call.1} parent=1 // pred_check
      _
    $region35: #{tpu_custom_call.1} parent=1 // pred_check_branch
      %89 = sbr.rel (0) target = $region37
    $region36: #{tpu_custom_call.1} parent=1 // pred_region
      %91 = dma.done [#allocation9], 32
    $region37: #{tpu_custom_call.1} parent=1 // pred_fallthru
      _
    // Predicated region
    $region38: #{tpu_custom_call.1} parent=1 // pred_check
      _
    $region39: #{tpu_custom_call.1} parent=1 // pred_check_branch
      %93 = sbr.rel (0) target = $region41
    $region40: #{tpu_custom_call.1} parent=1 // pred_region
      %95 = dma.done [#allocation12], 1024
    $region41: #{tpu_custom_call.1} parent=1 // pred_fallthru
      _
    // Predicated region
    $region42: #{tpu_custom_call.1} parent=1 // pred_check
      _
    $region43: #{tpu_custom_call.1} parent=1 // pred_check_branch
      %97 = sbr.rel (0) target = $region45
    $region44: #{tpu_custom_call.1} parent=1 // pred_region
      %99 = dma.done [#allocation12], 1024
    $region45: #{tpu_custom_call.1} parent=1 // pred_fallthru
      _
    %v100 = vld [vmem:[#allocation5] sm:$0xf]
    %v101 = vld [vmem:[#allocation5 + $0x4] sm:$0xf]
    %v102 = vld [vmem:[#allocation5 + $0x8] sm:$0xf]
    %v103 = vld [vmem:[#allocation5 + $0xc] sm:$0xf]
    %v104 = vld [vmem:[#allocation5 + $0x10] sm:$0xf]
    %v105 = vld [vmem:[#allocation5 + $0x14] sm:$0xf]
    %v106 = vld [vmem:[#allocation5 + $0x18] sm:$0xf]
    %v107 = vld [vmem:[#allocation5 + $0x1c] sm:$0xf]
    %v108 = vld [vmem:[#allocation5 + $0x20] sm:$0xf]
    %v109 = vld [vmem:[#allocation5 + $0x24] sm:$0xf]
    %v110 = vld [vmem:[#allocation5 + $0x28] sm:$0xf]
    %v111 = vld [vmem:[#allocation5 + $0x2c] sm:$0xf]
    %v112 = vld [vmem:[#allocation5 + $0x30] sm:$0xf]
    %v113 = vld [vmem:[#allocation5 + $0x34] sm:$0xf]
    %v114 = vld [vmem:[#allocation5 + $0x38] sm:$0xf]
    %v115 = vld [vmem:[#allocation5 + $0x3c] sm:$0xf]
    %v116 = vunpack.c.l.bf16 %v100
    %v117 = vunpack.c.l.bf16 %v101
    %v118 = vunpack.c.l.bf16 %v102
    %v119 = vunpack.c.l.bf16 %v103
    %v120 = vunpack.c.l.bf16 %v104
    %v121 = vunpack.c.l.bf16 %v105
    %v122 = vunpack.c.l.bf16 %v106
    %v123 = vunpack.c.l.bf16 %v107
    %v124 = vunpack.c.l.bf16 %v108
    %v125 = vunpack.c.l.bf16 %v109
    %v126 = vunpack.c.l.bf16 %v110
    %v127 = vunpack.c.l.bf16 %v111
    %v128 = vunpack.c.l.bf16 %v112
    %v129 = vunpack.c.l.bf16 %v113
    %v130 = vunpack.c.l.bf16 %v114
    %v131 = vunpack.c.l.bf16 %v115
    %v132 = vld [vmem:[#allocation8] sm:$0xff]
    %v133 = vld [vmem:[#allocation8 + $0x8] sm:$0xff]
    %v134 = vld [vmem:[#allocation8 + $0x10] sm:$0xff]
    %v135 = vld [vmem:[#allocation8 + $0x18] sm:$0xff]
    %v136 = vld [vmem:[#allocation8 + $0x20] sm:$0xff]
    %v137 = vld [vmem:[#allocation8 + $0x28] sm:$0xff]
    %v138 = vld [vmem:[#allocation8 + $0x30] sm:$0xff]
    %v139 = vld [vmem:[#allocation8 + $0x38] sm:$0xff]
    %v140 = vld [vmem:[#allocation10] sm:$0x3]
    %v142 = vperm.slane %v140, 0
    %v143 = vperm.slane %v140, 1
    %vm146 = vcmask 261120
    %v148 = vsel %vm146, %v116, 0
    %v151 = vsel %vm146, %v117, 0
    %v154 = vsel %vm146, %v118, 0
    %v157 = vsel %vm146, %v119, 0
    %v160 = vsel %vm146, %v120, 0
    %v163 = vsel %vm146, %v121, 0
    %v166 = vsel %vm146, %v122, 0
    %v169 = vsel %vm146, %v123, 0
    %v172 = vsel %vm146, %v124, 0
    %v175 = vsel %vm146, %v125, 0
    %v178 = vsel %vm146, %v126, 0
    %v181 = vsel %vm146, %v127, 0
    %v184 = vsel %vm146, %v128, 0
    %v187 = vsel %vm146, %v129, 0
    %v190 = vsel %vm146, %v130, 0
    %v193 = vsel %vm146, %v131, 0
    %195 = vmatpush.msra.mxu0 0.0
    %196 = vmatpush.msra.mxu0 0.0
    %197 = vmatpush.msra.mxu0 0.0
    %198 = vmatpush.msra.mxu0 0.0
    %199 = vmatpush.msra.mxu0 0.0
    %200 = vmatpush.msra.mxu0 0.0
    %201 = vmatpush.msra.mxu0 0.0
    %202 = vmatpush.msra.mxu0 0.0
    %203 = vmatpush.msra.mxu0 0.0
    %204 = vmatpush.msra.mxu0 0.0
    %205 = vmatpush.msra.mxu0 0.0
    %206 = vmatpush.msra.mxu0 0.0
    %207 = vmatpush.msra.mxu0 %v138
    %208 = vmatpush.msra.mxu0 %v136
    %209 = vmatpush.msra.mxu0 %v134
    %210 = vmatpush.msra.mxu0 %v132
    %211 = vmatmul.f32.gmra.mxu0 %v148
    %v212 = vpop.f32.mrf.mxu0
    %v213 = vadd.f32 %v142, %v212
    %214 = vmatmul.f32.gmra.mxu0 %v151
    %v215 = vpop.f32.mrf.mxu0
    %v216 = vadd.f32 %v142, %v215
    %217 = vmatmul.f32.gmra.mxu0 %v154
    %v218 = vpop.f32.mrf.mxu0
    %v219 = vadd.f32 %v142, %v218
    %220 = vmatmul.f32.gmra.mxu0 %v157
    %v221 = vpop.f32.mrf.mxu0
    %v222 = vadd.f32 %v142, %v221
    %223 = vmatmul.f32.gmra.mxu0 %v160
    %v224 = vpop.f32.mrf.mxu0
    %v225 = vadd.f32 %v142, %v224
    %226 = vmatmul.f32.gmra.mxu0 %v163
    %v227 = vpop.f32.mrf.mxu0
    %v228 = vadd.f32 %v142, %v227
    %229 = vmatmul.f32.gmra.mxu0 %v166
    %v230 = vpop.f32.mrf.mxu0
    %v231 = vadd.f32 %v142, %v230
    %232 = vmatmul.f32.gmra.mxu0 %v169
    %v233 = vpop.f32.mrf.mxu0
    %v234 = vadd.f32 %v142, %v233
    %235 = vmatmul.f32.gmra.mxu0 %v172
    %v236 = vpop.f32.mrf.mxu0
    %v237 = vadd.f32 %v142, %v236
    %238 = vmatmul.f32.gmra.mxu0 %v175
    %v239 = vpop.f32.mrf.mxu0
    %v240 = vadd.f32 %v142, %v239
    %241 = vmatmul.f32.gmra.mxu0 %v178
    %v242 = vpop.f32.mrf.mxu0
    %v243 = vadd.f32 %v142, %v242
    %244 = vmatmul.f32.gmra.mxu0 %v181
    %v245 = vpop.f32.mrf.mxu0
    %v246 = vadd.f32 %v142, %v245
    %247 = vmatmul.f32.gmra.mxu0 %v184
    %v248 = vpop.f32.mrf.mxu0
    %v249 = vadd.f32 %v142, %v248
    %250 = vmatmul.f32.gmra.mxu0 %v187
    %v251 = vpop.f32.mrf.mxu0
    %v252 = vadd.f32 %v142, %v251
    %253 = vmatmul.f32.gmra.mxu0 %v190
    %v254 = vpop.f32.mrf.mxu0
    %v255 = vadd.f32 %v142, %v254
    %256 = vmatmul.f32.gmra.mxu0 %v193
    %v257 = vpop.f32.mrf.mxu0
    %v258 = vadd.f32 %v142, %v257
    %259 = vdwg.mxu0
    %260 = vmatpush.msra.mxu0 0.0
    %261 = vmatpush.msra.mxu0 0.0
    %262 = vmatpush.msra.mxu0 0.0
    %263 = vmatpush.msra.mxu0 0.0
    %264 = vmatpush.msra.mxu0 0.0
    %265 = vmatpush.msra.mxu0 0.0
    %266 = vmatpush.msra.mxu0 0.0
    %267 = vmatpush.msra.mxu0 0.0
    %268 = vmatpush.msra.mxu0 0.0
    %269 = vmatpush.msra.mxu0 0.0
    %270 = vmatpush.msra.mxu0 0.0
    %271 = vmatpush.msra.mxu0 0.0
    %272 = vmatpush.msra.mxu0 %v139
    %273 = vmatpush.msra.mxu0 %v137
    %274 = vmatpush.msra.mxu0 %v135
    %275 = vmatpush.msra.mxu0 %v133
    %276 = vmatmul.f32.gmra.mxu0 %v148
    %v277 = vpop.f32.mrf.mxu0
    %v278 = vadd.f32 %v143, %v277
    %279 = vmatmul.f32.gmra.mxu0 %v151
    %v280 = vpop.f32.mrf.mxu0
    %v281 = vadd.f32 %v143, %v280
    %282 = vmatmul.f32.gmra.mxu0 %v154
    %v283 = vpop.f32.mrf.mxu0
    %v284 = vadd.f32 %v143, %v283
    %285 = vmatmul.f32.gmra.mxu0 %v157
    %v286 = vpop.f32.mrf.mxu0
    %v287 = vadd.f32 %v143, %v286
    %288 = vmatmul.f32.gmra.mxu0 %v160
    %v289 = vpop.f32.mrf.mxu0
    %v290 = vadd.f32 %v143, %v289
    %291 = vmatmul.f32.gmra.mxu0 %v163
    %v292 = vpop.f32.mrf.mxu0
    %v293 = vadd.f32 %v143, %v292
    %294 = vmatmul.f32.gmra.mxu0 %v166
    %v295 = vpop.f32.mrf.mxu0
    %v296 = vadd.f32 %v143, %v295
    %297 = vmatmul.f32.gmra.mxu0 %v169
    %v298 = vpop.f32.mrf.mxu0
    %v299 = vadd.f32 %v143, %v298
    %300 = vmatmul.f32.gmra.mxu0 %v172
    %v301 = vpop.f32.mrf.mxu0
    %v302 = vadd.f32 %v143, %v301
    %303 = vmatmul.f32.gmra.mxu0 %v175
    %v304 = vpop.f32.mrf.mxu0
    %v305 = vadd.f32 %v143, %v304
    %306 = vmatmul.f32.gmra.mxu0 %v178
    %v307 = vpop.f32.mrf.mxu0
    %v308 = vadd.f32 %v143, %v307
    %309 = vmatmul.f32.gmra.mxu0 %v181
    %v310 = vpop.f32.mrf.mxu0
    %v311 = vadd.f32 %v143, %v310
    %312 = vmatmul.f32.gmra.mxu0 %v184
    %v313 = vpop.f32.mrf.mxu0
    %v314 = vadd.f32 %v143, %v313
    %315 = vmatmul.f32.gmra.mxu0 %v187
    %v316 = vpop.f32.mrf.mxu0
    %v317 = vadd.f32 %v143, %v316
    %318 = vmatmul.f32.gmra.mxu0 %v190
    %v319 = vpop.f32.mrf.mxu0
    %v320 = vadd.f32 %v143, %v319
    %321 = vmatmul.f32.gmra.mxu0 %v193
    %v322 = vpop.f32.mrf.mxu0
    %v323 = vadd.f32 %v143, %v322
    %324 = vdwg.mxu0
    %325 = vst [vmem:[#allocation2] sm:$0xff] %v213
    %326 = vst [vmem:[#allocation2 + $0x8] sm:$0xff] %v216
    %327 = vst [vmem:[#allocation2 + $0x10] sm:$0xff] %v219
    %328 = vst [vmem:[#allocation2 + $0x18] sm:$0xff] %v222
    %329 = vst [vmem:[#allocation2 + $0x20] sm:$0xff] %v225
    %330 = vst [vmem:[#allocation2 + $0x28] sm:$0xff] %v228
    %331 = vst [vmem:[#allocation2 + $0x30] sm:$0xff] %v231
    %332 = vst [vmem:[#allocation2 + $0x38] sm:$0xff] %v234
    %333 = vst [vmem:[#allocation2 + $0x40] sm:$0xff] %v237
    %334 = vst [vmem:[#allocation2 + $0x48] sm:$0xff] %v240
    %335 = vst [vmem:[#allocation2 + $0x50] sm:$0xff] %v243
    %336 = vst [vmem:[#allocation2 + $0x58] sm:$0xff] %v246
    %337 = vst [vmem:[#allocation2 + $0x60] sm:$0xff] %v249
    %338 = vst [vmem:[#allocation2 + $0x68] sm:$0xff] %v252
    %339 = vst [vmem:[#allocation2 + $0x70] sm:$0xff] %v255
    %340 = vst [vmem:[#allocation2 + $0x78] sm:$0xff] %v258
    %341 = vst [vmem:[#allocation3] sm:$0xff] %v278
    %342 = vst [vmem:[#allocation3 + $0x8] sm:$0xff] %v281
    %343 = vst [vmem:[#allocation3 + $0x10] sm:$0xff] %v284
    %344 = vst [vmem:[#allocation3 + $0x18] sm:$0xff] %v287
    %345 = vst [vmem:[#allocation3 + $0x20] sm:$0xff] %v290
    %346 = vst [vmem:[#allocation3 + $0x28] sm:$0xff] %v293
    %347 = vst [vmem:[#allocation3 + $0x30] sm:$0xff] %v296
    %348 = vst [vmem:[#allocation3 + $0x38] sm:$0xff] %v299
    %349 = vst [vmem:[#allocation3 + $0x40] sm:$0xff] %v302
    %350 = vst [vmem:[#allocation3 + $0x48] sm:$0xff] %v305
    %351 = vst [vmem:[#allocation3 + $0x50] sm:$0xff] %v308
    %352 = vst [vmem:[#allocation3 + $0x58] sm:$0xff] %v311
    %353 = vst [vmem:[#allocation3 + $0x60] sm:$0xff] %v314
    %354 = vst [vmem:[#allocation3 + $0x68] sm:$0xff] %v317
    %355 = vst [vmem:[#allocation3 + $0x70] sm:$0xff] %v320
    %356 = vst [vmem:[#allocation3 + $0x78] sm:$0xff] %v323
    %v357 = vld [vmem:[#allocation11] sm:$0xff]
    %v358 = vld [vmem:[#allocation11 + $0x8] sm:$0xff]
    %v359 = vld [vmem:[#allocation11 + $0x10] sm:$0xff]
    %v360 = vld [vmem:[#allocation11 + $0x18] sm:$0xff]
    %v361 = vld [vmem:[#allocation11 + $0x20] sm:$0xff]
    %v362 = vld [vmem:[#allocation11 + $0x28] sm:$0xff]
    %v363 = vld [vmem:[#allocation11 + $0x30] sm:$0xff]
    %v364 = vld [vmem:[#allocation11 + $0x38] sm:$0xff]
    %v365 = vld [vmem:[#allocation13] sm:$0xff]
    %v366 = vld [vmem:[#allocation13 + $0x8] sm:$0xff]
    %v367 = vld [vmem:[#allocation13 + $0x10] sm:$0xff]
    %v368 = vld [vmem:[#allocation13 + $0x18] sm:$0xff]
    %v369 = vld [vmem:[#allocation13 + $0x20] sm:$0xff]
    %v370 = vld [vmem:[#allocation13 + $0x28] sm:$0xff]
    %v371 = vld [vmem:[#allocation13 + $0x30] sm:$0xff]
    %v372 = vld [vmem:[#allocation13 + $0x38] sm:$0xff]
    %v373 = vld [vmem:[%s5] sm:$0x1]
    %v375 = vperm.slane %v373, 0
    %v377 = vld [vmem:[#allocation2] sm:$0xff]
    %v378 = vld [vmem:[#allocation2 + $0x8] sm:$0xff]
    %v379 = vxor.u32 %v377, 2147483648
    %v380 = vxor.u32 %v378, 2147483648
    %v381 = vmul.f32 %v379, 1.442695
    %v382 = vpow.pop %v381
    %v383 = vmul.f32 %v380, 1.442695
    %v384 = vpow.pop %v383
    %v385 = vadd.f32 %v382, 1.0
    %v386 = vadd.f32 %v384, 1.0
    %v387 = vrcp.pop %v385
    %v388 = vmul.f32 %v385, %v387
    %v389 = vsub.f32 1.0, %v388
    %v390 = vmul.f32 %v387, %v389
    %v391 = vadd.f32 %v387, %v390
    %vm392 = vweird.f32 %v385
    %vm393 = vweird.f32 %v387
    %vm394 = vmor %vm392, %vm393
    %v395 = vsel %vm394, %v387, %v391
    %v396 = vand.u32 2147483647, %v385
    %vm397 = vcmp.eq.f32.partialorder %v396, 8.507059e+37
    %v398 = vand.u32 %v385, 2147483648
    %v399 = vor.u32 1.1754944e-38, %v398
    %v400 = vsel %vm397, %v399, %v395
    %v401 = vmul.f32 1.0, %v400
    %v402 = vrcp.pop %v386
    %v403 = vmul.f32 %v386, %v402
    %v404 = vsub.f32 1.0, %v403
    %v405 = vmul.f32 %v402, %v404
    %v406 = vadd.f32 %v402, %v405
    %vm407 = vweird.f32 %v386
    %vm408 = vweird.f32 %v402
    %vm409 = vmor %vm407, %vm408
    %v410 = vsel %vm409, %v402, %v406
    %v411 = vand.u32 2147483647, %v386
    %vm412 = vcmp.eq.f32.partialorder %v411, 8.507059e+37
    %v413 = vand.u32 %v386, 2147483648
    %v414 = vor.u32 1.1754944e-38, %v413
    %v415 = vsel %vm412, %v414, %v410
    %v416 = vmul.f32 1.0, %v415
    %v417 = vtanh.pop %v377
    %v418 = vtanh.pop %v378
    %v419 = vmul.f32 %v401, 0.0
    %v420 = vmul.f32 %v416, 0.0
    %423 = vrot.lane.b32.xlu0 %v417, 64
    %v424 = vpop.permute.xlu0 %423
    %425 = vrot.lane.b32.xlu0 %v418, 64
    %v426 = vpop.permute.xlu0 %425
    %v429 = vmul.f32 %v401, %v424
    %v430 = vmul.f32 %v416, %v426
    %433 = vrot.lane.b32.xlu0 %v429, 32
    %v434 = vpop.permute.xlu0 %433
    %435 = vrot.lane.b32.xlu0 %v430, 32
    %v436 = vpop.permute.xlu0 %435
    %v439 = vadd.f32 %v419, %v434
    %v440 = vadd.f32 %v420, %v436
    %v441 = vtanh.pop %v439
    %v442 = vtanh.pop %v440
    %445 = vrot.lane.b32.xlu0 %v441, 64
    %v446 = vpop.permute.xlu0 %445
    %447 = vrot.lane.b32.xlu0 %v442, 64
    %v448 = vpop.permute.xlu0 %447
    %v451 = vmul.f32 %v401, %v446
    %v452 = vmul.f32 %v416, %v448
    %455 = vrot.lane.b32.xlu0 %v451, 32
    %v456 = vpop.permute.xlu0 %455
    %457 = vrot.lane.b32.xlu0 %v452, 32
    %v458 = vpop.permute.xlu0 %457
    %v459 = vsel %vm146, %v456, 0
    %v461 = vsel %vm146, %v458, 0
    %463 = vmatpush.msra.mxu0 0.0
    %464 = vmatpush.msra.mxu0 0.0
    %465 = vmatpush.msra.mxu0 0.0
    %466 = vmatpush.msra.mxu0 0.0
    %467 = vmatpush.msra.mxu0 0.0
    %468 = vmatpush.msra.mxu0 0.0
    %469 = vmatpush.msra.mxu0 0.0
    %470 = vmatpush.msra.mxu0 0.0
    %471 = vmatpush.msra.mxu0 0.0
    %472 = vmatpush.msra.mxu0 0.0
    %473 = vmatpush.msra.mxu0 0.0
    %474 = vmatpush.msra.mxu0 0.0
    %475 = vmatpush.msra.mxu0 %v363
    %476 = vmatpush.msra.mxu0 %v361
    %477 = vmatpush.msra.mxu0 %v359
    %478 = vmatpush.msra.mxu0 %v357
    %479 = vmatmul.f32.gmra.mxu0 %v459
    %v480 = vpop.f32.mrf.mxu0
    %v481 = vadd.f32 0.0, %v480
    %482 = vmatmul.f32.gmra.mxu0 %v461
    %v483 = vpop.f32.mrf.mxu0
    %v484 = vadd.f32 0.0, %v483
    %485 = vdwg.mxu0
    %486 = vmatpush.msra.mxu0 0.0
    %487 = vmatpush.msra.mxu0 0.0
    %488 = vmatpush.msra.mxu0 0.0
    %489 = vmatpush.msra.mxu0 0.0
    %490 = vmatpush.msra.mxu0 0.0
    %491 = vmatpush.msra.mxu0 0.0
    %492 = vmatpush.msra.mxu0 0.0
    %493 = vmatpush.msra.mxu0 0.0
    %494 = vmatpush.msra.mxu0 0.0
    %495 = vmatpush.msra.mxu0 0.0
    %496 = vmatpush.msra.mxu0 0.0
    %497 = vmatpush.msra.mxu0 0.0
    %498 = vmatpush.msra.mxu0 %v364
    %499 = vmatpush.msra.mxu0 %v362
    %500 = vmatpush.msra.mxu0 %v360
    %501 = vmatpush.msra.mxu0 %v358
    %502 = vmatmul.f32.gmra.mxu0 %v459
    %v503 = vpop.f32.mrf.mxu0
    %v504 = vadd.f32 0.0, %v503
    %505 = vmatmul.f32.gmra.mxu0 %v461
    %v506 = vpop.f32.mrf.mxu0
    %v507 = vadd.f32 0.0, %v506
    %508 = vdwg.mxu0
    %v509 = vadd.f32 %v504, %v375
    %v510 = vadd.f32 %v507, %v375
    %511 = vst.msk [vmem:[#allocation4] sm:$0xff] %vm146, %v509
    %512 = vst.msk [vmem:[#allocation4 + $0x8] sm:$0xff] %vm146, %v510
    %s513 = scalar_lea.vmem [#allocation2], 16
    %v514 = vld [vmem:[%s513] sm:$0xff]
    %v515 = vld [vmem:[%s513 + $0x8] sm:$0xff]
    %v516 = vadd.f32 %v514, %v481
    %v517 = vadd.f32 %v515, %v484
    %v518 = vxor.u32 %v516, 2147483648
    %v519 = vxor.u32 %v517, 2147483648
    %v520 = vmul.f32 %v518, 1.442695
    %v521 = vpow.pop %v520
    %v522 = vmul.f32 %v519, 1.442695
    %v523 = vpow.pop %v522
    %v524 = vadd.f32 %v521, 1.0
    %v525 = vadd.f32 %v523, 1.0
    %v526 = vrcp.pop %v524
    %v527 = vmul.f32 %v524, %v526
    %v528 = vsub.f32 1.0, %v527
    %v529 = vmul.f32 %v526, %v528
    %v530 = vadd.f32 %v526, %v529
    %vm531 = vweird.f32 %v524
    %vm532 = vweird.f32 %v526
    %vm533 = vmor %vm531, %vm532
    %v534 = vsel %vm533, %v526, %v530
    %v535 = vand.u32 2147483647, %v524
    %vm536 = vcmp.eq.f32.partialorder %v535, 8.507059e+37
    %v537 = vand.u32 %v524, 2147483648
    %v538 = vor.u32 1.1754944e-38, %v537
    %v539 = vsel %vm536, %v538, %v534
    %v540 = vmul.f32 1.0, %v539
    %v541 = vrcp.pop %v525
    %v542 = vmul.f32 %v525, %v541
    %v543 = vsub.f32 1.0, %v542
    %v544 = vmul.f32 %v541, %v543
    %v545 = vadd.f32 %v541, %v544
    %vm546 = vweird.f32 %v525
    %vm547 = vweird.f32 %v541
    %vm548 = vmor %vm546, %vm547
    %v549 = vsel %vm548, %v541, %v545
    %v550 = vand.u32 2147483647, %v525
    %vm551 = vcmp.eq.f32.partialorder %v550, 8.507059e+37
    %v552 = vand.u32 %v525, 2147483648
    %v553 = vor.u32 1.1754944e-38, %v552
    %v554 = vsel %vm551, %v553, %v549
    %v555 = vmul.f32 1.0, %v554
    %v556 = vtanh.pop %v516
    %v557 = vtanh.pop %v517
    %v558 = vmul.f32 %v540, %v439
    %v559 = vmul.f32 %v555, %v440
    %562 = vrot.lane.b32.xlu0 %v556, 64
    %v563 = vpop.permute.xlu0 %562
    %564 = vrot.lane.b32.xlu0 %v557, 64
    %v565 = vpop.permute.xlu0 %564
    %v568 = vmul.f32 %v540, %v563
    %v569 = vmul.f32 %v555, %v565
    %572 = vrot.lane.b32.xlu0 %v568, 32
    %v573 = vpop.permute.xlu0 %572
    %574 = vrot.lane.b32.xlu0 %v569, 32
    %v575 = vpop.permute.xlu0 %574
    %v578 = vadd.f32 %v558, %v573
    %v579 = vadd.f32 %v559, %v575
    %v580 = vtanh.pop %v578
    %v581 = vtanh.pop %v579
    %584 = vrot.lane.b32.xlu0 %v580, 64
    %v585 = vpop.permute.xlu0 %584
    %586 = vrot.lane.b32.xlu0 %v581, 64
    %v587 = vpop.permute.xlu0 %586
    %v590 = vmul.f32 %v540, %v585
    %v591 = vmul.f32 %v555, %v587
    %594 = vrot.lane.b32.xlu0 %v590, 32
    %v595 = vpop.permute.xlu0 %594
    %596 = vrot.lane.b32.xlu0 %v591, 32
    %v597 = vpop.permute.xlu0 %596
    %v598 = vsel %vm146, %v595, 0
    %v600 = vsel %vm146, %v597, 0
    %602 = vmatpush.msra.mxu0 0.0
    %603 = vmatpush.msra.mxu0 0.0
    %604 = vmatpush.msra.mxu0 0.0
    %605 = vmatpush.msra.mxu0 0.0
    %606 = vmatpush.msra.mxu0 0.0
    %607 = vmatpush.msra.mxu0 0.0
    %608 = vmatpush.msra.mxu0 0.0
    %609 = vmatpush.msra.mxu0 0.0
    %610 = vmatpush.msra.mxu0 0.0
    %611 = vmatpush.msra.mxu0 0.0
    %612 = vmatpush.msra.mxu0 0.0
    %613 = vmatpush.msra.mxu0 0.0
    %614 = vmatpush.msra.mxu0 %v363
    %615 = vmatpush.msra.mxu0 %v361
    %616 = vmatpush.msra.mxu0 %v359
    %617 = vmatpush.msra.mxu0 %v357
    %618 = vmatmul.f32.gmra.mxu0 %v598
    %v619 = vpop.f32.mrf.mxu0
    %v620 = vadd.f32 0.0, %v619
    %621 = vmatmul.f32.gmra.mxu0 %v600
    %v622 = vpop.f32.mrf.mxu0
    %v623 = vadd.f32 0.0, %v622
    %624 = vdwg.mxu0
    %625 = vmatpush.msra.mxu0 0.0
    %626 = vmatpush.msra.mxu0 0.0
    %627 = vmatpush.msra.mxu0 0.0
    %628 = vmatpush.msra.mxu0 0.0
    %629 = vmatpush.msra.mxu0 0.0
    %630 = vmatpush.msra.mxu0 0.0
    %631 = vmatpush.msra.mxu0 0.0
    %632 = vmatpush.msra.mxu0 0.0
    %633 = vmatpush.msra.mxu0 0.0
    %634 = vmatpush.msra.mxu0 0.0
    %635 = vmatpush.msra.mxu0 0.0
    %636 = vmatpush.msra.mxu0 0.0
    %637 = vmatpush.msra.mxu0 %v364
    %638 = vmatpush.msra.mxu0 %v362
    %639 = vmatpush.msra.mxu0 %v360
    %640 = vmatpush.msra.mxu0 %v358
    %641 = vmatmul.f32.gmra.mxu0 %v598
    %v642 = vpop.f32.mrf.mxu0
    %v643 = vadd.f32 0.0, %v642
    %644 = vmatmul.f32.gmra.mxu0 %v600
    %v645 = vpop.f32.mrf.mxu0
    %v646 = vadd.f32 0.0, %v645
    %647 = vdwg.mxu0
    %v648 = vadd.f32 %v643, %v375
    %v649 = vadd.f32 %v646, %v375
    %s650 = scalar_lea.vmem [#allocation4], 16
    %651 = vst.msk [vmem:[%s650] sm:$0xff] %vm146, %v648
    %652 = vst.msk [vmem:[%s650 + $0x8] sm:$0xff] %vm146, %v649
    %s653 = scalar_lea.vmem [#allocation2], 32
    %v654 = vld [vmem:[%s653] sm:$0xff]
    %v655 = vld [vmem:[%s653 + $0x8] sm:$0xff]
    %v656 = vadd.f32 %v654, %v620
    %v657 = vadd.f32 %v655, %v623
    %v658 = vxor.u32 %v656, 2147483648
    %v659 = vxor.u32 %v657, 2147483648
    %v660 = vmul.f32 %v658, 1.442695
    %v661 = vpow.pop %v660
    %v662 = vmul.f32 %v659, 1.442695
    %v663 = vpow.pop %v662
    %v664 = vadd.f32 %v661, 1.0
    %v665 = vadd.f32 %v663, 1.0
    %v666 = vrcp.pop %v664
    %v667 = vmul.f32 %v664, %v666
    %v668 = vsub.f32 1.0, %v667
    %v669 = vmul.f32 %v666, %v668
    %v670 = vadd.f32 %v666, %v669
    %vm671 = vweird.f32 %v664
    %vm672 = vweird.f32 %v666
    %vm673 = vmor %vm671, %vm672
    %v674 = vsel %vm673, %v666, %v670
    %v675 = vand.u32 2147483647, %v664
    %vm676 = vcmp.eq.f32.partialorder %v675, 8.507059e+37
    %v677 = vand.u32 %v664, 2147483648
    %v678 = vor.u32 1.1754944e-38, %v677
    %v679 = vsel %vm676, %v678, %v674
    %v680 = vmul.f32 1.0, %v679
    %v681 = vrcp.pop %v665
    %v682 = vmul.f32 %v665, %v681
    %v683 = vsub.f32 1.0, %v682
    %v684 = vmul.f32 %v681, %v683
    %v685 = vadd.f32 %v681, %v684
    %vm686 = vweird.f32 %v665
    %vm687 = vweird.f32 %v681
    %vm688 = vmor %vm686, %vm687
    %v689 = vsel %vm688, %v681, %v685
    %v690 = vand.u32 2147483647, %v665
    %vm691 = vcmp.eq.f32.partialorder %v690, 8.507059e+37
    %v692 = vand.u32 %v665, 2147483648
    %v693 = vor.u32 1.1754944e-38, %v692
    %v694 = vsel %vm691, %v693, %v689
    %v695 = vmul.f32 1.0, %v694
    %v696 = vtanh.pop %v656
    %v697 = vtanh.pop %v657
    %v698 = vmul.f32 %v680, %v578
    %v699 = vmul.f32 %v695, %v579
    %702 = vrot.lane.b32.xlu0 %v696, 64
    %v703 = vpop.permute.xlu0 %702
    %704 = vrot.lane.b32.xlu0 %v697, 64
    %v705 = vpop.permute.xlu0 %704
    %v708 = vmul.f32 %v680, %v703
    %v709 = vmul.f32 %v695, %v705
    %712 = vrot.lane.b32.xlu0 %v708, 32
    %v713 = vpop.permute.xlu0 %712
    %714 = vrot.lane.b32.xlu0 %v709, 32
    %v715 = vpop.permute.xlu0 %714
    %v718 = vadd.f32 %v698, %v713
    %v719 = vadd.f32 %v699, %v715
    %v720 = vtanh.pop %v718
    %v721 = vtanh.pop %v719
    %724 = vrot.lane.b32.xlu0 %v720, 64
    %v725 = vpop.permute.xlu0 %724
    %726 = vrot.lane.b32.xlu0 %v721, 64
    %v727 = vpop.permute.xlu0 %726
    %v730 = vmul.f32 %v680, %v725
    %v731 = vmul.f32 %v695, %v727
    %734 = vrot.lane.b32.xlu0 %v730, 32
    %v735 = vpop.permute.xlu0 %734
    %736 = vrot.lane.b32.xlu0 %v731, 32
    %v737 = vpop.permute.xlu0 %736
    %v738 = vsel %vm146, %v735, 0
    %v740 = vsel %vm146, %v737, 0
    %742 = vmatpush.msra.mxu0 0.0
    %743 = vmatpush.msra.mxu0 0.0
    %744 = vmatpush.msra.mxu0 0.0
    %745 = vmatpush.msra.mxu0 0.0
    %746 = vmatpush.msra.mxu0 0.0
    %747 = vmatpush.msra.mxu0 0.0
    %748 = vmatpush.msra.mxu0 0.0
    %749 = vmatpush.msra.mxu0 0.0
    %750 = vmatpush.msra.mxu0 0.0
    %751 = vmatpush.msra.mxu0 0.0
    %752 = vmatpush.msra.mxu0 0.0
    %753 = vmatpush.msra.mxu0 0.0
    %754 = vmatpush.msra.mxu0 %v363
    %755 = vmatpush.msra.mxu0 %v361
    %756 = vmatpush.msra.mxu0 %v359
    %757 = vmatpush.msra.mxu0 %v357
    %758 = vmatmul.f32.gmra.mxu0 %v738
    %v759 = vpop.f32.mrf.mxu0
    %v760 = vadd.f32 0.0, %v759
    %761 = vmatmul.f32.gmra.mxu0 %v740
    %v762 = vpop.f32.mrf.mxu0
    %v763 = vadd.f32 0.0, %v762
    %764 = vdwg.mxu0
    %765 = vmatpush.msra.mxu0 0.0
    %766 = vmatpush.msra.mxu0 0.0
    %767 = vmatpush.msra.mxu0 0.0
    %768 = vmatpush.msra.mxu0 0.0
    %769 = vmatpush.msra.mxu0 0.0
    %770 = vmatpush.msra.mxu0 0.0
    %771 = vmatpush.msra.mxu0 0.0
    %772 = vmatpush.msra.mxu0 0.0
    %773 = vmatpush.msra.mxu0 0.0
    %774 = vmatpush.msra.mxu0 0.0
    %775 = vmatpush.msra.mxu0 0.0
    %776 = vmatpush.msra.mxu0 0.0
    %777 = vmatpush.msra.mxu0 %v364
    %778 = vmatpush.msra.mxu0 %v362
    %779 = vmatpush.msra.mxu0 %v360
    %780 = vmatpush.msra.mxu0 %v358
    %781 = vmatmul.f32.gmra.mxu0 %v738
    %v782 = vpop.f32.mrf.mxu0
    %v783 = vadd.f32 0.0, %v782
    %784 = vmatmul.f32.gmra.mxu0 %v740
    %v785 = vpop.f32.mrf.mxu0
    %v786 = vadd.f32 0.0, %v785
    %787 = vdwg.mxu0
    %v788 = vadd.f32 %v783, %v375
    %v789 = vadd.f32 %v786, %v375
    %s790 = scalar_lea.vmem [#allocation4], 32
    %791 = vst.msk [vmem:[%s790] sm:$0xff] %vm146, %v788
    %792 = vst.msk [vmem:[%s790 + $0x8] sm:$0xff] %vm146, %v789
    %s793 = scalar_lea.vmem [#allocation2], 48
    %v794 = vld [vmem:[%s793] sm:$0xff]
    %v795 = vld [vmem:[%s793 + $0x8] sm:$0xff]
    %v796 = vadd.f32 %v794, %v760
    %v797 = vadd.f32 %v795, %v763
    %v798 = vxor.u32 %v796, 2147483648
    %v799 = vxor.u32 %v797, 2147483648
    %v800 = vmul.f32 %v798, 1.442695
    %v801 = vpow.pop %v800
    %v802 = vmul.f32 %v799, 1.442695
    %v803 = vpow.pop %v802
    %v804 = vadd.f32 %v801, 1.0
    %v805 = vadd.f32 %v803, 1.0
    %v806 = vrcp.pop %v804
    %v807 = vmul.f32 %v804, %v806
    %v808 = vsub.f32 1.0, %v807
    %v809 = vmul.f32 %v806, %v808
    %v810 = vadd.f32 %v806, %v809
    %vm811 = vweird.f32 %v804
    %vm812 = vweird.f32 %v806
    %vm813 = vmor %vm811, %vm812
    %v814 = vsel %vm813, %v806, %v810
    %v815 = vand.u32 2147483647, %v804
    %vm816 = vcmp.eq.f32.partialorder %v815, 8.507059e+37
    %v817 = vand.u32 %v804, 2147483648
    %v818 = vor.u32 1.1754944e-38, %v817
    %v819 = vsel %vm816, %v818, %v814
    %v820 = vmul.f32 1.0, %v819
    %v821 = vrcp.pop %v805
    %v822 = vmul.f32 %v805, %v821
    %v823 = vsub.f32 1.0, %v822
    %v824 = vmul.f32 %v821, %v823
    %v825 = vadd.f32 %v821, %v824
    %vm826 = vweird.f32 %v805
    %vm827 = vweird.f32 %v821
    %vm828 = vmor %vm826, %vm827
    %v829 = vsel %vm828, %v821, %v825
    %v830 = vand.u32 2147483647, %v805
    %vm831 = vcmp.eq.f32.partialorder %v830, 8.507059e+37
    %v832 = vand.u32 %v805, 2147483648
    %v833 = vor.u32 1.1754944e-38, %v832
    %v834 = vsel %vm831, %v833, %v829
    %v835 = vmul.f32 1.0, %v834
    %v836 = vtanh.pop %v796
    %v837 = vtanh.pop %v797
    %v838 = vmul.f32 %v820, %v718
    %v839 = vmul.f32 %v835, %v719
    %842 = vrot.lane.b32.xlu0 %v836, 64
    %v843 = vpop.permute.xlu0 %842
    %844 = vrot.lane.b32.xlu0 %v837, 64
    %v845 = vpop.permute.xlu0 %844
    %v848 = vmul.f32 %v820, %v843
    %v849 = vmul.f32 %v835, %v845
    %852 = vrot.lane.b32.xlu0 %v848, 32
    %v853 = vpop.permute.xlu0 %852
    %854 = vrot.lane.b32.xlu0 %v849, 32
    %v855 = vpop.permute.xlu0 %854
    %v858 = vadd.f32 %v838, %v853
    %v859 = vadd.f32 %v839, %v855
    %v860 = vtanh.pop %v858
    %v861 = vtanh.pop %v859
    %864 = vrot.lane.b32.xlu0 %v860, 64
    %v865 = vpop.permute.xlu0 %864
    %866 = vrot.lane.b32.xlu0 %v861, 64
    %v867 = vpop.permute.xlu0 %866
    %v870 = vmul.f32 %v820, %v865
    %v871 = vmul.f32 %v835, %v867
    %874 = vrot.lane.b32.xlu0 %v870, 32
    %v875 = vpop.permute.xlu0 %874
    %876 = vrot.lane.b32.xlu0 %v871, 32
    %v877 = vpop.permute.xlu0 %876
    %v878 = vsel %vm146, %v875, 0
    %v880 = vsel %vm146, %v877, 0
    %882 = vmatpush.msra.mxu0 0.0
    %883 = vmatpush.msra.mxu0 0.0
    %884 = vmatpush.msra.mxu0 0.0
    %885 = vmatpush.msra.mxu0 0.0
    %886 = vmatpush.msra.mxu0 0.0
    %887 = vmatpush.msra.mxu0 0.0
    %888 = vmatpush.msra.mxu0 0.0
    %889 = vmatpush.msra.mxu0 0.0
    %890 = vmatpush.msra.mxu0 0.0
    %891 = vmatpush.msra.mxu0 0.0
    %892 = vmatpush.msra.mxu0 0.0
    %893 = vmatpush.msra.mxu0 0.0
    %894 = vmatpush.msra.mxu0 %v363
    %895 = vmatpush.msra.mxu0 %v361
    %896 = vmatpush.msra.mxu0 %v359
    %897 = vmatpush.msra.mxu0 %v357
    %898 = vmatmul.f32.gmra.mxu0 %v878
    %v899 = vpop.f32.mrf.mxu0
    %v900 = vadd.f32 0.0, %v899
    %901 = vmatmul.f32.gmra.mxu0 %v880
    %v902 = vpop.f32.mrf.mxu0
    %v903 = vadd.f32 0.0, %v902
    %904 = vdwg.mxu0
    %905 = vmatpush.msra.mxu0 0.0
    %906 = vmatpush.msra.mxu0 0.0
    %907 = vmatpush.msra.mxu0 0.0
    %908 = vmatpush.msra.mxu0 0.0
    %909 = vmatpush.msra.mxu0 0.0
    %910 = vmatpush.msra.mxu0 0.0
    %911 = vmatpush.msra.mxu0 0.0
    %912 = vmatpush.msra.mxu0 0.0
    %913 = vmatpush.msra.mxu0 0.0
    %914 = vmatpush.msra.mxu0 0.0
    %915 = vmatpush.msra.mxu0 0.0
    %916 = vmatpush.msra.mxu0 0.0
    %917 = vmatpush.msra.mxu0 %v364
    %918 = vmatpush.msra.mxu0 %v362
    %919 = vmatpush.msra.mxu0 %v360
    %920 = vmatpush.msra.mxu0 %v358
    %921 = vmatmul.f32.gmra.mxu0 %v878
    %v922 = vpop.f32.mrf.mxu0
    %v923 = vadd.f32 0.0, %v922
    %924 = vmatmul.f32.gmra.mxu0 %v880
    %v925 = vpop.f32.mrf.mxu0
    %v926 = vadd.f32 0.0, %v925
    %927 = vdwg.mxu0
    %v928 = vadd.f32 %v923, %v375
    %v929 = vadd.f32 %v926, %v375
    %s930 = scalar_lea.vmem [#allocation4], 48
    %931 = vst.msk [vmem:[%s930] sm:$0xff] %vm146, %v928
    %932 = vst.msk [vmem:[%s930 + $0x8] sm:$0xff] %vm146, %v929
    %s933 = scalar_lea.vmem [#allocation2], 64
    %v934 = vld [vmem:[%s933] sm:$0xff]
    %v935 = vld [vmem:[%s933 + $0x8] sm:$0xff]
    %v936 = vadd.f32 %v934, %v900
    %v937 = vadd.f32 %v935, %v903
    %v938 = vxor.u32 %v936, 2147483648
    %v939 = vxor.u32 %v937, 2147483648
    %v940 = vmul.f32 %v938, 1.442695
    %v941 = vpow.pop %v940
    %v942 = vmul.f32 %v939, 1.442695
    %v943 = vpow.pop %v942
    %v944 = vadd.f32 %v941, 1.0
    %v945 = vadd.f32 %v943, 1.0
    %v946 = vrcp.pop %v944
    %v947 = vmul.f32 %v944, %v946
    %v948 = vsub.f32 1.0, %v947
    %v949 = vmul.f32 %v946, %v948
    %v950 = vadd.f32 %v946, %v949
    %vm951 = vweird.f32 %v944
    %vm952 = vweird.f32 %v946
    %vm953 = vmor %vm951, %vm952
    %v954 = vsel %vm953, %v946, %v950
    %v955 = vand.u32 2147483647, %v944
    %vm956 = vcmp.eq.f32.partialorder %v955, 8.507059e+37
    %v957 = vand.u32 %v944, 2147483648
    %v958 = vor.u32 1.1754944e-38, %v957
    %v959 = vsel %vm956, %v958, %v954
    %v960 = vmul.f32 1.0, %v959
    %v961 = vrcp.pop %v945
    %v962 = vmul.f32 %v945, %v961
    %v963 = vsub.f32 1.0, %v962
    %v964 = vmul.f32 %v961, %v963
    %v965 = vadd.f32 %v961, %v964
    %vm966 = vweird.f32 %v945
    %vm967 = vweird.f32 %v961
    %vm968 = vmor %vm966, %vm967
    %v969 = vsel %vm968, %v961, %v965
    %v970 = vand.u32 2147483647, %v945
    %vm971 = vcmp.eq.f32.partialorder %v970, 8.507059e+37
    %v972 = vand.u32 %v945, 2147483648
    %v973 = vor.u32 1.1754944e-38, %v972
    %v974 = vsel %vm971, %v973, %v969
    %v975 = vmul.f32 1.0, %v974
    %v976 = vtanh.pop %v936
    %v977 = vtanh.pop %v937
    %v978 = vmul.f32 %v960, %v858
    %v979 = vmul.f32 %v975, %v859
    %982 = vrot.lane.b32.xlu0 %v976, 64
    %v983 = vpop.permute.xlu0 %982
    %984 = vrot.lane.b32.xlu0 %v977, 64
    %v985 = vpop.permute.xlu0 %984
    %v988 = vmul.f32 %v960, %v983
    %v989 = vmul.f32 %v975, %v985
    %992 = vrot.lane.b32.xlu0 %v988, 32
    %v993 = vpop.permute.xlu0 %992
    %994 = vrot.lane.b32.xlu0 %v989, 32
    %v995 = vpop.permute.xlu0 %994
    %v998 = vadd.f32 %v978, %v993
    %v999 = vadd.f32 %v979, %v995
    %v1000 = vtanh.pop %v998
    %v1001 = vtanh.pop %v999
    %1004 = vrot.lane.b32.xlu0 %v1000, 64
    %v1005 = vpop.permute.xlu0 %1004
    %1006 = vrot.lane.b32.xlu0 %v1001, 64
    %v1007 = vpop.permute.xlu0 %1006
    %v1010 = vmul.f32 %v960, %v1005
    %v1011 = vmul.f32 %v975, %v1007
    %1014 = vrot.lane.b32.xlu0 %v1010, 32
    %v1015 = vpop.permute.xlu0 %1014
    %1016 = vrot.lane.b32.xlu0 %v1011, 32
    %v1017 = vpop.permute.xlu0 %1016
    %v1018 = vsel %vm146, %v1015, 0
    %v1020 = vsel %vm146, %v1017, 0
    %1022 = vmatpush.msra.mxu0 0.0
    %1023 = vmatpush.msra.mxu0 0.0
    %1024 = vmatpush.msra.mxu0 0.0
    %1025 = vmatpush.msra.mxu0 0.0
    %1026 = vmatpush.msra.mxu0 0.0
    %1027 = vmatpush.msra.mxu0 0.0
    %1028 = vmatpush.msra.mxu0 0.0
    %1029 = vmatpush.msra.mxu0 0.0
    %1030 = vmatpush.msra.mxu0 0.0
    %1031 = vmatpush.msra.mxu0 0.0
    %1032 = vmatpush.msra.mxu0 0.0
    %1033 = vmatpush.msra.mxu0 0.0
    %1034 = vmatpush.msra.mxu0 %v363
    %1035 = vmatpush.msra.mxu0 %v361
    %1036 = vmatpush.msra.mxu0 %v359
    %1037 = vmatpush.msra.mxu0 %v357
    %1038 = vmatmul.f32.gmra.mxu0 %v1018
    %v1039 = vpop.f32.mrf.mxu0
    %v1040 = vadd.f32 0.0, %v1039
    %1041 = vmatmul.f32.gmra.mxu0 %v1020
    %v1042 = vpop.f32.mrf.mxu0
    %v1043 = vadd.f32 0.0, %v1042
    %1044 = vdwg.mxu0
    %1045 = vmatpush.msra.mxu0 0.0
    %1046 = vmatpush.msra.mxu0 0.0
    %1047 = vmatpush.msra.mxu0 0.0
    %1048 = vmatpush.msra.mxu0 0.0
    %1049 = vmatpush.msra.mxu0 0.0
    %1050 = vmatpush.msra.mxu0 0.0
    %1051 = vmatpush.msra.mxu0 0.0
    %1052 = vmatpush.msra.mxu0 0.0
    %1053 = vmatpush.msra.mxu0 0.0
    %1054 = vmatpush.msra.mxu0 0.0
    %1055 = vmatpush.msra.mxu0 0.0
    %1056 = vmatpush.msra.mxu0 0.0
    %1057 = vmatpush.msra.mxu0 %v364
    %1058 = vmatpush.msra.mxu0 %v362
    %1059 = vmatpush.msra.mxu0 %v360
    %1060 = vmatpush.msra.mxu0 %v358
    %1061 = vmatmul.f32.gmra.mxu0 %v1018
    %v1062 = vpop.f32.mrf.mxu0
    %v1063 = vadd.f32 0.0, %v1062
    %1064 = vmatmul.f32.gmra.mxu0 %v1020
    %v1065 = vpop.f32.mrf.mxu0
    %v1066 = vadd.f32 0.0, %v1065
    %1067 = vdwg.mxu0
    %v1068 = vadd.f32 %v1063, %v375
    %v1069 = vadd.f32 %v1066, %v375
    %s1070 = scalar_lea.vmem [#allocation4], 64
    %1071 = vst.msk [vmem:[%s1070] sm:$0xff] %vm146, %v1068
    %1072 = vst.msk [vmem:[%s1070 + $0x8] sm:$0xff] %vm146, %v1069
    %s1073 = scalar_lea.vmem [#allocation2], 80
    %v1074 = vld [vmem:[%s1073] sm:$0xff]
    %v1075 = vld [vmem:[%s1073 + $0x8] sm:$0xff]
    %v1076 = vadd.f32 %v1074, %v1040
    %v1077 = vadd.f32 %v1075, %v1043
    %v1078 = vxor.u32 %v1076, 2147483648
    %v1079 = vxor.u32 %v1077, 2147483648
    %v1080 = vmul.f32 %v1078, 1.442695
    %v1081 = vpow.pop %v1080
    %v1082 = vmul.f32 %v1079, 1.442695
    %v1083 = vpow.pop %v1082
    %v1084 = vadd.f32 %v1081, 1.0
    %v1085 = vadd.f32 %v1083, 1.0
    %v1086 = vrcp.pop %v1084
    %v1087 = vmul.f32 %v1084, %v1086
    %v1088 = vsub.f32 1.0, %v1087
    %v1089 = vmul.f32 %v1086, %v1088
    %v1090 = vadd.f32 %v1086, %v1089
    %vm1091 = vweird.f32 %v1084
    %vm1092 = vweird.f32 %v1086
    %vm1093 = vmor %vm1091, %vm1092
    %v1094 = vsel %vm1093, %v1086, %v1090
    %v1095 = vand.u32 2147483647, %v1084
    %vm1096 = vcmp.eq.f32.partialorder %v1095, 8.507059e+37
    %v1097 = vand.u32 %v1084, 2147483648
    %v1098 = vor.u32 1.1754944e-38, %v1097
    %v1099 = vsel %vm1096, %v1098, %v1094
    %v1100 = vmul.f32 1.0, %v1099
    %v1101 = vrcp.pop %v1085
    %v1102 = vmul.f32 %v1085, %v1101
    %v1103 = vsub.f32 1.0, %v1102
    %v1104 = vmul.f32 %v1101, %v1103
    %v1105 = vadd.f32 %v1101, %v1104
    %vm1106 = vweird.f32 %v1085
    %vm1107 = vweird.f32 %v1101
    %vm1108 = vmor %vm1106, %vm1107
    %v1109 = vsel %vm1108, %v1101, %v1105
    %v1110 = vand.u32 2147483647, %v1085
    %vm1111 = vcmp.eq.f32.partialorder %v1110, 8.507059e+37
    %v1112 = vand.u32 %v1085, 2147483648
    %v1113 = vor.u32 1.1754944e-38, %v1112
    %v1114 = vsel %vm1111, %v1113, %v1109
    %v1115 = vmul.f32 1.0, %v1114
    %v1116 = vtanh.pop %v1076
    %v1117 = vtanh.pop %v1077
    %v1118 = vmul.f32 %v1100, %v998
    %v1119 = vmul.f32 %v1115, %v999
    %1122 = vrot.lane.b32.xlu0 %v1116, 64
    %v1123 = vpop.permute.xlu0 %1122
    %1124 = vrot.lane.b32.xlu0 %v1117, 64
    %v1125 = vpop.permute.xlu0 %1124
    %v1128 = vmul.f32 %v1100, %v1123
    %v1129 = vmul.f32 %v1115, %v1125
    %1132 = vrot.lane.b32.xlu0 %v1128, 32
    %v1133 = vpop.permute.xlu0 %1132
    %1134 = vrot.lane.b32.xlu0 %v1129, 32
    %v1135 = vpop.permute.xlu0 %1134
    %v1138 = vadd.f32 %v1118, %v1133
    %v1139 = vadd.f32 %v1119, %v1135
    %v1140 = vtanh.pop %v1138
    %v1141 = vtanh.pop %v1139
    %1144 = vrot.lane.b32.xlu0 %v1140, 64
    %v1145 = vpop.permute.xlu0 %1144
    %1146 = vrot.lane.b32.xlu0 %v1141, 64
    %v1147 = vpop.permute.xlu0 %1146
    %v1150 = vmul.f32 %v1100, %v1145
    %v1151 = vmul.f32 %v1115, %v1147
    %1154 = vrot.lane.b32.xlu0 %v1150, 32
    %v1155 = vpop.permute.xlu0 %1154
    %1156 = vrot.lane.b32.xlu0 %v1151, 32
    %v1157 = vpop.permute.xlu0 %1156
    %v1158 = vsel %vm146, %v1155, 0
    %v1160 = vsel %vm146, %v1157, 0
    %1162 = vmatpush.msra.mxu0 0.0
    %1163 = vmatpush.msra.mxu0 0.0
    %1164 = vmatpush.msra.mxu0 0.0
    %1165 = vmatpush.msra.mxu0 0.0
    %1166 = vmatpush.msra.mxu0 0.0
    %1167 = vmatpush.msra.mxu0 0.0
    %1168 = vmatpush.msra.mxu0 0.0
    %1169 = vmatpush.msra.mxu0 0.0
    %1170 = vmatpush.msra.mxu0 0.0
    %1171 = vmatpush.msra.mxu0 0.0
    %1172 = vmatpush.msra.mxu0 0.0
    %1173 = vmatpush.msra.mxu0 0.0
    %1174 = vmatpush.msra.mxu0 %v363
    %1175 = vmatpush.msra.mxu0 %v361
    %1176 = vmatpush.msra.mxu0 %v359
    %1177 = vmatpush.msra.mxu0 %v357
    %1178 = vmatmul.f32.gmra.mxu0 %v1158
    %v1179 = vpop.f32.mrf.mxu0
    %v1180 = vadd.f32 0.0, %v1179
    %1181 = vmatmul.f32.gmra.mxu0 %v1160
    %v1182 = vpop.f32.mrf.mxu0
    %v1183 = vadd.f32 0.0, %v1182
    %1184 = vdwg.mxu0
    %1185 = vmatpush.msra.mxu0 0.0
    %1186 = vmatpush.msra.mxu0 0.0
    %1187 = vmatpush.msra.mxu0 0.0
    %1188 = vmatpush.msra.mxu0 0.0
    %1189 = vmatpush.msra.mxu0 0.0
    %1190 = vmatpush.msra.mxu0 0.0
    %1191 = vmatpush.msra.mxu0 0.0
    %1192 = vmatpush.msra.mxu0 0.0
    %1193 = vmatpush.msra.mxu0 0.0
    %1194 = vmatpush.msra.mxu0 0.0
    %1195 = vmatpush.msra.mxu0 0.0
    %1196 = vmatpush.msra.mxu0 0.0
    %1197 = vmatpush.msra.mxu0 %v364
    %1198 = vmatpush.msra.mxu0 %v362
    %1199 = vmatpush.msra.mxu0 %v360
    %1200 = vmatpush.msra.mxu0 %v358
    %1201 = vmatmul.f32.gmra.mxu0 %v1158
    %v1202 = vpop.f32.mrf.mxu0
    %v1203 = vadd.f32 0.0, %v1202
    %1204 = vmatmul.f32.gmra.mxu0 %v1160
    %v1205 = vpop.f32.mrf.mxu0
    %v1206 = vadd.f32 0.0, %v1205
    %1207 = vdwg.mxu0
    %v1208 = vadd.f32 %v1203, %v375
    %v1209 = vadd.f32 %v1206, %v375
    %s1210 = scalar_lea.vmem [#allocation4], 80
    %1211 = vst.msk [vmem:[%s1210] sm:$0xff] %vm146, %v1208
    %1212 = vst.msk [vmem:[%s1210 + $0x8] sm:$0xff] %vm146, %v1209
    %s1213 = scalar_lea.vmem [#allocation2], 96
    %v1214 = vld [vmem:[%s1213] sm:$0xff]
    %v1215 = vld [vmem:[%s1213 + $0x8] sm:$0xff]
    %v1216 = vadd.f32 %v1214, %v1180
    %v1217 = vadd.f32 %v1215, %v1183
    %v1218 = vxor.u32 %v1216, 2147483648
    %v1219 = vxor.u32 %v1217, 2147483648
    %v1220 = vmul.f32 %v1218, 1.442695
    %v1221 = vpow.pop %v1220
    %v1222 = vmul.f32 %v1219, 1.442695
    %v1223 = vpow.pop %v1222
    %v1224 = vadd.f32 %v1221, 1.0
    %v1225 = vadd.f32 %v1223, 1.0
    %v1226 = vrcp.pop %v1224
    %v1227 = vmul.f32 %v1224, %v1226
    %v1228 = vsub.f32 1.0, %v1227
    %v1229 = vmul.f32 %v1226, %v1228
    %v1230 = vadd.f32 %v1226, %v1229
    %vm1231 = vweird.f32 %v1224
    %vm1232 = vweird.f32 %v1226
    %vm1233 = vmor %vm1231, %vm1232
    %v1234 = vsel %vm1233, %v1226, %v1230
    %v1235 = vand.u32 2147483647, %v1224
    %vm1236 = vcmp.eq.f32.partialorder %v1235, 8.507059e+37
    %v1237 = vand.u32 %v1224, 2147483648
    %v1238 = vor.u32 1.1754944e-38, %v1237
    %v1239 = vsel %vm1236, %v1238, %v1234
    %v1240 = vmul.f32 1.0, %v1239
    %v1241 = vrcp.pop %v1225
    %v1242 = vmul.f32 %v1225, %v1241
    %v1243 = vsub.f32 1.0, %v1242
    %v1244 = vmul.f32 %v1241, %v1243
    %v1245 = vadd.f32 %v1241, %v1244
    %vm1246 = vweird.f32 %v1225
    %vm1247 = vweird.f32 %v1241
    %vm1248 = vmor %vm1246, %vm1247
    %v1249 = vsel %vm1248, %v1241, %v1245
    %v1250 = vand.u32 2147483647, %v1225
    %vm1251 = vcmp.eq.f32.partialorder %v1250, 8.507059e+37
    %v1252 = vand.u32 %v1225, 2147483648
    %v1253 = vor.u32 1.1754944e-38, %v1252
    %v1254 = vsel %vm1251, %v1253, %v1249
    %v1255 = vmul.f32 1.0, %v1254
    %v1256 = vtanh.pop %v1216
    %v1257 = vtanh.pop %v1217
    %v1258 = vmul.f32 %v1240, %v1138
    %v1259 = vmul.f32 %v1255, %v1139
    %1262 = vrot.lane.b32.xlu0 %v1256, 64
    %v1263 = vpop.permute.xlu0 %1262
    %1264 = vrot.lane.b32.xlu0 %v1257, 64
    %v1265 = vpop.permute.xlu0 %1264
    %v1268 = vmul.f32 %v1240, %v1263
    %v1269 = vmul.f32 %v1255, %v1265
    %1272 = vrot.lane.b32.xlu0 %v1268, 32
    %v1273 = vpop.permute.xlu0 %1272
    %1274 = vrot.lane.b32.xlu0 %v1269, 32
    %v1275 = vpop.permute.xlu0 %1274
    %v1278 = vadd.f32 %v1258, %v1273
    %v1279 = vadd.f32 %v1259, %v1275
    %v1280 = vtanh.pop %v1278
    %v1281 = vtanh.pop %v1279
    %1284 = vrot.lane.b32.xlu0 %v1280, 64
    %v1285 = vpop.permute.xlu0 %1284
    %1286 = vrot.lane.b32.xlu0 %v1281, 64
    %v1287 = vpop.permute.xlu0 %1286
    %v1290 = vmul.f32 %v1240, %v1285
    %v1291 = vmul.f32 %v1255, %v1287
    %1294 = vrot.lane.b32.xlu0 %v1290, 32
    %v1295 = vpop.permute.xlu0 %1294
    %1296 = vrot.lane.b32.xlu0 %v1291, 32
    %v1297 = vpop.permute.xlu0 %1296
    %v1298 = vsel %vm146, %v1295, 0
    %v1300 = vsel %vm146, %v1297, 0
    %1302 = vmatpush.msra.mxu0 0.0
    %1303 = vmatpush.msra.mxu0 0.0
    %1304 = vmatpush.msra.mxu0 0.0
    %1305 = vmatpush.msra.mxu0 0.0
    %1306 = vmatpush.msra.mxu0 0.0
    %1307 = vmatpush.msra.mxu0 0.0
    %1308 = vmatpush.msra.mxu0 0.0
    %1309 = vmatpush.msra.mxu0 0.0
    %1310 = vmatpush.msra.mxu0 0.0
    %1311 = vmatpush.msra.mxu0 0.0
    %1312 = vmatpush.msra.mxu0 0.0
    %1313 = vmatpush.msra.mxu0 0.0
    %1314 = vmatpush.msra.mxu0 %v363
    %1315 = vmatpush.msra.mxu0 %v361
    %1316 = vmatpush.msra.mxu0 %v359
    %1317 = vmatpush.msra.mxu0 %v357
    %1318 = vmatmul.f32.gmra.mxu0 %v1298
    %v1319 = vpop.f32.mrf.mxu0
    %v1320 = vadd.f32 0.0, %v1319
    %1321 = vmatmul.f32.gmra.mxu0 %v1300
    %v1322 = vpop.f32.mrf.mxu0
    %v1323 = vadd.f32 0.0, %v1322
    %1324 = vdwg.mxu0
    %1325 = vmatpush.msra.mxu0 0.0
    %1326 = vmatpush.msra.mxu0 0.0
    %1327 = vmatpush.msra.mxu0 0.0
    %1328 = vmatpush.msra.mxu0 0.0
    %1329 = vmatpush.msra.mxu0 0.0
    %1330 = vmatpush.msra.mxu0 0.0
    %1331 = vmatpush.msra.mxu0 0.0
    %1332 = vmatpush.msra.mxu0 0.0
    %1333 = vmatpush.msra.mxu0 0.0
    %1334 = vmatpush.msra.mxu0 0.0
    %1335 = vmatpush.msra.mxu0 0.0
    %1336 = vmatpush.msra.mxu0 0.0
    %1337 = vmatpush.msra.mxu0 %v364
    %1338 = vmatpush.msra.mxu0 %v362
    %1339 = vmatpush.msra.mxu0 %v360
    %1340 = vmatpush.msra.mxu0 %v358
    %1341 = vmatmul.f32.gmra.mxu0 %v1298
    %v1342 = vpop.f32.mrf.mxu0
    %v1343 = vadd.f32 0.0, %v1342
    %1344 = vmatmul.f32.gmra.mxu0 %v1300
    %v1345 = vpop.f32.mrf.mxu0
    %v1346 = vadd.f32 0.0, %v1345
    %1347 = vdwg.mxu0
    %v1348 = vadd.f32 %v1343, %v375
    %v1349 = vadd.f32 %v1346, %v375
    %s1350 = scalar_lea.vmem [#allocation4], 96
    %1351 = vst.msk [vmem:[%s1350] sm:$0xff] %vm146, %v1348
    %1352 = vst.msk [vmem:[%s1350 + $0x8] sm:$0xff] %vm146, %v1349
    %s1353 = scalar_lea.vmem [#allocation2], 112
    %v1354 = vld [vmem:[%s1353] sm:$0xff]
    %v1355 = vld [vmem:[%s1353 + $0x8] sm:$0xff]
    %v1356 = vadd.f32 %v1354, %v1320
    %v1357 = vadd.f32 %v1355, %v1323
    %v1358 = vxor.u32 %v1356, 2147483648
    %v1359 = vxor.u32 %v1357, 2147483648
    %v1360 = vmul.f32 %v1358, 1.442695
    %v1361 = vpow.pop %v1360
    %v1362 = vmul.f32 %v1359, 1.442695
    %v1363 = vpow.pop %v1362
    %v1364 = vadd.f32 %v1361, 1.0
    %v1365 = vadd.f32 %v1363, 1.0
    %v1366 = vrcp.pop %v1364
    %v1367 = vmul.f32 %v1364, %v1366
    %v1368 = vsub.f32 1.0, %v1367
    %v1369 = vmul.f32 %v1366, %v1368
    %v1370 = vadd.f32 %v1366, %v1369
    %vm1371 = vweird.f32 %v1364
    %vm1372 = vweird.f32 %v1366
    %vm1373 = vmor %vm1371, %vm1372
    %v1374 = vsel %vm1373, %v1366, %v1370
    %v1375 = vand.u32 2147483647, %v1364
    %vm1376 = vcmp.eq.f32.partialorder %v1375, 8.507059e+37
    %v1377 = vand.u32 %v1364, 2147483648
    %v1378 = vor.u32 1.1754944e-38, %v1377
    %v1379 = vsel %vm1376, %v1378, %v1374
    %v1380 = vmul.f32 1.0, %v1379
    %v1381 = vrcp.pop %v1365
    %v1382 = vmul.f32 %v1365, %v1381
    %v1383 = vsub.f32 1.0, %v1382
    %v1384 = vmul.f32 %v1381, %v1383
    %v1385 = vadd.f32 %v1381, %v1384
    %vm1386 = vweird.f32 %v1365
    %vm1387 = vweird.f32 %v1381
    %vm1388 = vmor %vm1386, %vm1387
    %v1389 = vsel %vm1388, %v1381, %v1385
    %v1390 = vand.u32 2147483647, %v1365
    %vm1391 = vcmp.eq.f32.partialorder %v1390, 8.507059e+37
    %v1392 = vand.u32 %v1365, 2147483648
    %v1393 = vor.u32 1.1754944e-38, %v1392
    %v1394 = vsel %vm1391, %v1393, %v1389
    %v1395 = vmul.f32 1.0, %v1394
    %v1396 = vtanh.pop %v1356
    %v1397 = vtanh.pop %v1357
    %v1398 = vmul.f32 %v1380, %v1278
    %v1399 = vmul.f32 %v1395, %v1279
    %1402 = vrot.lane.b32.xlu0 %v1396, 64
    %v1403 = vpop.permute.xlu0 %1402
    %1404 = vrot.lane.b32.xlu0 %v1397, 64
    %v1405 = vpop.permute.xlu0 %1404
    %v1408 = vmul.f32 %v1380, %v1403
    %v1409 = vmul.f32 %v1395, %v1405
    %1412 = vrot.lane.b32.xlu0 %v1408, 32
    %v1413 = vpop.permute.xlu0 %1412
    %1414 = vrot.lane.b32.xlu0 %v1409, 32
    %v1415 = vpop.permute.xlu0 %1414
    %v1418 = vadd.f32 %v1398, %v1413
    %v1419 = vadd.f32 %v1399, %v1415
    %v1420 = vtanh.pop %v1418
    %v1421 = vtanh.pop %v1419
    %1424 = vrot.lane.b32.xlu0 %v1420, 64
    %v1425 = vpop.permute.xlu0 %1424
    %1426 = vrot.lane.b32.xlu0 %v1421, 64
    %v1427 = vpop.permute.xlu0 %1426
    %v1430 = vmul.f32 %v1380, %v1425
    %v1431 = vmul.f32 %v1395, %v1427
    %1434 = vrot.lane.b32.xlu0 %v1430, 32
    %v1435 = vpop.permute.xlu0 %1434
    %1436 = vrot.lane.b32.xlu0 %v1431, 32
    %v1437 = vpop.permute.xlu0 %1436
    %v1438 = vsel %vm146, %v1435, 0
    %v1440 = vsel %vm146, %v1437, 0
    %1442 = vmatpush.msra.mxu0 0.0
    %1443 = vmatpush.msra.mxu0 0.0
    %1444 = vmatpush.msra.mxu0 0.0
    %1445 = vmatpush.msra.mxu0 0.0
    %1446 = vmatpush.msra.mxu0 0.0
    %1447 = vmatpush.msra.mxu0 0.0
    %1448 = vmatpush.msra.mxu0 0.0
    %1449 = vmatpush.msra.mxu0 0.0
    %1450 = vmatpush.msra.mxu0 0.0
    %1451 = vmatpush.msra.mxu0 0.0
    %1452 = vmatpush.msra.mxu0 0.0
    %1453 = vmatpush.msra.mxu0 0.0
    %1454 = vmatpush.msra.mxu0 %v364
    %1455 = vmatpush.msra.mxu0 %v362
    %1456 = vmatpush.msra.mxu0 %v360
    %1457 = vmatpush.msra.mxu0 %v358
    %1458 = vmatmul.f32.gmra.mxu0 %v1438
    %v1459 = vpop.f32.mrf.mxu0
    %v1460 = vadd.f32 %v375, %v1459
    %1461 = vmatmul.f32.gmra.mxu0 %v1440
    %v1462 = vpop.f32.mrf.mxu0
    %v1463 = vadd.f32 %v375, %v1462
    %1464 = vdwg.mxu0
    %s1465 = scalar_lea.vmem [#allocation4], 112
    %1466 = vst.msk [vmem:[%s1465] sm:$0xff] %vm146, %v1460
    %1467 = vst.msk [vmem:[%s1465 + $0x8] sm:$0xff] %vm146, %v1463
    %s1468 = scalar_lea.vmem [#allocation3], 112
    %v1469 = vld [vmem:[%s1468] sm:$0xff]
    %v1470 = vld [vmem:[%s1468 + $0x8] sm:$0xff]
    %v1471 = vxor.u32 %v1469, 2147483648
    %v1472 = vxor.u32 %v1470, 2147483648
    %v1473 = vmul.f32 %v1471, 1.442695
    %v1474 = vpow.pop %v1473
    %v1475 = vmul.f32 %v1472, 1.442695
    %v1476 = vpow.pop %v1475
    %v1477 = vadd.f32 %v1474, 1.0
    %v1478 = vadd.f32 %v1476, 1.0
    %v1479 = vrcp.pop %v1477
    %v1480 = vmul.f32 %v1477, %v1479
    %v1481 = vsub.f32 1.0, %v1480
    %v1482 = vmul.f32 %v1479, %v1481
    %v1483 = vadd.f32 %v1479, %v1482
    %vm1484 = vweird.f32 %v1477
    %vm1485 = vweird.f32 %v1479
    %vm1486 = vmor %vm1484, %vm1485
    %v1487 = vsel %vm1486, %v1479, %v1483
    %v1488 = vand.u32 2147483647, %v1477
    %vm1489 = vcmp.eq.f32.partialorder %v1488, 8.507059e+37
    %v1490 = vand.u32 %v1477, 2147483648
    %v1491 = vor.u32 1.1754944e-38, %v1490
    %v1492 = vsel %vm1489, %v1491, %v1487
    %v1493 = vmul.f32 1.0, %v1492
    %v1494 = vrcp.pop %v1478
    %v1495 = vmul.f32 %v1478, %v1494
    %v1496 = vsub.f32 1.0, %v1495
    %v1497 = vmul.f32 %v1494, %v1496
    %v1498 = vadd.f32 %v1494, %v1497
    %vm1499 = vweird.f32 %v1478
    %vm1500 = vweird.f32 %v1494
    %vm1501 = vmor %vm1499, %vm1500
    %v1502 = vsel %vm1501, %v1494, %v1498
    %v1503 = vand.u32 2147483647, %v1478
    %vm1504 = vcmp.eq.f32.partialorder %v1503, 8.507059e+37
    %v1505 = vand.u32 %v1478, 2147483648
    %v1506 = vor.u32 1.1754944e-38, %v1505
    %v1507 = vsel %vm1504, %v1506, %v1502
    %v1508 = vmul.f32 1.0, %v1507
    %v1509 = vtanh.pop %v1469
    %v1510 = vtanh.pop %v1470
    %v1511 = vmul.f32 %v1493, 0.0
    %v1512 = vmul.f32 %v1508, 0.0
    %1515 = vrot.lane.b32.xlu0 %v1509, 64
    %v1516 = vpop.permute.xlu0 %1515
    %1517 = vrot.lane.b32.xlu0 %v1510, 64
    %v1518 = vpop.permute.xlu0 %1517
    %v1521 = vmul.f32 %v1493, %v1516
    %v1522 = vmul.f32 %v1508, %v1518
    %1525 = vrot.lane.b32.xlu0 %v1521, 32
    %v1526 = vpop.permute.xlu0 %1525
    %1527 = vrot.lane.b32.xlu0 %v1522, 32
    %v1528 = vpop.permute.xlu0 %1527
    %v1531 = vadd.f32 %v1511, %v1526
    %v1532 = vadd.f32 %v1512, %v1528
    %v1533 = vtanh.pop %v1531
    %v1534 = vtanh.pop %v1532
    %1537 = vrot.lane.b32.xlu0 %v1533, 64
    %v1538 = vpop.permute.xlu0 %1537
    %1539 = vrot.lane.b32.xlu0 %v1534, 64
    %v1540 = vpop.permute.xlu0 %1539
    %v1543 = vmul.f32 %v1493, %v1538
    %v1544 = vmul.f32 %v1508, %v1540
    %1547 = vrot.lane.b32.xlu0 %v1543, 32
    %v1548 = vpop.permute.xlu0 %1547
    %1549 = vrot.lane.b32.xlu0 %v1544, 32
    %v1550 = vpop.permute.xlu0 %1549
    %v1551 = vsel %vm146, %v1548, 0
    %v1553 = vsel %vm146, %v1550, 0
    %1555 = vmatpush.msra.mxu0 0.0
    %1556 = vmatpush.msra.mxu0 0.0
    %1557 = vmatpush.msra.mxu0 0.0
    %1558 = vmatpush.msra.mxu0 0.0
    %1559 = vmatpush.msra.mxu0 0.0
    %1560 = vmatpush.msra.mxu0 0.0
    %1561 = vmatpush.msra.mxu0 0.0
    %1562 = vmatpush.msra.mxu0 0.0
    %1563 = vmatpush.msra.mxu0 0.0
    %1564 = vmatpush.msra.mxu0 0.0
    %1565 = vmatpush.msra.mxu0 0.0
    %1566 = vmatpush.msra.mxu0 0.0
    %1567 = vmatpush.msra.mxu0 %v371
    %1568 = vmatpush.msra.mxu0 %v369
    %1569 = vmatpush.msra.mxu0 %v367
    %1570 = vmatpush.msra.mxu0 %v365
    %1571 = vmatmul.f32.gmra.mxu0 %v1551
    %v1572 = vpop.f32.mrf.mxu0
    %v1573 = vadd.f32 0.0, %v1572
    %1574 = vmatmul.f32.gmra.mxu0 %v1553
    %v1575 = vpop.f32.mrf.mxu0
    %v1576 = vadd.f32 0.0, %v1575
    %1577 = vdwg.mxu0
    %1578 = vmatpush.msra.mxu0 0.0
    %1579 = vmatpush.msra.mxu0 0.0
    %1580 = vmatpush.msra.mxu0 0.0
    %1581 = vmatpush.msra.mxu0 0.0
    %1582 = vmatpush.msra.mxu0 0.0
    %1583 = vmatpush.msra.mxu0 0.0
    %1584 = vmatpush.msra.mxu0 0.0
    %1585 = vmatpush.msra.mxu0 0.0
    %1586 = vmatpush.msra.mxu0 0.0
    %1587 = vmatpush.msra.mxu0 0.0
    %1588 = vmatpush.msra.mxu0 0.0
    %1589 = vmatpush.msra.mxu0 0.0
    %1590 = vmatpush.msra.mxu0 %v372
    %1591 = vmatpush.msra.mxu0 %v370
    %1592 = vmatpush.msra.mxu0 %v368
    %1593 = vmatpush.msra.mxu0 %v366
    %1594 = vmatmul.f32.gmra.mxu0 %v1551
    %v1595 = vpop.f32.mrf.mxu0
    %v1596 = vadd.f32 0.0, %v1595
    %1597 = vmatmul.f32.gmra.mxu0 %v1553
    %v1598 = vpop.f32.mrf.mxu0
    %v1599 = vadd.f32 0.0, %v1598
    %1600 = vdwg.mxu0
    %v1601 = vld [vmem:[%s1465] sm:$0xff]
    %v1602 = vld [vmem:[%s1465 + $0x8] sm:$0xff]
    %v1603 = vadd.f32 %v1601, %v1596
    %v1604 = vadd.f32 %v1602, %v1599
    %v1605 = vmax.f32 %v1603, 0.0
    %v1606 = vmax.f32 %v1604, 0.0
    %v1607 = vmax.f32 %v1605, 0.0
    %v1608 = vmax.f32 %v1606, 0.0
    %s1609 = scalar_lea.vmem [#allocation3], 96
    %v1610 = vld [vmem:[%s1609] sm:$0xff]
    %v1611 = vld [vmem:[%s1609 + $0x8] sm:$0xff]
    %v1612 = vadd.f32 %v1610, %v1573
    %v1613 = vadd.f32 %v1611, %v1576
    %v1614 = vxor.u32 %v1612, 2147483648
    %v1615 = vxor.u32 %v1613, 2147483648
    %v1616 = vmul.f32 %v1614, 1.442695
    %v1617 = vpow.pop %v1616
    %v1618 = vmul.f32 %v1615, 1.442695
    %v1619 = vpow.pop %v1618
    %v1620 = vadd.f32 %v1617, 1.0
    %v1621 = vadd.f32 %v1619, 1.0
    %v1622 = vrcp.pop %v1620
    %v1623 = vmul.f32 %v1620, %v1622
    %v1624 = vsub.f32 1.0, %v1623
    %v1625 = vmul.f32 %v1622, %v1624
    %v1626 = vadd.f32 %v1622, %v1625
    %vm1627 = vweird.f32 %v1620
    %vm1628 = vweird.f32 %v1622
    %vm1629 = vmor %vm1627, %vm1628
    %v1630 = vsel %vm1629, %v1622, %v1626
    %v1631 = vand.u32 2147483647, %v1620
    %vm1632 = vcmp.eq.f32.partialorder %v1631, 8.507059e+37
    %v1633 = vand.u32 %v1620, 2147483648
    %v1634 = vor.u32 1.1754944e-38, %v1633
    %v1635 = vsel %vm1632, %v1634, %v1630
    %v1636 = vmul.f32 1.0, %v1635
    %v1637 = vrcp.pop %v1621
    %v1638 = vmul.f32 %v1621, %v1637
    %v1639 = vsub.f32 1.0, %v1638
    %v1640 = vmul.f32 %v1637, %v1639
    %v1641 = vadd.f32 %v1637, %v1640
    %vm1642 = vweird.f32 %v1621
    %vm1643 = vweird.f32 %v1637
    %vm1644 = vmor %vm1642, %vm1643
    %v1645 = vsel %vm1644, %v1637, %v1641
    %v1646 = vand.u32 2147483647, %v1621
    %vm1647 = vcmp.eq.f32.partialorder %v1646, 8.507059e+37
    %v1648 = vand.u32 %v1621, 2147483648
    %v1649 = vor.u32 1.1754944e-38, %v1648
    %v1650 = vsel %vm1647, %v1649, %v1645
    %v1651 = vmul.f32 1.0, %v1650
    %v1652 = vtanh.pop %v1612
    %v1653 = vtanh.pop %v1613
    %v1654 = vmul.f32 %v1636, %v1531
    %v1655 = vmul.f32 %v1651, %v1532
    %1658 = vrot.lane.b32.xlu0 %v1652, 64
    %v1659 = vpop.permute.xlu0 %1658
    %1660 = vrot.lane.b32.xlu0 %v1653, 64
    %v1661 = vpop.permute.xlu0 %1660
    %v1664 = vmul.f32 %v1636, %v1659
    %v1665 = vmul.f32 %v1651, %v1661
    %1668 = vrot.lane.b32.xlu0 %v1664, 32
    %v1669 = vpop.permute.xlu0 %1668
    %1670 = vrot.lane.b32.xlu0 %v1665, 32
    %v1671 = vpop.permute.xlu0 %1670
    %v1674 = vadd.f32 %v1654, %v1669
    %v1675 = vadd.f32 %v1655, %v1671
    %v1676 = vtanh.pop %v1674
    %v1677 = vtanh.pop %v1675
    %1680 = vrot.lane.b32.xlu0 %v1676, 64
    %v1681 = vpop.permute.xlu0 %1680
    %1682 = vrot.lane.b32.xlu0 %v1677, 64
    %v1683 = vpop.permute.xlu0 %1682
    %v1686 = vmul.f32 %v1636, %v1681
    %v1687 = vmul.f32 %v1651, %v1683
    %1690 = vrot.lane.b32.xlu0 %v1686, 32
    %v1691 = vpop.permute.xlu0 %1690
    %1692 = vrot.lane.b32.xlu0 %v1687, 32
    %v1693 = vpop.permute.xlu0 %1692
    %v1694 = vsel %vm146, %v1691, 0
    %v1696 = vsel %vm146, %v1693, 0
    %1698 = vmatpush.msra.mxu0 0.0
    %1699 = vmatpush.msra.mxu0 0.0
    %1700 = vmatpush.msra.mxu0 0.0
    %1701 = vmatpush.msra.mxu0 0.0
    %1702 = vmatpush.msra.mxu0 0.0
    %1703 = vmatpush.msra.mxu0 0.0
    %1704 = vmatpush.msra.mxu0 0.0
    %1705 = vmatpush.msra.mxu0 0.0
    %1706 = vmatpush.msra.mxu0 0.0
    %1707 = vmatpush.msra.mxu0 0.0
    %1708 = vmatpush.msra.mxu0 0.0
    %1709 = vmatpush.msra.mxu0 0.0
    %1710 = vmatpush.msra.mxu0 %v371
    %1711 = vmatpush.msra.mxu0 %v369
    %1712 = vmatpush.msra.mxu0 %v367
    %1713 = vmatpush.msra.mxu0 %v365
    %1714 = vmatmul.f32.gmra.mxu0 %v1694
    %v1715 = vpop.f32.mrf.mxu0
    %v1716 = vadd.f32 0.0, %v1715
    %1717 = vmatmul.f32.gmra.mxu0 %v1696
    %v1718 = vpop.f32.mrf.mxu0
    %v1719 = vadd.f32 0.0, %v1718
    %1720 = vdwg.mxu0
    %1721 = vmatpush.msra.mxu0 0.0
    %1722 = vmatpush.msra.mxu0 0.0
    %1723 = vmatpush.msra.mxu0 0.0
    %1724 = vmatpush.msra.mxu0 0.0
    %1725 = vmatpush.msra.mxu0 0.0
    %1726 = vmatpush.msra.mxu0 0.0
    %1727 = vmatpush.msra.mxu0 0.0
    %1728 = vmatpush.msra.mxu0 0.0
    %1729 = vmatpush.msra.mxu0 0.0
    %1730 = vmatpush.msra.mxu0 0.0
    %1731 = vmatpush.msra.mxu0 0.0
    %1732 = vmatpush.msra.mxu0 0.0
    %1733 = vmatpush.msra.mxu0 %v372
    %1734 = vmatpush.msra.mxu0 %v370
    %1735 = vmatpush.msra.mxu0 %v368
    %1736 = vmatpush.msra.mxu0 %v366
    %1737 = vmatmul.f32.gmra.mxu0 %v1694
    %v1738 = vpop.f32.mrf.mxu0
    %v1739 = vadd.f32 0.0, %v1738
    %1740 = vmatmul.f32.gmra.mxu0 %v1696
    %v1741 = vpop.f32.mrf.mxu0
    %v1742 = vadd.f32 0.0, %v1741
    %1743 = vdwg.mxu0
    %v1744 = vld [vmem:[%s1350] sm:$0xff]
    %v1745 = vld [vmem:[%s1350 + $0x8] sm:$0xff]
    %v1746 = vadd.f32 %v1744, %v1739
    %v1747 = vadd.f32 %v1745, %v1742
    %v1748 = vmax.f32 %v1746, 0.0
    %v1749 = vmax.f32 %v1747, 0.0
    %v1750 = vmax.f32 %v1607, %v1748
    %v1751 = vmax.f32 %v1608, %v1749
    %s1752 = scalar_lea.vmem [#allocation3], 80
    %v1753 = vld [vmem:[%s1752] sm:$0xff]
    %v1754 = vld [vmem:[%s1752 + $0x8] sm:$0xff]
    %v1755 = vadd.f32 %v1753, %v1716
    %v1756 = vadd.f32 %v1754, %v1719
    %v1757 = vxor.u32 %v1755, 2147483648
    %v1758 = vxor.u32 %v1756, 2147483648
    %v1759 = vmul.f32 %v1757, 1.442695
    %v1760 = vpow.pop %v1759
    %v1761 = vmul.f32 %v1758, 1.442695
    %v1762 = vpow.pop %v1761
    %v1763 = vadd.f32 %v1760, 1.0
    %v1764 = vadd.f32 %v1762, 1.0
    %v1765 = vrcp.pop %v1763
    %v1766 = vmul.f32 %v1763, %v1765
    %v1767 = vsub.f32 1.0, %v1766
    %v1768 = vmul.f32 %v1765, %v1767
    %v1769 = vadd.f32 %v1765, %v1768
    %vm1770 = vweird.f32 %v1763
    %vm1771 = vweird.f32 %v1765
    %vm1772 = vmor %vm1770, %vm1771
    %v1773 = vsel %vm1772, %v1765, %v1769
    %v1774 = vand.u32 2147483647, %v1763
    %vm1775 = vcmp.eq.f32.partialorder %v1774, 8.507059e+37
    %v1776 = vand.u32 %v1763, 2147483648
    %v1777 = vor.u32 1.1754944e-38, %v1776
    %v1778 = vsel %vm1775, %v1777, %v1773
    %v1779 = vmul.f32 1.0, %v1778
    %v1780 = vrcp.pop %v1764
    %v1781 = vmul.f32 %v1764, %v1780
    %v1782 = vsub.f32 1.0, %v1781
    %v1783 = vmul.f32 %v1780, %v1782
    %v1784 = vadd.f32 %v1780, %v1783
    %vm1785 = vweird.f32 %v1764
    %vm1786 = vweird.f32 %v1780
    %vm1787 = vmor %vm1785, %vm1786
    %v1788 = vsel %vm1787, %v1780, %v1784
    %v1789 = vand.u32 2147483647, %v1764
    %vm1790 = vcmp.eq.f32.partialorder %v1789, 8.507059e+37
    %v1791 = vand.u32 %v1764, 2147483648
    %v1792 = vor.u32 1.1754944e-38, %v1791
    %v1793 = vsel %vm1790, %v1792, %v1788
    %v1794 = vmul.f32 1.0, %v1793
    %v1795 = vtanh.pop %v1755
    %v1796 = vtanh.pop %v1756
    %v1797 = vmul.f32 %v1779, %v1674
    %v1798 = vmul.f32 %v1794, %v1675
    %1801 = vrot.lane.b32.xlu0 %v1795, 64
    %v1802 = vpop.permute.xlu0 %1801
    %1803 = vrot.lane.b32.xlu0 %v1796, 64
    %v1804 = vpop.permute.xlu0 %1803
    %v1807 = vmul.f32 %v1779, %v1802
    %v1808 = vmul.f32 %v1794, %v1804
    %1811 = vrot.lane.b32.xlu0 %v1807, 32
    %v1812 = vpop.permute.xlu0 %1811
    %1813 = vrot.lane.b32.xlu0 %v1808, 32
    %v1814 = vpop.permute.xlu0 %1813
    %v1817 = vadd.f32 %v1797, %v1812
    %v1818 = vadd.f32 %v1798, %v1814
    %v1819 = vtanh.pop %v1817
    %v1820 = vtanh.pop %v1818
    %1823 = vrot.lane.b32.xlu0 %v1819, 64
    %v1824 = vpop.permute.xlu0 %1823
    %1825 = vrot.lane.b32.xlu0 %v1820, 64
    %v1826 = vpop.permute.xlu0 %1825
    %v1829 = vmul.f32 %v1779, %v1824
    %v1830 = vmul.f32 %v1794, %v1826
    %1833 = vrot.lane.b32.xlu0 %v1829, 32
    %v1834 = vpop.permute.xlu0 %1833
    %1835 = vrot.lane.b32.xlu0 %v1830, 32
    %v1836 = vpop.permute.xlu0 %1835
    %v1837 = vsel %vm146, %v1834, 0
    %v1839 = vsel %vm146, %v1836, 0
    %1841 = vmatpush.msra.mxu0 0.0
    %1842 = vmatpush.msra.mxu0 0.0
    %1843 = vmatpush.msra.mxu0 0.0
    %1844 = vmatpush.msra.mxu0 0.0
    %1845 = vmatpush.msra.mxu0 0.0
    %1846 = vmatpush.msra.mxu0 0.0
    %1847 = vmatpush.msra.mxu0 0.0
    %1848 = vmatpush.msra.mxu0 0.0
    %1849 = vmatpush.msra.mxu0 0.0
    %1850 = vmatpush.msra.mxu0 0.0
    %1851 = vmatpush.msra.mxu0 0.0
    %1852 = vmatpush.msra.mxu0 0.0
    %1853 = vmatpush.msra.mxu0 %v371
    %1854 = vmatpush.msra.mxu0 %v369
    %1855 = vmatpush.msra.mxu0 %v367
    %1856 = vmatpush.msra.mxu0 %v365
    %1857 = vmatmul.f32.gmra.mxu0 %v1837
    %v1858 = vpop.f32.mrf.mxu0
    %v1859 = vadd.f32 0.0, %v1858
    %1860 = vmatmul.f32.gmra.mxu0 %v1839
    %v1861 = vpop.f32.mrf.mxu0
    %v1862 = vadd.f32 0.0, %v1861
    %1863 = vdwg.mxu0
    %1864 = vmatpush.msra.mxu0 0.0
    %1865 = vmatpush.msra.mxu0 0.0
    %1866 = vmatpush.msra.mxu0 0.0
    %1867 = vmatpush.msra.mxu0 0.0
    %1868 = vmatpush.msra.mxu0 0.0
    %1869 = vmatpush.msra.mxu0 0.0
    %1870 = vmatpush.msra.mxu0 0.0
    %1871 = vmatpush.msra.mxu0 0.0
    %1872 = vmatpush.msra.mxu0 0.0
    %1873 = vmatpush.msra.mxu0 0.0
    %1874 = vmatpush.msra.mxu0 0.0
    %1875 = vmatpush.msra.mxu0 0.0
    %1876 = vmatpush.msra.mxu0 %v372
    %1877 = vmatpush.msra.mxu0 %v370
    %1878 = vmatpush.msra.mxu0 %v368
    %1879 = vmatpush.msra.mxu0 %v366
    %1880 = vmatmul.f32.gmra.mxu0 %v1837
    %v1881 = vpop.f32.mrf.mxu0
    %v1882 = vadd.f32 0.0, %v1881
    %1883 = vmatmul.f32.gmra.mxu0 %v1839
    %v1884 = vpop.f32.mrf.mxu0
    %v1885 = vadd.f32 0.0, %v1884
    %1886 = vdwg.mxu0
    %v1887 = vld [vmem:[%s1210] sm:$0xff]
    %v1888 = vld [vmem:[%s1210 + $0x8] sm:$0xff]
    %v1889 = vadd.f32 %v1887, %v1882
    %v1890 = vadd.f32 %v1888, %v1885
    %v1891 = vmax.f32 %v1889, 0.0
    %v1892 = vmax.f32 %v1890, 0.0
    %v1893 = vmax.f32 %v1750, %v1891
    %v1894 = vmax.f32 %v1751, %v1892
    %s1895 = scalar_lea.vmem [#allocation3], 64
    %v1896 = vld [vmem:[%s1895] sm:$0xff]
    %v1897 = vld [vmem:[%s1895 + $0x8] sm:$0xff]
    %v1898 = vadd.f32 %v1896, %v1859
    %v1899 = vadd.f32 %v1897, %v1862
    %v1900 = vxor.u32 %v1898, 2147483648
    %v1901 = vxor.u32 %v1899, 2147483648
    %v1902 = vmul.f32 %v1900, 1.442695
    %v1903 = vpow.pop %v1902
    %v1904 = vmul.f32 %v1901, 1.442695
    %v1905 = vpow.pop %v1904
    %v1906 = vadd.f32 %v1903, 1.0
    %v1907 = vadd.f32 %v1905, 1.0
    %v1908 = vrcp.pop %v1906
    %v1909 = vmul.f32 %v1906, %v1908
    %v1910 = vsub.f32 1.0, %v1909
    %v1911 = vmul.f32 %v1908, %v1910
    %v1912 = vadd.f32 %v1908, %v1911
    %vm1913 = vweird.f32 %v1906
    %vm1914 = vweird.f32 %v1908
    %vm1915 = vmor %vm1913, %vm1914
    %v1916 = vsel %vm1915, %v1908, %v1912
    %v1917 = vand.u32 2147483647, %v1906
    %vm1918 = vcmp.eq.f32.partialorder %v1917, 8.507059e+37
    %v1919 = vand.u32 %v1906, 2147483648
    %v1920 = vor.u32 1.1754944e-38, %v1919
    %v1921 = vsel %vm1918, %v1920, %v1916
    %v1922 = vmul.f32 1.0, %v1921
    %v1923 = vrcp.pop %v1907
    %v1924 = vmul.f32 %v1907, %v1923
    %v1925 = vsub.f32 1.0, %v1924
    %v1926 = vmul.f32 %v1923, %v1925
    %v1927 = vadd.f32 %v1923, %v1926
    %vm1928 = vweird.f32 %v1907
    %vm1929 = vweird.f32 %v1923
    %vm1930 = vmor %vm1928, %vm1929
    %v1931 = vsel %vm1930, %v1923, %v1927
    %v1932 = vand.u32 2147483647, %v1907
    %vm1933 = vcmp.eq.f32.partialorder %v1932, 8.507059e+37
    %v1934 = vand.u32 %v1907, 2147483648
    %v1935 = vor.u32 1.1754944e-38, %v1934
    %v1936 = vsel %vm1933, %v1935, %v1931
    %v1937 = vmul.f32 1.0, %v1936
    %v1938 = vtanh.pop %v1898
    %v1939 = vtanh.pop %v1899
    %v1940 = vmul.f32 %v1922, %v1817
    %v1941 = vmul.f32 %v1937, %v1818
    %1944 = vrot.lane.b32.xlu0 %v1938, 64
    %v1945 = vpop.permute.xlu0 %1944
    %1946 = vrot.lane.b32.xlu0 %v1939, 64
    %v1947 = vpop.permute.xlu0 %1946
    %v1950 = vmul.f32 %v1922, %v1945
    %v1951 = vmul.f32 %v1937, %v1947
    %1954 = vrot.lane.b32.xlu0 %v1950, 32
    %v1955 = vpop.permute.xlu0 %1954
    %1956 = vrot.lane.b32.xlu0 %v1951, 32
    %v1957 = vpop.permute.xlu0 %1956
    %v1960 = vadd.f32 %v1940, %v1955
    %v1961 = vadd.f32 %v1941, %v1957
    %v1962 = vtanh.pop %v1960
    %v1963 = vtanh.pop %v1961
    %1966 = vrot.lane.b32.xlu0 %v1962, 64
    %v1967 = vpop.permute.xlu0 %1966
    %1968 = vrot.lane.b32.xlu0 %v1963, 64
    %v1969 = vpop.permute.xlu0 %1968
    %v1972 = vmul.f32 %v1922, %v1967
    %v1973 = vmul.f32 %v1937, %v1969
    %1976 = vrot.lane.b32.xlu0 %v1972, 32
    %v1977 = vpop.permute.xlu0 %1976
    %1978 = vrot.lane.b32.xlu0 %v1973, 32
    %v1979 = vpop.permute.xlu0 %1978
    %v1980 = vsel %vm146, %v1977, 0
    %v1982 = vsel %vm146, %v1979, 0
    %1984 = vmatpush.msra.mxu0 0.0
    %1985 = vmatpush.msra.mxu0 0.0
    %1986 = vmatpush.msra.mxu0 0.0
    %1987 = vmatpush.msra.mxu0 0.0
    %1988 = vmatpush.msra.mxu0 0.0
    %1989 = vmatpush.msra.mxu0 0.0
    %1990 = vmatpush.msra.mxu0 0.0
    %1991 = vmatpush.msra.mxu0 0.0
    %1992 = vmatpush.msra.mxu0 0.0
    %1993 = vmatpush.msra.mxu0 0.0
    %1994 = vmatpush.msra.mxu0 0.0
    %1995 = vmatpush.msra.mxu0 0.0
    %1996 = vmatpush.msra.mxu0 %v371
    %1997 = vmatpush.msra.mxu0 %v369
    %1998 = vmatpush.msra.mxu0 %v367
    %1999 = vmatpush.msra.mxu0 %v365
    %2000 = vmatmul.f32.gmra.mxu0 %v1980
    %v2001 = vpop.f32.mrf.mxu0
    %v2002 = vadd.f32 0.0, %v2001
    %2003 = vmatmul.f32.gmra.mxu0 %v1982
    %v2004 = vpop.f32.mrf.mxu0
    %v2005 = vadd.f32 0.0, %v2004
    %2006 = vdwg.mxu0
    %2007 = vmatpush.msra.mxu0 0.0
    %2008 = vmatpush.msra.mxu0 0.0
    %2009 = vmatpush.msra.mxu0 0.0
    %2010 = vmatpush.msra.mxu0 0.0
    %2011 = vmatpush.msra.mxu0 0.0
    %2012 = vmatpush.msra.mxu0 0.0
    %2013 = vmatpush.msra.mxu0 0.0
    %2014 = vmatpush.msra.mxu0 0.0
    %2015 = vmatpush.msra.mxu0 0.0
    %2016 = vmatpush.msra.mxu0 0.0
    %2017 = vmatpush.msra.mxu0 0.0
    %2018 = vmatpush.msra.mxu0 0.0
    %2019 = vmatpush.msra.mxu0 %v372
    %2020 = vmatpush.msra.mxu0 %v370
    %2021 = vmatpush.msra.mxu0 %v368
    %2022 = vmatpush.msra.mxu0 %v366
    %2023 = vmatmul.f32.gmra.mxu0 %v1980
    %v2024 = vpop.f32.mrf.mxu0
    %v2025 = vadd.f32 0.0, %v2024
    %2026 = vmatmul.f32.gmra.mxu0 %v1982
    %v2027 = vpop.f32.mrf.mxu0
    %v2028 = vadd.f32 0.0, %v2027
    %2029 = vdwg.mxu0
    %v2030 = vld [vmem:[%s1070] sm:$0xff]
    %v2031 = vld [vmem:[%s1070 + $0x8] sm:$0xff]
    %v2032 = vadd.f32 %v2030, %v2025
    %v2033 = vadd.f32 %v2031, %v2028
    %v2034 = vmax.f32 %v2032, 0.0
    %v2035 = vmax.f32 %v2033, 0.0
    %v2036 = vmax.f32 %v1893, %v2034
    %v2037 = vmax.f32 %v1894, %v2035
    %s2038 = scalar_lea.vmem [#allocation3], 48
    %v2039 = vld [vmem:[%s2038] sm:$0xff]
    %v2040 = vld [vmem:[%s2038 + $0x8] sm:$0xff]
    %v2041 = vadd.f32 %v2039, %v2002
    %v2042 = vadd.f32 %v2040, %v2005
    %v2043 = vxor.u32 %v2041, 2147483648
    %v2044 = vxor.u32 %v2042, 2147483648
    %v2045 = vmul.f32 %v2043, 1.442695
    %v2046 = vpow.pop %v2045
    %v2047 = vmul.f32 %v2044, 1.442695
    %v2048 = vpow.pop %v2047
    %v2049 = vadd.f32 %v2046, 1.0
    %v2050 = vadd.f32 %v2048, 1.0
    %v2051 = vrcp.pop %v2049
    %v2052 = vmul.f32 %v2049, %v2051
    %v2053 = vsub.f32 1.0, %v2052
    %v2054 = vmul.f32 %v2051, %v2053
    %v2055 = vadd.f32 %v2051, %v2054
    %vm2056 = vweird.f32 %v2049
    %vm2057 = vweird.f32 %v2051
    %vm2058 = vmor %vm2056, %vm2057
    %v2059 = vsel %vm2058, %v2051, %v2055
    %v2060 = vand.u32 2147483647, %v2049
    %vm2061 = vcmp.eq.f32.partialorder %v2060, 8.507059e+37
    %v2062 = vand.u32 %v2049, 2147483648
    %v2063 = vor.u32 1.1754944e-38, %v2062
    %v2064 = vsel %vm2061, %v2063, %v2059
    %v2065 = vmul.f32 1.0, %v2064
    %v2066 = vrcp.pop %v2050
    %v2067 = vmul.f32 %v2050, %v2066
    %v2068 = vsub.f32 1.0, %v2067
    %v2069 = vmul.f32 %v2066, %v2068
    %v2070 = vadd.f32 %v2066, %v2069
    %vm2071 = vweird.f32 %v2050
    %vm2072 = vweird.f32 %v2066
    %vm2073 = vmor %vm2071, %vm2072
    %v2074 = vsel %vm2073, %v2066, %v2070
    %v2075 = vand.u32 2147483647, %v2050
    %vm2076 = vcmp.eq.f32.partialorder %v2075, 8.507059e+37
    %v2077 = vand.u32 %v2050, 2147483648
    %v2078 = vor.u32 1.1754944e-38, %v2077
    %v2079 = vsel %vm2076, %v2078, %v2074
    %v2080 = vmul.f32 1.0, %v2079
    %v2081 = vtanh.pop %v2041
    %v2082 = vtanh.pop %v2042
    %v2083 = vmul.f32 %v2065, %v1960
    %v2084 = vmul.f32 %v2080, %v1961
    %2087 = vrot.lane.b32.xlu0 %v2081, 64
    %v2088 = vpop.permute.xlu0 %2087
    %2089 = vrot.lane.b32.xlu0 %v2082, 64
    %v2090 = vpop.permute.xlu0 %2089
    %v2093 = vmul.f32 %v2065, %v2088
    %v2094 = vmul.f32 %v2080, %v2090
    %2097 = vrot.lane.b32.xlu0 %v2093, 32
    %v2098 = vpop.permute.xlu0 %2097
    %2099 = vrot.lane.b32.xlu0 %v2094, 32
    %v2100 = vpop.permute.xlu0 %2099
    %v2103 = vadd.f32 %v2083, %v2098
    %v2104 = vadd.f32 %v2084, %v2100
    %v2105 = vtanh.pop %v2103
    %v2106 = vtanh.pop %v2104
    %2109 = vrot.lane.b32.xlu0 %v2105, 64
    %v2110 = vpop.permute.xlu0 %2109
    %2111 = vrot.lane.b32.xlu0 %v2106, 64
    %v2112 = vpop.permute.xlu0 %2111
    %v2115 = vmul.f32 %v2065, %v2110
    %v2116 = vmul.f32 %v2080, %v2112
    %2119 = vrot.lane.b32.xlu0 %v2115, 32
    %v2120 = vpop.permute.xlu0 %2119
    %2121 = vrot.lane.b32.xlu0 %v2116, 32
    %v2122 = vpop.permute.xlu0 %2121
    %v2123 = vsel %vm146, %v2120, 0
    %v2125 = vsel %vm146, %v2122, 0
    %2127 = vmatpush.msra.mxu0 0.0
    %2128 = vmatpush.msra.mxu0 0.0
    %2129 = vmatpush.msra.mxu0 0.0
    %2130 = vmatpush.msra.mxu0 0.0
    %2131 = vmatpush.msra.mxu0 0.0
    %2132 = vmatpush.msra.mxu0 0.0
    %2133 = vmatpush.msra.mxu0 0.0
    %2134 = vmatpush.msra.mxu0 0.0
    %2135 = vmatpush.msra.mxu0 0.0
    %2136 = vmatpush.msra.mxu0 0.0
    %2137 = vmatpush.msra.mxu0 0.0
    %2138 = vmatpush.msra.mxu0 0.0
    %2139 = vmatpush.msra.mxu0 %v371
    %2140 = vmatpush.msra.mxu0 %v369
    %2141 = vmatpush.msra.mxu0 %v367
    %2142 = vmatpush.msra.mxu0 %v365
    %2143 = vmatmul.f32.gmra.mxu0 %v2123
    %v2144 = vpop.f32.mrf.mxu0
    %v2145 = vadd.f32 0.0, %v2144
    %2146 = vmatmul.f32.gmra.mxu0 %v2125
    %v2147 = vpop.f32.mrf.mxu0
    %v2148 = vadd.f32 0.0, %v2147
    %2149 = vdwg.mxu0
    %2150 = vmatpush.msra.mxu0 0.0
    %2151 = vmatpush.msra.mxu0 0.0
    %2152 = vmatpush.msra.mxu0 0.0
    %2153 = vmatpush.msra.mxu0 0.0
    %2154 = vmatpush.msra.mxu0 0.0
    %2155 = vmatpush.msra.mxu0 0.0
    %2156 = vmatpush.msra.mxu0 0.0
    %2157 = vmatpush.msra.mxu0 0.0
    %2158 = vmatpush.msra.mxu0 0.0
    %2159 = vmatpush.msra.mxu0 0.0
    %2160 = vmatpush.msra.mxu0 0.0
    %2161 = vmatpush.msra.mxu0 0.0
    %2162 = vmatpush.msra.mxu0 %v372
    %2163 = vmatpush.msra.mxu0 %v370
    %2164 = vmatpush.msra.mxu0 %v368
    %2165 = vmatpush.msra.mxu0 %v366
    %2166 = vmatmul.f32.gmra.mxu0 %v2123
    %v2167 = vpop.f32.mrf.mxu0
    %v2168 = vadd.f32 0.0, %v2167
    %2169 = vmatmul.f32.gmra.mxu0 %v2125
    %v2170 = vpop.f32.mrf.mxu0
    %v2171 = vadd.f32 0.0, %v2170
    %2172 = vdwg.mxu0
    %v2173 = vld [vmem:[%s930] sm:$0xff]
    %v2174 = vld [vmem:[%s930 + $0x8] sm:$0xff]
    %v2175 = vadd.f32 %v2173, %v2168
    %v2176 = vadd.f32 %v2174, %v2171
    %v2177 = vmax.f32 %v2175, 0.0
    %v2178 = vmax.f32 %v2176, 0.0
    %v2179 = vmax.f32 %v2036, %v2177
    %v2180 = vmax.f32 %v2037, %v2178
    %s2181 = scalar_lea.vmem [#allocation3], 32
    %v2182 = vld [vmem:[%s2181] sm:$0xff]
    %v2183 = vld [vmem:[%s2181 + $0x8] sm:$0xff]
    %v2184 = vadd.f32 %v2182, %v2145
    %v2185 = vadd.f32 %v2183, %v2148
    %v2186 = vxor.u32 %v2184, 2147483648
    %v2187 = vxor.u32 %v2185, 2147483648
    %v2188 = vmul.f32 %v2186, 1.442695
    %v2189 = vpow.pop %v2188
    %v2190 = vmul.f32 %v2187, 1.442695
    %v2191 = vpow.pop %v2190
    %v2192 = vadd.f32 %v2189, 1.0
    %v2193 = vadd.f32 %v2191, 1.0
    %v2194 = vrcp.pop %v2192
    %v2195 = vmul.f32 %v2192, %v2194
    %v2196 = vsub.f32 1.0, %v2195
    %v2197 = vmul.f32 %v2194, %v2196
    %v2198 = vadd.f32 %v2194, %v2197
    %vm2199 = vweird.f32 %v2192
    %vm2200 = vweird.f32 %v2194
    %vm2201 = vmor %vm2199, %vm2200
    %v2202 = vsel %vm2201, %v2194, %v2198
    %v2203 = vand.u32 2147483647, %v2192
    %vm2204 = vcmp.eq.f32.partialorder %v2203, 8.507059e+37
    %v2205 = vand.u32 %v2192, 2147483648
    %v2206 = vor.u32 1.1754944e-38, %v2205
    %v2207 = vsel %vm2204, %v2206, %v2202
    %v2208 = vmul.f32 1.0, %v2207
    %v2209 = vrcp.pop %v2193
    %v2210 = vmul.f32 %v2193, %v2209
    %v2211 = vsub.f32 1.0, %v2210
    %v2212 = vmul.f32 %v2209, %v2211
    %v2213 = vadd.f32 %v2209, %v2212
    %vm2214 = vweird.f32 %v2193
    %vm2215 = vweird.f32 %v2209
    %vm2216 = vmor %vm2214, %vm2215
    %v2217 = vsel %vm2216, %v2209, %v2213
    %v2218 = vand.u32 2147483647, %v2193
    %vm2219 = vcmp.eq.f32.partialorder %v2218, 8.507059e+37
    %v2220 = vand.u32 %v2193, 2147483648
    %v2221 = vor.u32 1.1754944e-38, %v2220
    %v2222 = vsel %vm2219, %v2221, %v2217
    %v2223 = vmul.f32 1.0, %v2222
    %v2224 = vtanh.pop %v2184
    %v2225 = vtanh.pop %v2185
    %v2226 = vmul.f32 %v2208, %v2103
    %v2227 = vmul.f32 %v2223, %v2104
    %2230 = vrot.lane.b32.xlu0 %v2224, 64
    %v2231 = vpop.permute.xlu0 %2230
    %2232 = vrot.lane.b32.xlu0 %v2225, 64
    %v2233 = vpop.permute.xlu0 %2232
    %v2236 = vmul.f32 %v2208, %v2231
    %v2237 = vmul.f32 %v2223, %v2233
    %2240 = vrot.lane.b32.xlu0 %v2236, 32
    %v2241 = vpop.permute.xlu0 %2240
    %2242 = vrot.lane.b32.xlu0 %v2237, 32
    %v2243 = vpop.permute.xlu0 %2242
    %v2246 = vadd.f32 %v2226, %v2241
    %v2247 = vadd.f32 %v2227, %v2243
    %v2248 = vtanh.pop %v2246
    %v2249 = vtanh.pop %v2247
    %2252 = vrot.lane.b32.xlu0 %v2248, 64
    %v2253 = vpop.permute.xlu0 %2252
    %2254 = vrot.lane.b32.xlu0 %v2249, 64
    %v2255 = vpop.permute.xlu0 %2254
    %v2258 = vmul.f32 %v2208, %v2253
    %v2259 = vmul.f32 %v2223, %v2255
    %2262 = vrot.lane.b32.xlu0 %v2258, 32
    %v2263 = vpop.permute.xlu0 %2262
    %2264 = vrot.lane.b32.xlu0 %v2259, 32
    %v2265 = vpop.permute.xlu0 %2264
    %v2266 = vsel %vm146, %v2263, 0
    %v2268 = vsel %vm146, %v2265, 0
    %2270 = vmatpush.msra.mxu0 0.0
    %2271 = vmatpush.msra.mxu0 0.0
    %2272 = vmatpush.msra.mxu0 0.0
    %2273 = vmatpush.msra.mxu0 0.0
    %2274 = vmatpush.msra.mxu0 0.0
    %2275 = vmatpush.msra.mxu0 0.0
    %2276 = vmatpush.msra.mxu0 0.0
    %2277 = vmatpush.msra.mxu0 0.0
    %2278 = vmatpush.msra.mxu0 0.0
    %2279 = vmatpush.msra.mxu0 0.0
    %2280 = vmatpush.msra.mxu0 0.0
    %2281 = vmatpush.msra.mxu0 0.0
    %2282 = vmatpush.msra.mxu0 %v371
    %2283 = vmatpush.msra.mxu0 %v369
    %2284 = vmatpush.msra.mxu0 %v367
    %2285 = vmatpush.msra.mxu0 %v365
    %2286 = vmatmul.f32.gmra.mxu0 %v2266
    %v2287 = vpop.f32.mrf.mxu0
    %v2288 = vadd.f32 0.0, %v2287
    %2289 = vmatmul.f32.gmra.mxu0 %v2268
    %v2290 = vpop.f32.mrf.mxu0
    %v2291 = vadd.f32 0.0, %v2290
    %2292 = vdwg.mxu0
    %2293 = vmatpush.msra.mxu0 0.0
    %2294 = vmatpush.msra.mxu0 0.0
    %2295 = vmatpush.msra.mxu0 0.0
    %2296 = vmatpush.msra.mxu0 0.0
    %2297 = vmatpush.msra.mxu0 0.0
    %2298 = vmatpush.msra.mxu0 0.0
    %2299 = vmatpush.msra.mxu0 0.0
    %2300 = vmatpush.msra.mxu0 0.0
    %2301 = vmatpush.msra.mxu0 0.0
    %2302 = vmatpush.msra.mxu0 0.0
    %2303 = vmatpush.msra.mxu0 0.0
    %2304 = vmatpush.msra.mxu0 0.0
    %2305 = vmatpush.msra.mxu0 %v372
    %2306 = vmatpush.msra.mxu0 %v370
    %2307 = vmatpush.msra.mxu0 %v368
    %2308 = vmatpush.msra.mxu0 %v366
    %2309 = vmatmul.f32.gmra.mxu0 %v2266
    %v2310 = vpop.f32.mrf.mxu0
    %v2311 = vadd.f32 0.0, %v2310
    %2312 = vmatmul.f32.gmra.mxu0 %v2268
    %v2313 = vpop.f32.mrf.mxu0
    %v2314 = vadd.f32 0.0, %v2313
    %2315 = vdwg.mxu0
    %v2316 = vld [vmem:[%s790] sm:$0xff]
    %v2317 = vld [vmem:[%s790 + $0x8] sm:$0xff]
    %v2318 = vadd.f32 %v2316, %v2311
    %v2319 = vadd.f32 %v2317, %v2314
    %v2320 = vmax.f32 %v2318, 0.0
    %v2321 = vmax.f32 %v2319, 0.0
    %v2322 = vmax.f32 %v2179, %v2320
    %v2323 = vmax.f32 %v2180, %v2321
    %s2324 = scalar_lea.vmem [#allocation3], 16
    %v2325 = vld [vmem:[%s2324] sm:$0xff]
    %v2326 = vld [vmem:[%s2324 + $0x8] sm:$0xff]
    %v2327 = vadd.f32 %v2325, %v2288
    %v2328 = vadd.f32 %v2326, %v2291
    %v2329 = vxor.u32 %v2327, 2147483648
    %v2330 = vxor.u32 %v2328, 2147483648
    %v2331 = vmul.f32 %v2329, 1.442695
    %v2332 = vpow.pop %v2331
    %v2333 = vmul.f32 %v2330, 1.442695
    %v2334 = vpow.pop %v2333
    %v2335 = vadd.f32 %v2332, 1.0
    %v2336 = vadd.f32 %v2334, 1.0
    %v2337 = vrcp.pop %v2335
    %v2338 = vmul.f32 %v2335, %v2337
    %v2339 = vsub.f32 1.0, %v2338
    %v2340 = vmul.f32 %v2337, %v2339
    %v2341 = vadd.f32 %v2337, %v2340
    %vm2342 = vweird.f32 %v2335
    %vm2343 = vweird.f32 %v2337
    %vm2344 = vmor %vm2342, %vm2343
    %v2345 = vsel %vm2344, %v2337, %v2341
    %v2346 = vand.u32 2147483647, %v2335
    %vm2347 = vcmp.eq.f32.partialorder %v2346, 8.507059e+37
    %v2348 = vand.u32 %v2335, 2147483648
    %v2349 = vor.u32 1.1754944e-38, %v2348
    %v2350 = vsel %vm2347, %v2349, %v2345
    %v2351 = vmul.f32 1.0, %v2350
    %v2352 = vrcp.pop %v2336
    %v2353 = vmul.f32 %v2336, %v2352
    %v2354 = vsub.f32 1.0, %v2353
    %v2355 = vmul.f32 %v2352, %v2354
    %v2356 = vadd.f32 %v2352, %v2355
    %vm2357 = vweird.f32 %v2336
    %vm2358 = vweird.f32 %v2352
    %vm2359 = vmor %vm2357, %vm2358
    %v2360 = vsel %vm2359, %v2352, %v2356
    %v2361 = vand.u32 2147483647, %v2336
    %vm2362 = vcmp.eq.f32.partialorder %v2361, 8.507059e+37
    %v2363 = vand.u32 %v2336, 2147483648
    %v2364 = vor.u32 1.1754944e-38, %v2363
    %v2365 = vsel %vm2362, %v2364, %v2360
    %v2366 = vmul.f32 1.0, %v2365
    %v2367 = vtanh.pop %v2327
    %v2368 = vtanh.pop %v2328
    %v2369 = vmul.f32 %v2351, %v2246
    %v2370 = vmul.f32 %v2366, %v2247
    %2373 = vrot.lane.b32.xlu0 %v2367, 64
    %v2374 = vpop.permute.xlu0 %2373
    %2375 = vrot.lane.b32.xlu0 %v2368, 64
    %v2376 = vpop.permute.xlu0 %2375
    %v2379 = vmul.f32 %v2351, %v2374
    %v2380 = vmul.f32 %v2366, %v2376
    %2383 = vrot.lane.b32.xlu0 %v2379, 32
    %v2384 = vpop.permute.xlu0 %2383
    %2385 = vrot.lane.b32.xlu0 %v2380, 32
    %v2386 = vpop.permute.xlu0 %2385
    %v2389 = vadd.f32 %v2369, %v2384
    %v2390 = vadd.f32 %v2370, %v2386
    %v2391 = vtanh.pop %v2389
    %v2392 = vtanh.pop %v2390
    %2395 = vrot.lane.b32.xlu0 %v2391, 64
    %v2396 = vpop.permute.xlu0 %2395
    %2397 = vrot.lane.b32.xlu0 %v2392, 64
    %v2398 = vpop.permute.xlu0 %2397
    %v2401 = vmul.f32 %v2351, %v2396
    %v2402 = vmul.f32 %v2366, %v2398
    %2405 = vrot.lane.b32.xlu0 %v2401, 32
    %v2406 = vpop.permute.xlu0 %2405
    %2407 = vrot.lane.b32.xlu0 %v2402, 32
    %v2408 = vpop.permute.xlu0 %2407
    %v2409 = vsel %vm146, %v2406, 0
    %v2411 = vsel %vm146, %v2408, 0
    %2413 = vmatpush.msra.mxu0 0.0
    %2414 = vmatpush.msra.mxu0 0.0
    %2415 = vmatpush.msra.mxu0 0.0
    %2416 = vmatpush.msra.mxu0 0.0
    %2417 = vmatpush.msra.mxu0 0.0
    %2418 = vmatpush.msra.mxu0 0.0
    %2419 = vmatpush.msra.mxu0 0.0
    %2420 = vmatpush.msra.mxu0 0.0
    %2421 = vmatpush.msra.mxu0 0.0
    %2422 = vmatpush.msra.mxu0 0.0
    %2423 = vmatpush.msra.mxu0 0.0
    %2424 = vmatpush.msra.mxu0 0.0
    %2425 = vmatpush.msra.mxu0 %v371
    %2426 = vmatpush.msra.mxu0 %v369
    %2427 = vmatpush.msra.mxu0 %v367
    %2428 = vmatpush.msra.mxu0 %v365
    %2429 = vmatmul.f32.gmra.mxu0 %v2409
    %v2430 = vpop.f32.mrf.mxu0
    %v2431 = vadd.f32 0.0, %v2430
    %2432 = vmatmul.f32.gmra.mxu0 %v2411
    %v2433 = vpop.f32.mrf.mxu0
    %v2434 = vadd.f32 0.0, %v2433
    %2435 = vdwg.mxu0
    %2436 = vmatpush.msra.mxu0 0.0
    %2437 = vmatpush.msra.mxu0 0.0
    %2438 = vmatpush.msra.mxu0 0.0
    %2439 = vmatpush.msra.mxu0 0.0
    %2440 = vmatpush.msra.mxu0 0.0
    %2441 = vmatpush.msra.mxu0 0.0
    %2442 = vmatpush.msra.mxu0 0.0
    %2443 = vmatpush.msra.mxu0 0.0
    %2444 = vmatpush.msra.mxu0 0.0
    %2445 = vmatpush.msra.mxu0 0.0
    %2446 = vmatpush.msra.mxu0 0.0
    %2447 = vmatpush.msra.mxu0 0.0
    %2448 = vmatpush.msra.mxu0 %v372
    %2449 = vmatpush.msra.mxu0 %v370
    %2450 = vmatpush.msra.mxu0 %v368
    %2451 = vmatpush.msra.mxu0 %v366
    %2452 = vmatmul.f32.gmra.mxu0 %v2409
    %v2453 = vpop.f32.mrf.mxu0
    %v2454 = vadd.f32 0.0, %v2453
    %2455 = vmatmul.f32.gmra.mxu0 %v2411
    %v2456 = vpop.f32.mrf.mxu0
    %v2457 = vadd.f32 0.0, %v2456
    %2458 = vdwg.mxu0
    %v2459 = vld [vmem:[%s650] sm:$0xff]
    %v2460 = vld [vmem:[%s650 + $0x8] sm:$0xff]
    %v2461 = vadd.f32 %v2459, %v2454
    %v2462 = vadd.f32 %v2460, %v2457
    %v2463 = vmax.f32 %v2461, 0.0
    %v2464 = vmax.f32 %v2462, 0.0
    %v2465 = vmax.f32 %v2322, %v2463
    %v2466 = vmax.f32 %v2323, %v2464
    %v2467 = vld [vmem:[#allocation3] sm:$0xff]
    %v2468 = vld [vmem:[#allocation3 + $0x8] sm:$0xff]
    %v2469 = vadd.f32 %v2467, %v2431
    %v2470 = vadd.f32 %v2468, %v2434
    %v2471 = vxor.u32 %v2469, 2147483648
    %v2472 = vxor.u32 %v2470, 2147483648
    %v2473 = vmul.f32 %v2471, 1.442695
    %v2474 = vpow.pop %v2473
    %v2475 = vmul.f32 %v2472, 1.442695
    %v2476 = vpow.pop %v2475
    %v2477 = vadd.f32 %v2474, 1.0
    %v2478 = vadd.f32 %v2476, 1.0
    %v2479 = vrcp.pop %v2477
    %v2480 = vmul.f32 %v2477, %v2479
    %v2481 = vsub.f32 1.0, %v2480
    %v2482 = vmul.f32 %v2479, %v2481
    %v2483 = vadd.f32 %v2479, %v2482
    %vm2484 = vweird.f32 %v2477
    %vm2485 = vweird.f32 %v2479
    %vm2486 = vmor %vm2484, %vm2485
    %v2487 = vsel %vm2486, %v2479, %v2483
    %v2488 = vand.u32 2147483647, %v2477
    %vm2489 = vcmp.eq.f32.partialorder %v2488, 8.507059e+37
    %v2490 = vand.u32 %v2477, 2147483648
    %v2491 = vor.u32 1.1754944e-38, %v2490
    %v2492 = vsel %vm2489, %v2491, %v2487
    %v2493 = vmul.f32 1.0, %v2492
    %v2494 = vrcp.pop %v2478
    %v2495 = vmul.f32 %v2478, %v2494
    %v2496 = vsub.f32 1.0, %v2495
    %v2497 = vmul.f32 %v2494, %v2496
    %v2498 = vadd.f32 %v2494, %v2497
    %vm2499 = vweird.f32 %v2478
    %vm2500 = vweird.f32 %v2494
    %vm2501 = vmor %vm2499, %vm2500
    %v2502 = vsel %vm2501, %v2494, %v2498
    %v2503 = vand.u32 2147483647, %v2478
    %vm2504 = vcmp.eq.f32.partialorder %v2503, 8.507059e+37
    %v2505 = vand.u32 %v2478, 2147483648
    %v2506 = vor.u32 1.1754944e-38, %v2505
    %v2507 = vsel %vm2504, %v2506, %v2502
    %v2508 = vmul.f32 1.0, %v2507
    %v2509 = vtanh.pop %v2469
    %v2510 = vtanh.pop %v2470
    %v2511 = vmul.f32 %v2493, %v2389
    %v2512 = vmul.f32 %v2508, %v2390
    %2515 = vrot.lane.b32.xlu0 %v2509, 64
    %v2516 = vpop.permute.xlu0 %2515
    %2517 = vrot.lane.b32.xlu0 %v2510, 64
    %v2518 = vpop.permute.xlu0 %2517
    %v2521 = vmul.f32 %v2493, %v2516
    %v2522 = vmul.f32 %v2508, %v2518
    %2525 = vrot.lane.b32.xlu0 %v2521, 32
    %v2526 = vpop.permute.xlu0 %2525
    %2527 = vrot.lane.b32.xlu0 %v2522, 32
    %v2528 = vpop.permute.xlu0 %2527
    %v2531 = vadd.f32 %v2511, %v2526
    %v2532 = vadd.f32 %v2512, %v2528
    %v2533 = vtanh.pop %v2531
    %v2534 = vtanh.pop %v2532
    %2537 = vrot.lane.b32.xlu0 %v2533, 64
    %v2538 = vpop.permute.xlu0 %2537
    %2539 = vrot.lane.b32.xlu0 %v2534, 64
    %v2540 = vpop.permute.xlu0 %2539
    %v2543 = vmul.f32 %v2493, %v2538
    %v2544 = vmul.f32 %v2508, %v2540
    %v2545 = vld [vmem:[#allocation4] sm:$0xff]
    %v2546 = vld [vmem:[#allocation4 + $0x8] sm:$0xff]
    %2549 = vrot.lane.b32.xlu0 %v2543, 32
    %v2550 = vpop.permute.xlu0 %2549
    %2551 = vrot.lane.b32.xlu0 %v2544, 32
    %v2552 = vpop.permute.xlu0 %2551
    %v2553 = vsel %vm146, %v2550, 0
    %v2555 = vsel %vm146, %v2552, 0
    %2557 = vmatpush.msra.mxu0 0.0
    %2558 = vmatpush.msra.mxu0 0.0
    %2559 = vmatpush.msra.mxu0 0.0
    %2560 = vmatpush.msra.mxu0 0.0
    %2561 = vmatpush.msra.mxu0 0.0
    %2562 = vmatpush.msra.mxu0 0.0
    %2563 = vmatpush.msra.mxu0 0.0
    %2564 = vmatpush.msra.mxu0 0.0
    %2565 = vmatpush.msra.mxu0 0.0
    %2566 = vmatpush.msra.mxu0 0.0
    %2567 = vmatpush.msra.mxu0 0.0
    %2568 = vmatpush.msra.mxu0 0.0
    %2569 = vmatpush.msra.mxu0 %v372
    %2570 = vmatpush.msra.mxu0 %v370
    %2571 = vmatpush.msra.mxu0 %v368
    %2572 = vmatpush.msra.mxu0 %v366
    %2573 = vmatmul.f32.gmra.mxu0 %v2553
    %v2574 = vpop.f32.mrf.mxu0
    %v2575 = vadd.f32 0.0, %v2574
    %2576 = vmatmul.f32.gmra.mxu0 %v2555
    %v2577 = vpop.f32.mrf.mxu0
    %v2578 = vadd.f32 0.0, %v2577
    %2579 = vdwg.mxu0
    %v2580 = vadd.f32 %v2545, %v2575
    %v2581 = vadd.f32 %v2546, %v2578
    %v2582 = vmax.f32 %v2580, 0.0
    %v2583 = vmax.f32 %v2581, 0.0
    %v2584 = vmax.f32 %v2465, %v2582
    %v2585 = vmax.f32 %v2466, %v2583
    %2586 = vst.msk [vmem:[#allocation14] sm:$0xff] %vm146, %v2584
    %2587 = vst.msk [vmem:[#allocation14 + $0x8] sm:$0xff] %vm146, %v2585
    // Predicated region
    $region46: #{tpu_custom_call.1} parent=1 // pred_check
      _
    $region47: #{tpu_custom_call.1} parent=1 // pred_check_branch
      %2589 = sbr.rel (0) target = $region49
    $region48: #{tpu_custom_call.1} parent=1 // pred_region
      %2591 = vsyncadd [#allocation7], 0
      %s2592 = sshll.u32 [#allocation14], 4
      %s2593 = int_to_ptr.vmem [resolvable:$true] %s2592
      %s2594 = sshll.u32 %s6, 4
      %s2595 = int_to_ptr.hbm [resolvable:$true] %s2594
      %2600 = dma.vmem_to_hbm [thread:$0]  %s2593, 256, %s2595, [#allocation7], 128, 128, 8
    $region49: #{tpu_custom_call.1} parent=1 // pred_fallthru
      _
    // Predicated region
    $region50: #{tpu_custom_call.1} parent=1 // pred_check
      _
    $region51: #{tpu_custom_call.1} parent=1 // pred_check_branch
      %2602 = sbr.rel (0) target = $region53
    $region52: #{tpu_custom_call.1} parent=1 // pred_region
      %2604 = dma.done [#allocation7], 256
    $region53: #{tpu_custom_call.1} parent=1 // pred_fallthru
      _
    %2605 = vsyncpa [#allocation6], 1
    %2606 = vsyncpa [#allocation9], 1
    %2607 = vsyncpa [#allocation12], 1
    %2608 = vsyncpa [#allocation7], 1

</llo_original>
